<compile_context>
chip_gen: v7x
topology: tpu7x:2x2x1
jax: 0.10.0
libtpu: 0.0.40
codegen_flags: <defaults>
</compile_context>

<pallas_src>
import numpy as np
import jax
import jax.numpy as jnp
from jax import lax
from jax.experimental import pallas as pl
from jax.experimental.pallas import tpu as pltpu

N_PASSES = 3  # IGCNet applies the shared IGConv three times


# ----------------------------- fused Pallas kernel -----------------------------
def igcnet_fused_kernel(xc_ref, p0_ref, ea_ref, w_ref, comb_ref, sbuf_ref):
    n = xc_ref.shape[0]          # nodes
    e = ea_ref.shape[0]          # edges, ordered so row d*N + i is edge ((i+d+1)%N -> i)
    deg = e // n                 # in-degree (complete graph: N-1)

    # ---- packed weights: one small DMA, static slices (zero-cost) ----
    W = w_ref[...]                                   # [80, 32]
    w1x = W[0:2, 0:16]; w1p = W[2:3, 0:16]; w1e = W[3:5, 0:16]; b1 = W[5:6, 0:16]
    w2 = W[6:22, 0:32]; b2 = W[22:23, 0:32]
    w3x = W[23:25, 0:16]; w3p = W[25:26, 0:16]; w3a = W[26:58, 0:16]; b3 = W[58:59, 0:16]
    w4 = W[59:75, 0:1]; b4 = W[75:76, 0:1]

    xc = xc_ref[...]                                 # [N, 2] node columns that never change

    # ---- pass-invariant node-side contributions (hoisted out of the 3 passes) ----
    h1_node_base = jnp.dot(xc, w1x, preferred_element_type=jnp.float32) + b1   # [N, 16]
    h2_base = jnp.dot(xc, w3x, preferred_element_type=jnp.float32) + b3        # [N, 16]

    p = p0_ref[...]                                  # [N, 1] the only changing node column

    for _ in range(N_PASSES):                        # static unroll: 3 fused IGConv passes
        # per-source-node contribution to mlp1 layer 1 (w1p folded in here, not per edge)
        s = h1_node_base + p * w1p                                              # [N, 16]
        # doubled buffer so the cyclic shift by (d+1) becomes a contiguous slice
        sbuf_ref[0:n, :] = s
        sbuf_ref[n:2 * n, :] = s

        def deg_body(d, aggr):
            off = d * n
            if n % 8 == 0:                           # static check; keeps slices aligned
                off = pl.multiple_of(off, 8)
            ea_d = ea_ref[pl.ds(off, n), :]                                     # [N, 2]
            src_d = sbuf_ref[pl.ds(d + 1, n), :]     # s rolled by (d+1): source contrib  [N, 16]
            h1 = jnp.maximum(
                src_d + jnp.dot(ea_d, w1e, preferred_element_type=jnp.float32), 0.0)
            msg = jnp.maximum(
                jnp.dot(h1, w2, preferred_element_type=jnp.float32) + b2, 0.0)  # [N, 32]
            return jnp.maximum(aggr, msg)            # running scatter-max by destination

        # messages are post-ReLU (>= 0) and every node has >= 1 incoming edge, so a zero
        # init is exactly jax.ops.segment_max; live data stays one [N, 32] block.
        aggr = lax.fori_loop(0, deg, deg_body, jnp.zeros((n, 32), jnp.float32),
                             unroll=True if deg <= 16 else 4)

        # ---- update: comb = mlp2(concat([x, aggr])) ----
        h2 = jnp.maximum(
            h2_base + p * w3p
            + jnp.dot(aggr, w3a, preferred_element_type=jnp.float32), 0.0)      # [N, 16]
        p = jax.nn.sigmoid(
            jnp.dot(h2, w4, preferred_element_type=jnp.float32) + b4)           # [N, 1]

    comb_ref[...] = p


# ----------------------------- host-side graph preprocessing (cache per graph) -----------------------------
def build_complete_graph_plan(edge_index, n_nodes):
    """Edge permutation such that edge_attr[perm] row d*N + i is the attribute of the
    edge ((i + d + 1) % N -> i).  Requires the complete directed graph without
    self-loops (the standard D2D interference graph).  Cache the result per graph.
    """
    ei = np.asarray(edge_index)
    src, dst = ei[0], ei[1]
    e = src.shape[0]
    assert e == n_nodes * (n_nodes - 1), "expected complete directed graph w/o self-loops"
    eid = -np.ones((n_nodes, n_nodes), dtype=np.int64)
    eid[src, dst] = np.arange(e)
    assert (np.diagonal(eid) == -1).all(), "self-loops are not expected"
    assert (eid[~np.eye(n_nodes, dtype=bool)] >= 0).all(), "graph is not complete"
    deg = n_nodes - 1
    d_idx = np.arange(deg)[:, None]
    i_idx = np.arange(n_nodes)[None, :]
    perm = eid[(i_idx + d_idx + 1) % n_nodes, i_idx].astype(np.int32)   # [deg, N]
    # TODO(synk): general (non-complete) graphs need a dst-round-robin permutation plus a
    # scalar-prefetch source-index gather instead of the cyclic-shift trick.
    return jnp.asarray(perm.reshape(-1))


# ----------------------------- weight packing (one DMA instead of 12) -----------------------------
def pack_params(params):
    W = jnp.zeros((80, 32), jnp.float32)
    W = W.at[0:5, 0:16].set(params['w1'])        # mlp1 Lin(5,16): rows 0-1 x[:, :2], row 2 p, rows 3-4 edge_attr
    W = W.at[5, 0:16].set(params['b1'])
    W = W.at[6:22, 0:32].set(params['w2'])       # mlp1 Lin(16,32)
    W = W.at[22, 0:32].set(params['b2'])
    W = W.at[23:58, 0:16].set(params['w3'])      # mlp2 Lin(35,16): rows 0-1 x[:, :2], row 2 p, rows 3-34 aggr
    W = W.at[58, 0:16].set(params['b3'])
    W = W.at[59:75, 0].set(params['w4'][:, 0])   # mlp2 Lin(16,1) + Sigmoid
    W = W.at[75, 0].set(params['b4'][0])
    return W


def _vmem_budget_bytes(n, e):
    """(8,128)-padded VMEM bytes of the resident buffers, with headroom for intermediates."""
    def tile_bytes(rows, cols):
        return 4 * (-(-rows // 8) * 8) * (-(-cols // 128) * 128)
    buf = (tile_bytes(n, 2) + tile_bytes(n, 1) + tile_bytes(e, 2) + tile_bytes(80, 32)
           + tile_bytes(n, 1) + tile_bytes(2 * n, 16))
    return int(min(64 * 1024 * 1024, max(32 * 1024 * 1024, 2 * buf + (4 << 20))))


# ----------------------------- wrapper (jit-compatible) -----------------------------
def igcnet_forward(params, x, edge_attr, perm):
    n = x.shape[0]
    xc = x[:, 0:2]                                   # constant node columns
    p0 = x[:, 2:3]                                   # the changing node column
    ea_blk = edge_attr[perm]                         # [deg*N, 2] cyclic destination order
    e = ea_blk.shape[0]
    wpack = pack_params(params)

    vmem = pl.BlockSpec(memory_space=pltpu.MemorySpace.VMEM)
    comb = pl.pallas_call(
        igcnet_fused_kernel,
        out_shape=jax.ShapeDtypeStruct((n, 1), jnp.float32),
        in_specs=[vmem, vmem, vmem, vmem],
        out_specs=vmem,
        scratch_shapes=[pltpu.VMEM((2 * n, 16), jnp.float32)],   # doubled shift buffer
        compiler_params=pltpu.CompilerParams(
            vmem_limit_bytes=_vmem_budget_bytes(n, e)),
    )(xc, p0, ea_blk, wpack)

    # out = concat([x[:, :2], comb]); x[:, :2] never changes, so assemble it here
    return jnp.concatenate([xc, comb], axis=1)


# ----------------------------- pure-JAX reference (for verification) -----------------------------
def igconv_ref(params, x, edge_attr, edge_index):
    src, dst = edge_index[0], edge_index[1]
    N = x.shape[0]
    tmp = jnp.concatenate([x[src], edge_attr], axis=1)
    h = jax.nn.relu(tmp @ params['w1'] + params['b1'])
    msg = jax.nn.relu(h @ params['w2'] + params['b2'])
    aggr = jax.ops.segment_max(msg, dst, num_segments=N)
    tmp2 = jnp.concatenate([x, aggr], axis=1)
    h2 = jax.nn.relu(tmp2 @ params['w3'] + params['b3'])
    comb = jax.nn.sigmoid(h2 @ params['w4'] + params['b4'])
    return jnp.concatenate([x[:, :2], comb], axis=1)


def igcnet_ref(params, x, edge_attr, edge_index):
    h = x
    for _ in range(N_PASSES):
        h = igconv_ref(params, h, edge_attr, edge_index)
    return h


# ----------------------------- deterministic parameter init (torch.nn.Linear-style) -----------------------------
def init_params(key):
    def lin(k, fin, fout):
        kw, kb = jax.random.split(k)
        bound = 1.0 / np.sqrt(fin)
        w = jax.random.uniform(kw, (fin, fout), jnp.float32, -bound, bound)
        b = jax.random.uniform(kb, (fout,), jnp.float32, -bound, bound)
        return w, b
    k = jax.random.split(key, 4)
    w1, b1 = lin(k[0], 5, 16)    # mlp1: Lin(5, 16)
    w2, b2 = lin(k[1], 16, 32)   # mlp1: Lin(16, 32)
    w3, b3 = lin(k[2], 35, 16)   # mlp2: Lin(35, 16)
    w4, b4 = lin(k[3], 16, 1)    # mlp2: Lin(16, 1) + Sigmoid
    return dict(w1=w1, b1=b1, w2=w2, b2=b2, w3=w3, b3=b3, w4=w4, b4=b4)


if __name__ == "__main__":
    key = jax.random.PRNGKey(0)
    kp, kx, ke = jax.random.split(key, 3)

    N = 8                                            # multiple of 8 keeps all slices sublane-aligned
    params = init_params(kp)

    # complete directed interference graph without self-loops (typical D2D setup)
    src_np, dst_np = np.nonzero(1 - np.eye(N, dtype=np.int32))
    edge_index = jnp.asarray(np.stack([src_np, dst_np]), dtype=jnp.int32)   # [2, E]
    E = edge_index.shape[1]

    x = jax.random.uniform(kx, (N, 3), jnp.float32)           # data.x
    edge_attr = jax.random.uniform(ke, (E, 2), jnp.float32)   # data.edge_attr

    perm = build_complete_graph_plan(edge_index, N)           # per-graph, cache across calls
    fwd = jax.jit(igcnet_forward)

    out = jax.block_until_ready(fwd(params, x, edge_attr, perm))
    ref = jax.block_until_ready(igcnet_ref(params, x, edge_attr, edge_index))

    assert out.shape == (N, 3)
    np.testing.assert_allclose(np.asarray(out), np.asarray(ref), rtol=1e-4, atol=1e-4)
    print("KERNEL_OK")
</pallas_src>

<mosaic_0001>
module attributes {stable_mosaic.version = 11 : i64} {
  func.func @igcnet_fused_kernel(%arg0: memref<8x2xf32, #tpu.memory_space<vmem>>, %arg1: memref<8x1xf32, #tpu.memory_space<vmem>>, %arg2: memref<56x2xf32, #tpu.memory_space<vmem>>, %arg3: memref<80x32xf32, #tpu.memory_space<vmem>>, %arg4: memref<8x1xf32, #tpu.memory_space<vmem>>, %arg5: memref<16x16xf32, #tpu.memory_space<vmem>>) attributes {dimension_semantics = [], scalar_prefetch = 0 : i64, scratch_operands = 1 : i64, tpu.core_type = #tpu.core_type<tc>} {
    %c0 = arith.constant 0 : index
    %c0_0 = arith.constant 0 : index
    %0 = vector.load %arg3[%c0, %c0_0] : memref<80x32xf32, #tpu.memory_space<vmem>>, vector<80x32xf32>
    %1 = vector.extract_strided_slice %0 {offsets = [0, 0], sizes = [2, 16], strides = [1, 1]} : vector<80x32xf32> to vector<2x16xf32>
    %2 = vector.extract_strided_slice %0 {offsets = [2, 0], sizes = [1, 16], strides = [1, 1]} : vector<80x32xf32> to vector<1x16xf32>
    %3 = vector.extract_strided_slice %0 {offsets = [3, 0], sizes = [2, 16], strides = [1, 1]} : vector<80x32xf32> to vector<2x16xf32>
    %4 = vector.extract_strided_slice %0 {offsets = [5, 0], sizes = [1, 16], strides = [1, 1]} : vector<80x32xf32> to vector<1x16xf32>
    %5 = vector.extract_strided_slice %0 {offsets = [6, 0], sizes = [16, 32], strides = [1, 1]} : vector<80x32xf32> to vector<16x32xf32>
    %6 = vector.extract_strided_slice %0 {offsets = [22, 0], sizes = [1, 32], strides = [1, 1]} : vector<80x32xf32> to vector<1x32xf32>
    %7 = vector.extract_strided_slice %0 {offsets = [23, 0], sizes = [2, 16], strides = [1, 1]} : vector<80x32xf32> to vector<2x16xf32>
    %8 = vector.extract_strided_slice %0 {offsets = [25, 0], sizes = [1, 16], strides = [1, 1]} : vector<80x32xf32> to vector<1x16xf32>
    %9 = vector.extract_strided_slice %0 {offsets = [26, 0], sizes = [32, 16], strides = [1, 1]} : vector<80x32xf32> to vector<32x16xf32>
    %10 = vector.extract_strided_slice %0 {offsets = [58, 0], sizes = [1, 16], strides = [1, 1]} : vector<80x32xf32> to vector<1x16xf32>
    %11 = vector.extract_strided_slice %0 {offsets = [59, 0], sizes = [16, 1], strides = [1, 1]} : vector<80x32xf32> to vector<16x1xf32>
    %12 = vector.extract_strided_slice %0 {offsets = [75, 0], sizes = [1, 1], strides = [1, 1]} : vector<80x32xf32> to vector<1x1xf32>
    %c0_1 = arith.constant 0 : index
    %c0_2 = arith.constant 0 : index
    %13 = vector.load %arg0[%c0_1, %c0_2] : memref<8x2xf32, #tpu.memory_space<vmem>>, vector<8x2xf32>
    %cst = arith.constant dense<0.000000e+00> : vector<8x16xf32>
    %14 = tpu.matmul %13, %1, %cst {dimension_numbers = #tpu.dot_dimension_numbers<[1], [0], [0], [1], [0, 0, 1, 1], [], []>} : vector<8x2xf32>, vector<2x16xf32>, vector<8x16xf32> -> vector<8x16xf32>
    %15 = vector.broadcast %4 : vector<1x16xf32> to vector<8x16xf32>
    %16 = arith.addf %14, %15 : vector<8x16xf32>
    %cst_3 = arith.constant dense<0.000000e+00> : vector<8x16xf32>
    %17 = tpu.matmul %13, %7, %cst_3 {dimension_numbers = #tpu.dot_dimension_numbers<[1], [0], [0], [1], [0, 0, 1, 1], [], []>} : vector<8x2xf32>, vector<2x16xf32>, vector<8x16xf32> -> vector<8x16xf32>
    %18 = vector.broadcast %10 : vector<1x16xf32> to vector<8x16xf32>
    %19 = arith.addf %17, %18 : vector<8x16xf32>
    %c0_4 = arith.constant 0 : index
    %c0_5 = arith.constant 0 : index
    %20 = vector.load %arg1[%c0_4, %c0_5] : memref<8x1xf32, #tpu.memory_space<vmem>>, vector<8x1xf32>
    %21 = vector.broadcast %20 : vector<8x1xf32> to vector<8x16xf32>
    %22 = vector.broadcast %2 : vector<1x16xf32> to vector<8x16xf32>
    %23 = arith.mulf %21, %22 : vector<8x16xf32>
    %24 = arith.addf %16, %23 : vector<8x16xf32>
    %c0_6 = arith.constant 0 : index
    %c0_7 = arith.constant 0 : index
    %25 = vector.load %arg5[%c0_6, %c0_7] : memref<16x16xf32, #tpu.memory_space<vmem>>, vector<8x16xf32>
    tpu.vector_store %arg5[%c0_6, %c0_7], %24 {strides = array<i32>} : memref<16x16xf32, #tpu.memory_space<vmem>>, vector<8x16xf32>,
    %c8 = arith.constant 8 : index
    %c0_8 = arith.constant 0 : index
    %26 = vector.load %arg5[%c8, %c0_8] : memref<16x16xf32, #tpu.memory_space<vmem>>, vector<8x16xf32>
    tpu.vector_store %arg5[%c8, %c0_8], %24 {strides = array<i32>} : memref<16x16xf32, #tpu.memory_space<vmem>>, vector<8x16xf32>,
    %cst_9 = arith.constant 0.000000e+00 : f32
    %27 = vector.broadcast %cst_9 : f32 to vector<8x32xf32>
    %c0_i32 = arith.constant 0 : i32
    %c8_i32 = arith.constant 8 : i32
    %28 = arith.muli %c0_i32, %c8_i32 : i32
    %29 = tpu.assume_multiple %28, 8 : i32
    %30 = arith.index_cast %29 : i32 to index
    %c0_10 = arith.constant 0 : index
    %31 = vector.load %arg2[%30, %c0_10] : memref<56x2xf32, #tpu.memory_space<vmem>>, vector<8x2xf32>
    %c1_i32 = arith.constant 1 : i32
    %32 = arith.addi %c0_i32, %c1_i32 : i32
    %33 = arith.index_cast %32 : i32 to index
    %c0_11 = arith.constant 0 : index
    %34 = vector.load %arg5[%33, %c0_11] : memref<16x16xf32, #tpu.memory_space<vmem>>, vector<8x16xf32>
    %cst_12 = arith.constant dense<0.000000e+00> : vector<8x16xf32>
    %35 = tpu.matmul %31, %3, %cst_12 {dimension_numbers = #tpu.dot_dimension_numbers<[1], [0], [0], [1], [0, 0, 1, 1], [], []>} : vector<8x2xf32>, vector<2x16xf32>, vector<8x16xf32> -> vector<8x16xf32>
    %36 = arith.addf %34, %35 : vector<8x16xf32>
    %cst_13 = arith.constant 0.000000e+00 : f32
    %37 = vector.broadcast %cst_13 : f32 to vector<8x16xf32>
    %38 = arith.maximumf %36, %37 : vector<8x16xf32>
    %cst_14 = arith.constant dense<0.000000e+00> : vector<8x32xf32>
    %39 = tpu.matmul %38, %5, %cst_14 {dimension_numbers = #tpu.dot_dimension_numbers<[1], [0], [0], [1], [0, 0, 1, 1], [], []>} : vector<8x16xf32>, vector<16x32xf32>, vector<8x32xf32> -> vector<8x32xf32>
    %40 = vector.broadcast %6 : vector<1x32xf32> to vector<8x32xf32>
    %41 = arith.addf %39, %40 : vector<8x32xf32>
    %cst_15 = arith.constant 0.000000e+00 : f32
    %42 = vector.broadcast %cst_15 : f32 to vector<8x32xf32>
    %43 = arith.maximumf %41, %42 : vector<8x32xf32>
    %44 = arith.maximumf %27, %43 : vector<8x32xf32>
    %c1_i32_16 = arith.constant 1 : i32
    %c8_i32_17 = arith.constant 8 : i32
    %45 = arith.muli %c1_i32_16, %c8_i32_17 : i32
    %46 = tpu.assume_multiple %45, 8 : i32
    %47 = arith.index_cast %46 : i32 to index
    %c0_18 = arith.constant 0 : index
    %48 = vector.load %arg2[%47, %c0_18] : memref<56x2xf32, #tpu.memory_space<vmem>>, vector<8x2xf32>
    %c1_i32_19 = arith.constant 1 : i32
    %49 = arith.addi %c1_i32_16, %c1_i32_19 : i32
    %50 = arith.index_cast %49 : i32 to index
    %c0_20 = arith.constant 0 : index
    %51 = vector.load %arg5[%50, %c0_20] : memref<16x16xf32, #tpu.memory_space<vmem>>, vector<8x16xf32>
    %cst_21 = arith.constant dense<0.000000e+00> : vector<8x16xf32>
    %52 = tpu.matmul %48, %3, %cst_21 {dimension_numbers = #tpu.dot_dimension_numbers<[1], [0], [0], [1], [0, 0, 1, 1], [], []>} : vector<8x2xf32>, vector<2x16xf32>, vector<8x16xf32> -> vector<8x16xf32>
    %53 = arith.addf %51, %52 : vector<8x16xf32>
    %cst_22 = arith.constant 0.000000e+00 : f32
    %54 = vector.broadcast %cst_22 : f32 to vector<8x16xf32>
    %55 = arith.maximumf %53, %54 : vector<8x16xf32>
    %cst_23 = arith.constant dense<0.000000e+00> : vector<8x32xf32>
    %56 = tpu.matmul %55, %5, %cst_23 {dimension_numbers = #tpu.dot_dimension_numbers<[1], [0], [0], [1], [0, 0, 1, 1], [], []>} : vector<8x16xf32>, vector<16x32xf32>, vector<8x32xf32> -> vector<8x32xf32>
    %57 = vector.broadcast %6 : vector<1x32xf32> to vector<8x32xf32>
    %58 = arith.addf %56, %57 : vector<8x32xf32>
    %cst_24 = arith.constant 0.000000e+00 : f32
    %59 = vector.broadcast %cst_24 : f32 to vector<8x32xf32>
    %60 = arith.maximumf %58, %59 : vector<8x32xf32>
    %61 = arith.maximumf %44, %60 : vector<8x32xf32>
    %c2_i32 = arith.constant 2 : i32
    %c8_i32_25 = arith.constant 8 : i32
    %62 = arith.muli %c2_i32, %c8_i32_25 : i32
    %63 = tpu.assume_multiple %62, 8 : i32
    %64 = arith.index_cast %63 : i32 to index
    %c0_26 = arith.constant 0 : index
    %65 = vector.load %arg2[%64, %c0_26] : memref<56x2xf32, #tpu.memory_space<vmem>>, vector<8x2xf32>
    %c1_i32_27 = arith.constant 1 : i32
    %66 = arith.addi %c2_i32, %c1_i32_27 : i32
    %67 = arith.index_cast %66 : i32 to index
    %c0_28 = arith.constant 0 : index
    %68 = vector.load %arg5[%67, %c0_28] : memref<16x16xf32, #tpu.memory_space<vmem>>, vector<8x16xf32>
    %cst_29 = arith.constant dense<0.000000e+00> : vector<8x16xf32>
    %69 = tpu.matmul %65, %3, %cst_29 {dimension_numbers = #tpu.dot_dimension_numbers<[1], [0], [0], [1], [0, 0, 1, 1], [], []>} : vector<8x2xf32>, vector<2x16xf32>, vector<8x16xf32> -> vector<8x16xf32>
    %70 = arith.addf %68, %69 : vector<8x16xf32>
    %cst_30 = arith.constant 0.000000e+00 : f32
    %71 = vector.broadcast %cst_30 : f32 to vector<8x16xf32>
    %72 = arith.maximumf %70, %71 : vector<8x16xf32>
    %cst_31 = arith.constant dense<0.000000e+00> : vector<8x32xf32>
    %73 = tpu.matmul %72, %5, %cst_31 {dimension_numbers = #tpu.dot_dimension_numbers<[1], [0], [0], [1], [0, 0, 1, 1], [], []>} : vector<8x16xf32>, vector<16x32xf32>, vector<8x32xf32> -> vector<8x32xf32>
    %74 = vector.broadcast %6 : vector<1x32xf32> to vector<8x32xf32>
    %75 = arith.addf %73, %74 : vector<8x32xf32>
    %cst_32 = arith.constant 0.000000e+00 : f32
    %76 = vector.broadcast %cst_32 : f32 to vector<8x32xf32>
    %77 = arith.maximumf %75, %76 : vector<8x32xf32>
    %78 = arith.maximumf %61, %77 : vector<8x32xf32>
    %c3_i32 = arith.constant 3 : i32
    %c8_i32_33 = arith.constant 8 : i32
    %79 = arith.muli %c3_i32, %c8_i32_33 : i32
    %80 = tpu.assume_multiple %79, 8 : i32
    %81 = arith.index_cast %80 : i32 to index
    %c0_34 = arith.constant 0 : index
    %82 = vector.load %arg2[%81, %c0_34] : memref<56x2xf32, #tpu.memory_space<vmem>>, vector<8x2xf32>
    %c1_i32_35 = arith.constant 1 : i32
    %83 = arith.addi %c3_i32, %c1_i32_35 : i32
    %84 = arith.index_cast %83 : i32 to index
    %c0_36 = arith.constant 0 : index
    %85 = vector.load %arg5[%84, %c0_36] : memref<16x16xf32, #tpu.memory_space<vmem>>, vector<8x16xf32>
    %cst_37 = arith.constant dense<0.000000e+00> : vector<8x16xf32>
    %86 = tpu.matmul %82, %3, %cst_37 {dimension_numbers = #tpu.dot_dimension_numbers<[1], [0], [0], [1], [0, 0, 1, 1], [], []>} : vector<8x2xf32>, vector<2x16xf32>, vector<8x16xf32> -> vector<8x16xf32>
    %87 = arith.addf %85, %86 : vector<8x16xf32>
    %cst_38 = arith.constant 0.000000e+00 : f32
    %88 = vector.broadcast %cst_38 : f32 to vector<8x16xf32>
    %89 = arith.maximumf %87, %88 : vector<8x16xf32>
    %cst_39 = arith.constant dense<0.000000e+00> : vector<8x32xf32>
    %90 = tpu.matmul %89, %5, %cst_39 {dimension_numbers = #tpu.dot_dimension_numbers<[1], [0], [0], [1], [0, 0, 1, 1], [], []>} : vector<8x16xf32>, vector<16x32xf32>, vector<8x32xf32> -> vector<8x32xf32>
    %91 = vector.broadcast %6 : vector<1x32xf32> to vector<8x32xf32>
    %92 = arith.addf %90, %91 : vector<8x32xf32>
    %cst_40 = arith.constant 0.000000e+00 : f32
    %93 = vector.broadcast %cst_40 : f32 to vector<8x32xf32>
    %94 = arith.maximumf %92, %93 : vector<8x32xf32>
    %95 = arith.maximumf %78, %94 : vector<8x32xf32>
    %c4_i32 = arith.constant 4 : i32
    %c8_i32_41 = arith.constant 8 : i32
    %96 = arith.muli %c4_i32, %c8_i32_41 : i32
    %97 = tpu.assume_multiple %96, 8 : i32
    %98 = arith.index_cast %97 : i32 to index
    %c0_42 = arith.constant 0 : index
    %99 = vector.load %arg2[%98, %c0_42] : memref<56x2xf32, #tpu.memory_space<vmem>>, vector<8x2xf32>
    %c1_i32_43 = arith.constant 1 : i32
    %100 = arith.addi %c4_i32, %c1_i32_43 : i32
    %101 = arith.index_cast %100 : i32 to index
    %c0_44 = arith.constant 0 : index
    %102 = vector.load %arg5[%101, %c0_44] : memref<16x16xf32, #tpu.memory_space<vmem>>, vector<8x16xf32>
    %cst_45 = arith.constant dense<0.000000e+00> : vector<8x16xf32>
    %103 = tpu.matmul %99, %3, %cst_45 {dimension_numbers = #tpu.dot_dimension_numbers<[1], [0], [0], [1], [0, 0, 1, 1], [], []>} : vector<8x2xf32>, vector<2x16xf32>, vector<8x16xf32> -> vector<8x16xf32>
    %104 = arith.addf %102, %103 : vector<8x16xf32>
    %cst_46 = arith.constant 0.000000e+00 : f32
    %105 = vector.broadcast %cst_46 : f32 to vector<8x16xf32>
    %106 = arith.maximumf %104, %105 : vector<8x16xf32>
    %cst_47 = arith.constant dense<0.000000e+00> : vector<8x32xf32>
    %107 = tpu.matmul %106, %5, %cst_47 {dimension_numbers = #tpu.dot_dimension_numbers<[1], [0], [0], [1], [0, 0, 1, 1], [], []>} : vector<8x16xf32>, vector<16x32xf32>, vector<8x32xf32> -> vector<8x32xf32>
    %108 = vector.broadcast %6 : vector<1x32xf32> to vector<8x32xf32>
    %109 = arith.addf %107, %108 : vector<8x32xf32>
    %cst_48 = arith.constant 0.000000e+00 : f32
    %110 = vector.broadcast %cst_48 : f32 to vector<8x32xf32>
    %111 = arith.maximumf %109, %110 : vector<8x32xf32>
    %112 = arith.maximumf %95, %111 : vector<8x32xf32>
    %c5_i32 = arith.constant 5 : i32
    %c8_i32_49 = arith.constant 8 : i32
    %113 = arith.muli %c5_i32, %c8_i32_49 : i32
    %114 = tpu.assume_multiple %113, 8 : i32
    %115 = arith.index_cast %114 : i32 to index
    %c0_50 = arith.constant 0 : index
    %116 = vector.load %arg2[%115, %c0_50] : memref<56x2xf32, #tpu.memory_space<vmem>>, vector<8x2xf32>
    %c1_i32_51 = arith.constant 1 : i32
    %117 = arith.addi %c5_i32, %c1_i32_51 : i32
    %118 = arith.index_cast %117 : i32 to index
    %c0_52 = arith.constant 0 : index
    %119 = vector.load %arg5[%118, %c0_52] : memref<16x16xf32, #tpu.memory_space<vmem>>, vector<8x16xf32>
    %cst_53 = arith.constant dense<0.000000e+00> : vector<8x16xf32>
    %120 = tpu.matmul %116, %3, %cst_53 {dimension_numbers = #tpu.dot_dimension_numbers<[1], [0], [0], [1], [0, 0, 1, 1], [], []>} : vector<8x2xf32>, vector<2x16xf32>, vector<8x16xf32> -> vector<8x16xf32>
    %121 = arith.addf %119, %120 : vector<8x16xf32>
    %cst_54 = arith.constant 0.000000e+00 : f32
    %122 = vector.broadcast %cst_54 : f32 to vector<8x16xf32>
    %123 = arith.maximumf %121, %122 : vector<8x16xf32>
    %cst_55 = arith.constant dense<0.000000e+00> : vector<8x32xf32>
    %124 = tpu.matmul %123, %5, %cst_55 {dimension_numbers = #tpu.dot_dimension_numbers<[1], [0], [0], [1], [0, 0, 1, 1], [], []>} : vector<8x16xf32>, vector<16x32xf32>, vector<8x32xf32> -> vector<8x32xf32>
    %125 = vector.broadcast %6 : vector<1x32xf32> to vector<8x32xf32>
    %126 = arith.addf %124, %125 : vector<8x32xf32>
    %cst_56 = arith.constant 0.000000e+00 : f32
    %127 = vector.broadcast %cst_56 : f32 to vector<8x32xf32>
    %128 = arith.maximumf %126, %127 : vector<8x32xf32>
    %129 = arith.maximumf %112, %128 : vector<8x32xf32>
    %c6_i32 = arith.constant 6 : i32
    %c8_i32_57 = arith.constant 8 : i32
    %130 = arith.muli %c6_i32, %c8_i32_57 : i32
    %131 = tpu.assume_multiple %130, 8 : i32
    %132 = arith.index_cast %131 : i32 to index
    %c0_58 = arith.constant 0 : index
    %133 = vector.load %arg2[%132, %c0_58] : memref<56x2xf32, #tpu.memory_space<vmem>>, vector<8x2xf32>
    %c1_i32_59 = arith.constant 1 : i32
    %134 = arith.addi %c6_i32, %c1_i32_59 : i32
    %135 = arith.index_cast %134 : i32 to index
    %c0_60 = arith.constant 0 : index
    %136 = vector.load %arg5[%135, %c0_60] : memref<16x16xf32, #tpu.memory_space<vmem>>, vector<8x16xf32>
    %cst_61 = arith.constant dense<0.000000e+00> : vector<8x16xf32>
    %137 = tpu.matmul %133, %3, %cst_61 {dimension_numbers = #tpu.dot_dimension_numbers<[1], [0], [0], [1], [0, 0, 1, 1], [], []>} : vector<8x2xf32>, vector<2x16xf32>, vector<8x16xf32> -> vector<8x16xf32>
    %138 = arith.addf %136, %137 : vector<8x16xf32>
    %cst_62 = arith.constant 0.000000e+00 : f32
    %139 = vector.broadcast %cst_62 : f32 to vector<8x16xf32>
    %140 = arith.maximumf %138, %139 : vector<8x16xf32>
    %cst_63 = arith.constant dense<0.000000e+00> : vector<8x32xf32>
    %141 = tpu.matmul %140, %5, %cst_63 {dimension_numbers = #tpu.dot_dimension_numbers<[1], [0], [0], [1], [0, 0, 1, 1], [], []>} : vector<8x16xf32>, vector<16x32xf32>, vector<8x32xf32> -> vector<8x32xf32>
    %142 = vector.broadcast %6 : vector<1x32xf32> to vector<8x32xf32>
    %143 = arith.addf %141, %142 : vector<8x32xf32>
    %cst_64 = arith.constant 0.000000e+00 : f32
    %144 = vector.broadcast %cst_64 : f32 to vector<8x32xf32>
    %145 = arith.maximumf %143, %144 : vector<8x32xf32>
    %146 = arith.maximumf %129, %145 : vector<8x32xf32>
    %c7_i32 = arith.constant 7 : i32
    %147 = vector.broadcast %20 : vector<8x1xf32> to vector<8x16xf32>
    %148 = vector.broadcast %8 : vector<1x16xf32> to vector<8x16xf32>
    %149 = arith.mulf %147, %148 : vector<8x16xf32>
    %150 = arith.addf %19, %149 : vector<8x16xf32>
    %cst_65 = arith.constant dense<0.000000e+00> : vector<8x16xf32>
    %151 = tpu.matmul %146, %9, %cst_65 {dimension_numbers = #tpu.dot_dimension_numbers<[1], [0], [0], [1], [0, 0, 1, 1], [], []>} : vector<8x32xf32>, vector<32x16xf32>, vector<8x16xf32> -> vector<8x16xf32>
    %152 = arith.addf %150, %151 : vector<8x16xf32>
    %cst_66 = arith.constant 0.000000e+00 : f32
    %153 = vector.broadcast %cst_66 : f32 to vector<8x16xf32>
    %154 = arith.maximumf %152, %153 : vector<8x16xf32>
    %cst_67 = arith.constant dense<0.000000e+00> : vector<8x1xf32>
    %155 = tpu.matmul %154, %11, %cst_67 {dimension_numbers = #tpu.dot_dimension_numbers<[1], [0], [0], [1], [0, 0, 1, 1], [], []>} : vector<8x16xf32>, vector<16x1xf32>, vector<8x1xf32> -> vector<8x1xf32>
    %156 = vector.broadcast %12 : vector<1x1xf32> to vector<8x1xf32>
    %157 = arith.addf %155, %156 : vector<8x1xf32>
    %158 = arith.negf %157 : vector<8x1xf32>
    %159 = math.exp %158 : vector<8x1xf32>
    %cst_68 = arith.constant 1.000000e+00 : f32
    %160 = vector.broadcast %cst_68 : f32 to vector<8x1xf32>
    %161 = arith.addf %160, %159 : vector<8x1xf32>
    %162 = arith.divf %160, %161 : vector<8x1xf32>
    %163 = vector.broadcast %162 : vector<8x1xf32> to vector<8x16xf32>
    %164 = vector.broadcast %2 : vector<1x16xf32> to vector<8x16xf32>
    %165 = arith.mulf %163, %164 : vector<8x16xf32>
    %166 = arith.addf %16, %165 : vector<8x16xf32>
    %c0_69 = arith.constant 0 : index
    %c0_70 = arith.constant 0 : index
    %167 = vector.load %arg5[%c0_69, %c0_70] : memref<16x16xf32, #tpu.memory_space<vmem>>, vector<8x16xf32>
    tpu.vector_store %arg5[%c0_69, %c0_70], %166 {strides = array<i32>} : memref<16x16xf32, #tpu.memory_space<vmem>>, vector<8x16xf32>,
    %c8_71 = arith.constant 8 : index
    %c0_72 = arith.constant 0 : index
    %168 = vector.load %arg5[%c8_71, %c0_72] : memref<16x16xf32, #tpu.memory_space<vmem>>, vector<8x16xf32>
    tpu.vector_store %arg5[%c8_71, %c0_72], %166 {strides = array<i32>} : memref<16x16xf32, #tpu.memory_space<vmem>>, vector<8x16xf32>,
    %cst_73 = arith.constant 0.000000e+00 : f32
    %169 = vector.broadcast %cst_73 : f32 to vector<8x32xf32>
    %c0_i32_74 = arith.constant 0 : i32
    %c8_i32_75 = arith.constant 8 : i32
    %170 = arith.muli %c0_i32_74, %c8_i32_75 : i32
    %171 = tpu.assume_multiple %170, 8 : i32
    %172 = arith.index_cast %171 : i32 to index
    %c0_76 = arith.constant 0 : index
    %173 = vector.load %arg2[%172, %c0_76] : memref<56x2xf32, #tpu.memory_space<vmem>>, vector<8x2xf32>
    %c1_i32_77 = arith.constant 1 : i32
    %174 = arith.addi %c0_i32_74, %c1_i32_77 : i32
    %175 = arith.index_cast %174 : i32 to index
    %c0_78 = arith.constant 0 : index
    %176 = vector.load %arg5[%175, %c0_78] : memref<16x16xf32, #tpu.memory_space<vmem>>, vector<8x16xf32>
    %cst_79 = arith.constant dense<0.000000e+00> : vector<8x16xf32>
    %177 = tpu.matmul %173, %3, %cst_79 {dimension_numbers = #tpu.dot_dimension_numbers<[1], [0], [0], [1], [0, 0, 1, 1], [], []>} : vector<8x2xf32>, vector<2x16xf32>, vector<8x16xf32> -> vector<8x16xf32>
    %178 = arith.addf %176, %177 : vector<8x16xf32>
    %cst_80 = arith.constant 0.000000e+00 : f32
    %179 = vector.broadcast %cst_80 : f32 to vector<8x16xf32>
    %180 = arith.maximumf %178, %179 : vector<8x16xf32>
    %cst_81 = arith.constant dense<0.000000e+00> : vector<8x32xf32>
    %181 = tpu.matmul %180, %5, %cst_81 {dimension_numbers = #tpu.dot_dimension_numbers<[1], [0], [0], [1], [0, 0, 1, 1], [], []>} : vector<8x16xf32>, vector<16x32xf32>, vector<8x32xf32> -> vector<8x32xf32>
    %182 = vector.broadcast %6 : vector<1x32xf32> to vector<8x32xf32>
    %183 = arith.addf %181, %182 : vector<8x32xf32>
    %cst_82 = arith.constant 0.000000e+00 : f32
    %184 = vector.broadcast %cst_82 : f32 to vector<8x32xf32>
    %185 = arith.maximumf %183, %184 : vector<8x32xf32>
    %186 = arith.maximumf %169, %185 : vector<8x32xf32>
    %c1_i32_83 = arith.constant 1 : i32
    %c8_i32_84 = arith.constant 8 : i32
    %187 = arith.muli %c1_i32_83, %c8_i32_84 : i32
    %188 = tpu.assume_multiple %187, 8 : i32
    %189 = arith.index_cast %188 : i32 to index
    %c0_85 = arith.constant 0 : index
    %190 = vector.load %arg2[%189, %c0_85] : memref<56x2xf32, #tpu.memory_space<vmem>>, vector<8x2xf32>
    %c1_i32_86 = arith.constant 1 : i32
    %191 = arith.addi %c1_i32_83, %c1_i32_86 : i32
    %192 = arith.index_cast %191 : i32 to index
    %c0_87 = arith.constant 0 : index
    %193 = vector.load %arg5[%192, %c0_87] : memref<16x16xf32, #tpu.memory_space<vmem>>, vector<8x16xf32>
    %cst_88 = arith.constant dense<0.000000e+00> : vector<8x16xf32>
    %194 = tpu.matmul %190, %3, %cst_88 {dimension_numbers = #tpu.dot_dimension_numbers<[1], [0], [0], [1], [0, 0, 1, 1], [], []>} : vector<8x2xf32>, vector<2x16xf32>, vector<8x16xf32> -> vector<8x16xf32>
    %195 = arith.addf %193, %194 : vector<8x16xf32>
    %cst_89 = arith.constant 0.000000e+00 : f32
    %196 = vector.broadcast %cst_89 : f32 to vector<8x16xf32>
    %197 = arith.maximumf %195, %196 : vector<8x16xf32>
    %cst_90 = arith.constant dense<0.000000e+00> : vector<8x32xf32>
    %198 = tpu.matmul %197, %5, %cst_90 {dimension_numbers = #tpu.dot_dimension_numbers<[1], [0], [0], [1], [0, 0, 1, 1], [], []>} : vector<8x16xf32>, vector<16x32xf32>, vector<8x32xf32> -> vector<8x32xf32>
    %199 = vector.broadcast %6 : vector<1x32xf32> to vector<8x32xf32>
    %200 = arith.addf %198, %199 : vector<8x32xf32>
    %cst_91 = arith.constant 0.000000e+00 : f32
    %201 = vector.broadcast %cst_91 : f32 to vector<8x32xf32>
    %202 = arith.maximumf %200, %201 : vector<8x32xf32>
    %203 = arith.maximumf %186, %202 : vector<8x32xf32>
    %c2_i32_92 = arith.constant 2 : i32
    %c8_i32_93 = arith.constant 8 : i32
    %204 = arith.muli %c2_i32_92, %c8_i32_93 : i32
    %205 = tpu.assume_multiple %204, 8 : i32
    %206 = arith.index_cast %205 : i32 to index
    %c0_94 = arith.constant 0 : index
    %207 = vector.load %arg2[%206, %c0_94] : memref<56x2xf32, #tpu.memory_space<vmem>>, vector<8x2xf32>
    %c1_i32_95 = arith.constant 1 : i32
    %208 = arith.addi %c2_i32_92, %c1_i32_95 : i32
    %209 = arith.index_cast %208 : i32 to index
    %c0_96 = arith.constant 0 : index
    %210 = vector.load %arg5[%209, %c0_96] : memref<16x16xf32, #tpu.memory_space<vmem>>, vector<8x16xf32>
    %cst_97 = arith.constant dense<0.000000e+00> : vector<8x16xf32>
    %211 = tpu.matmul %207, %3, %cst_97 {dimension_numbers = #tpu.dot_dimension_numbers<[1], [0], [0], [1], [0, 0, 1, 1], [], []>} : vector<8x2xf32>, vector<2x16xf32>, vector<8x16xf32> -> vector<8x16xf32>
    %212 = arith.addf %210, %211 : vector<8x16xf32>
    %cst_98 = arith.constant 0.000000e+00 : f32
    %213 = vector.broadcast %cst_98 : f32 to vector<8x16xf32>
    %214 = arith.maximumf %212, %213 : vector<8x16xf32>
    %cst_99 = arith.constant dense<0.000000e+00> : vector<8x32xf32>
    %215 = tpu.matmul %214, %5, %cst_99 {dimension_numbers = #tpu.dot_dimension_numbers<[1], [0], [0], [1], [0, 0, 1, 1], [], []>} : vector<8x16xf32>, vector<16x32xf32>, vector<8x32xf32> -> vector<8x32xf32>
    %216 = vector.broadcast %6 : vector<1x32xf32> to vector<8x32xf32>
    %217 = arith.addf %215, %216 : vector<8x32xf32>
    %cst_100 = arith.constant 0.000000e+00 : f32
    %218 = vector.broadcast %cst_100 : f32 to vector<8x32xf32>
    %219 = arith.maximumf %217, %218 : vector<8x32xf32>
    %220 = arith.maximumf %203, %219 : vector<8x32xf32>
    %c3_i32_101 = arith.constant 3 : i32
    %c8_i32_102 = arith.constant 8 : i32
    %221 = arith.muli %c3_i32_101, %c8_i32_102 : i32
    %222 = tpu.assume_multiple %221, 8 : i32
    %223 = arith.index_cast %222 : i32 to index
    %c0_103 = arith.constant 0 : index
    %224 = vector.load %arg2[%223, %c0_103] : memref<56x2xf32, #tpu.memory_space<vmem>>, vector<8x2xf32>
    %c1_i32_104 = arith.constant 1 : i32
    %225 = arith.addi %c3_i32_101, %c1_i32_104 : i32
    %226 = arith.index_cast %225 : i32 to index
    %c0_105 = arith.constant 0 : index
    %227 = vector.load %arg5[%226, %c0_105] : memref<16x16xf32, #tpu.memory_space<vmem>>, vector<8x16xf32>
    %cst_106 = arith.constant dense<0.000000e+00> : vector<8x16xf32>
    %228 = tpu.matmul %224, %3, %cst_106 {dimension_numbers = #tpu.dot_dimension_numbers<[1], [0], [0], [1], [0, 0, 1, 1], [], []>} : vector<8x2xf32>, vector<2x16xf32>, vector<8x16xf32> -> vector<8x16xf32>
    %229 = arith.addf %227, %228 : vector<8x16xf32>
    %cst_107 = arith.constant 0.000000e+00 : f32
    %230 = vector.broadcast %cst_107 : f32 to vector<8x16xf32>
    %231 = arith.maximumf %229, %230 : vector<8x16xf32>
    %cst_108 = arith.constant dense<0.000000e+00> : vector<8x32xf32>
    %232 = tpu.matmul %231, %5, %cst_108 {dimension_numbers = #tpu.dot_dimension_numbers<[1], [0], [0], [1], [0, 0, 1, 1], [], []>} : vector<8x16xf32>, vector<16x32xf32>, vector<8x32xf32> -> vector<8x32xf32>
    %233 = vector.broadcast %6 : vector<1x32xf32> to vector<8x32xf32>
    %234 = arith.addf %232, %233 : vector<8x32xf32>
    %cst_109 = arith.constant 0.000000e+00 : f32
    %235 = vector.broadcast %cst_109 : f32 to vector<8x32xf32>
    %236 = arith.maximumf %234, %235 : vector<8x32xf32>
    %237 = arith.maximumf %220, %236 : vector<8x32xf32>
    %c4_i32_110 = arith.constant 4 : i32
    %c8_i32_111 = arith.constant 8 : i32
    %238 = arith.muli %c4_i32_110, %c8_i32_111 : i32
    %239 = tpu.assume_multiple %238, 8 : i32
    %240 = arith.index_cast %239 : i32 to index
    %c0_112 = arith.constant 0 : index
    %241 = vector.load %arg2[%240, %c0_112] : memref<56x2xf32, #tpu.memory_space<vmem>>, vector<8x2xf32>
    %c1_i32_113 = arith.constant 1 : i32
    %242 = arith.addi %c4_i32_110, %c1_i32_113 : i32
    %243 = arith.index_cast %242 : i32 to index
    %c0_114 = arith.constant 0 : index
    %244 = vector.load %arg5[%243, %c0_114] : memref<16x16xf32, #tpu.memory_space<vmem>>, vector<8x16xf32>
    %cst_115 = arith.constant dense<0.000000e+00> : vector<8x16xf32>
    %245 = tpu.matmul %241, %3, %cst_115 {dimension_numbers = #tpu.dot_dimension_numbers<[1], [0], [0], [1], [0, 0, 1, 1], [], []>} : vector<8x2xf32>, vector<2x16xf32>, vector<8x16xf32> -> vector<8x16xf32>
    %246 = arith.addf %244, %245 : vector<8x16xf32>
    %cst_116 = arith.constant 0.000000e+00 : f32
    %247 = vector.broadcast %cst_116 : f32 to vector<8x16xf32>
    %248 = arith.maximumf %246, %247 : vector<8x16xf32>
    %cst_117 = arith.constant dense<0.000000e+00> : vector<8x32xf32>
    %249 = tpu.matmul %248, %5, %cst_117 {dimension_numbers = #tpu.dot_dimension_numbers<[1], [0], [0], [1], [0, 0, 1, 1], [], []>} : vector<8x16xf32>, vector<16x32xf32>, vector<8x32xf32> -> vector<8x32xf32>
    %250 = vector.broadcast %6 : vector<1x32xf32> to vector<8x32xf32>
    %251 = arith.addf %249, %250 : vector<8x32xf32>
    %cst_118 = arith.constant 0.000000e+00 : f32
    %252 = vector.broadcast %cst_118 : f32 to vector<8x32xf32>
    %253 = arith.maximumf %251, %252 : vector<8x32xf32>
    %254 = arith.maximumf %237, %253 : vector<8x32xf32>
    %c5_i32_119 = arith.constant 5 : i32
    %c8_i32_120 = arith.constant 8 : i32
    %255 = arith.muli %c5_i32_119, %c8_i32_120 : i32
    %256 = tpu.assume_multiple %255, 8 : i32
    %257 = arith.index_cast %256 : i32 to index
    %c0_121 = arith.constant 0 : index
    %258 = vector.load %arg2[%257, %c0_121] : memref<56x2xf32, #tpu.memory_space<vmem>>, vector<8x2xf32>
    %c1_i32_122 = arith.constant 1 : i32
    %259 = arith.addi %c5_i32_119, %c1_i32_122 : i32
    %260 = arith.index_cast %259 : i32 to index
    %c0_123 = arith.constant 0 : index
    %261 = vector.load %arg5[%260, %c0_123] : memref<16x16xf32, #tpu.memory_space<vmem>>, vector<8x16xf32>
    %cst_124 = arith.constant dense<0.000000e+00> : vector<8x16xf32>
    %262 = tpu.matmul %258, %3, %cst_124 {dimension_numbers = #tpu.dot_dimension_numbers<[1], [0], [0], [1], [0, 0, 1, 1], [], []>} : vector<8x2xf32>, vector<2x16xf32>, vector<8x16xf32> -> vector<8x16xf32>
    %263 = arith.addf %261, %262 : vector<8x16xf32>
    %cst_125 = arith.constant 0.000000e+00 : f32
    %264 = vector.broadcast %cst_125 : f32 to vector<8x16xf32>
    %265 = arith.maximumf %263, %264 : vector<8x16xf32>
    %cst_126 = arith.constant dense<0.000000e+00> : vector<8x32xf32>
    %266 = tpu.matmul %265, %5, %cst_126 {dimension_numbers = #tpu.dot_dimension_numbers<[1], [0], [0], [1], [0, 0, 1, 1], [], []>} : vector<8x16xf32>, vector<16x32xf32>, vector<8x32xf32> -> vector<8x32xf32>
    %267 = vector.broadcast %6 : vector<1x32xf32> to vector<8x32xf32>
    %268 = arith.addf %266, %267 : vector<8x32xf32>
    %cst_127 = arith.constant 0.000000e+00 : f32
    %269 = vector.broadcast %cst_127 : f32 to vector<8x32xf32>
    %270 = arith.maximumf %268, %269 : vector<8x32xf32>
    %271 = arith.maximumf %254, %270 : vector<8x32xf32>
    %c6_i32_128 = arith.constant 6 : i32
    %c8_i32_129 = arith.constant 8 : i32
    %272 = arith.muli %c6_i32_128, %c8_i32_129 : i32
    %273 = tpu.assume_multiple %272, 8 : i32
    %274 = arith.index_cast %273 : i32 to index
    %c0_130 = arith.constant 0 : index
    %275 = vector.load %arg2[%274, %c0_130] : memref<56x2xf32, #tpu.memory_space<vmem>>, vector<8x2xf32>
    %c1_i32_131 = arith.constant 1 : i32
    %276 = arith.addi %c6_i32_128, %c1_i32_131 : i32
    %277 = arith.index_cast %276 : i32 to index
    %c0_132 = arith.constant 0 : index
    %278 = vector.load %arg5[%277, %c0_132] : memref<16x16xf32, #tpu.memory_space<vmem>>, vector<8x16xf32>
    %cst_133 = arith.constant dense<0.000000e+00> : vector<8x16xf32>
    %279 = tpu.matmul %275, %3, %cst_133 {dimension_numbers = #tpu.dot_dimension_numbers<[1], [0], [0], [1], [0, 0, 1, 1], [], []>} : vector<8x2xf32>, vector<2x16xf32>, vector<8x16xf32> -> vector<8x16xf32>
    %280 = arith.addf %278, %279 : vector<8x16xf32>
    %cst_134 = arith.constant 0.000000e+00 : f32
    %281 = vector.broadcast %cst_134 : f32 to vector<8x16xf32>
    %282 = arith.maximumf %280, %281 : vector<8x16xf32>
    %cst_135 = arith.constant dense<0.000000e+00> : vector<8x32xf32>
    %283 = tpu.matmul %282, %5, %cst_135 {dimension_numbers = #tpu.dot_dimension_numbers<[1], [0], [0], [1], [0, 0, 1, 1], [], []>} : vector<8x16xf32>, vector<16x32xf32>, vector<8x32xf32> -> vector<8x32xf32>
    %284 = vector.broadcast %6 : vector<1x32xf32> to vector<8x32xf32>
    %285 = arith.addf %283, %284 : vector<8x32xf32>
    %cst_136 = arith.constant 0.000000e+00 : f32
    %286 = vector.broadcast %cst_136 : f32 to vector<8x32xf32>
    %287 = arith.maximumf %285, %286 : vector<8x32xf32>
    %288 = arith.maximumf %271, %287 : vector<8x32xf32>
    %c7_i32_137 = arith.constant 7 : i32
    %289 = vector.broadcast %162 : vector<8x1xf32> to vector<8x16xf32>
    %290 = vector.broadcast %8 : vector<1x16xf32> to vector<8x16xf32>
    %291 = arith.mulf %289, %290 : vector<8x16xf32>
    %292 = arith.addf %19, %291 : vector<8x16xf32>
    %cst_138 = arith.constant dense<0.000000e+00> : vector<8x16xf32>
    %293 = tpu.matmul %288, %9, %cst_138 {dimension_numbers = #tpu.dot_dimension_numbers<[1], [0], [0], [1], [0, 0, 1, 1], [], []>} : vector<8x32xf32>, vector<32x16xf32>, vector<8x16xf32> -> vector<8x16xf32>
    %294 = arith.addf %292, %293 : vector<8x16xf32>
    %cst_139 = arith.constant 0.000000e+00 : f32
    %295 = vector.broadcast %cst_139 : f32 to vector<8x16xf32>
    %296 = arith.maximumf %294, %295 : vector<8x16xf32>
    %cst_140 = arith.constant dense<0.000000e+00> : vector<8x1xf32>
    %297 = tpu.matmul %296, %11, %cst_140 {dimension_numbers = #tpu.dot_dimension_numbers<[1], [0], [0], [1], [0, 0, 1, 1], [], []>} : vector<8x16xf32>, vector<16x1xf32>, vector<8x1xf32> -> vector<8x1xf32>
    %298 = vector.broadcast %12 : vector<1x1xf32> to vector<8x1xf32>
    %299 = arith.addf %297, %298 : vector<8x1xf32>
    %300 = arith.negf %299 : vector<8x1xf32>
    %301 = math.exp %300 : vector<8x1xf32>
    %cst_141 = arith.constant 1.000000e+00 : f32
    %302 = vector.broadcast %cst_141 : f32 to vector<8x1xf32>
    %303 = arith.addf %302, %301 : vector<8x1xf32>
    %304 = arith.divf %302, %303 : vector<8x1xf32>
    %305 = vector.broadcast %304 : vector<8x1xf32> to vector<8x16xf32>
    %306 = vector.broadcast %2 : vector<1x16xf32> to vector<8x16xf32>
    %307 = arith.mulf %305, %306 : vector<8x16xf32>
    %308 = arith.addf %16, %307 : vector<8x16xf32>
    %c0_142 = arith.constant 0 : index
    %c0_143 = arith.constant 0 : index
    %309 = vector.load %arg5[%c0_142, %c0_143] : memref<16x16xf32, #tpu.memory_space<vmem>>, vector<8x16xf32>
    tpu.vector_store %arg5[%c0_142, %c0_143], %308 {strides = array<i32>} : memref<16x16xf32, #tpu.memory_space<vmem>>, vector<8x16xf32>,
    %c8_144 = arith.constant 8 : index
    %c0_145 = arith.constant 0 : index
    %310 = vector.load %arg5[%c8_144, %c0_145] : memref<16x16xf32, #tpu.memory_space<vmem>>, vector<8x16xf32>
    tpu.vector_store %arg5[%c8_144, %c0_145], %308 {strides = array<i32>} : memref<16x16xf32, #tpu.memory_space<vmem>>, vector<8x16xf32>,
    %cst_146 = arith.constant 0.000000e+00 : f32
    %311 = vector.broadcast %cst_146 : f32 to vector<8x32xf32>
    %c0_i32_147 = arith.constant 0 : i32
    %c8_i32_148 = arith.constant 8 : i32
    %312 = arith.muli %c0_i32_147, %c8_i32_148 : i32
    %313 = tpu.assume_multiple %312, 8 : i32
    %314 = arith.index_cast %313 : i32 to index
    %c0_149 = arith.constant 0 : index
    %315 = vector.load %arg2[%314, %c0_149] : memref<56x2xf32, #tpu.memory_space<vmem>>, vector<8x2xf32>
    %c1_i32_150 = arith.constant 1 : i32
    %316 = arith.addi %c0_i32_147, %c1_i32_150 : i32
    %317 = arith.index_cast %316 : i32 to index
    %c0_151 = arith.constant 0 : index
    %318 = vector.load %arg5[%317, %c0_151] : memref<16x16xf32, #tpu.memory_space<vmem>>, vector<8x16xf32>
    %cst_152 = arith.constant dense<0.000000e+00> : vector<8x16xf32>
    %319 = tpu.matmul %315, %3, %cst_152 {dimension_numbers = #tpu.dot_dimension_numbers<[1], [0], [0], [1], [0, 0, 1, 1], [], []>} : vector<8x2xf32>, vector<2x16xf32>, vector<8x16xf32> -> vector<8x16xf32>
    %320 = arith.addf %318, %319 : vector<8x16xf32>
    %cst_153 = arith.constant 0.000000e+00 : f32
    %321 = vector.broadcast %cst_153 : f32 to vector<8x16xf32>
    %322 = arith.maximumf %320, %321 : vector<8x16xf32>
    %cst_154 = arith.constant dense<0.000000e+00> : vector<8x32xf32>
    %323 = tpu.matmul %322, %5, %cst_154 {dimension_numbers = #tpu.dot_dimension_numbers<[1], [0], [0], [1], [0, 0, 1, 1], [], []>} : vector<8x16xf32>, vector<16x32xf32>, vector<8x32xf32> -> vector<8x32xf32>
    %324 = vector.broadcast %6 : vector<1x32xf32> to vector<8x32xf32>
    %325 = arith.addf %323, %324 : vector<8x32xf32>
    %cst_155 = arith.constant 0.000000e+00 : f32
    %326 = vector.broadcast %cst_155 : f32 to vector<8x32xf32>
    %327 = arith.maximumf %325, %326 : vector<8x32xf32>
    %328 = arith.maximumf %311, %327 : vector<8x32xf32>
    %c1_i32_156 = arith.constant 1 : i32
    %c8_i32_157 = arith.constant 8 : i32
    %329 = arith.muli %c1_i32_156, %c8_i32_157 : i32
    %330 = tpu.assume_multiple %329, 8 : i32
    %331 = arith.index_cast %330 : i32 to index
    %c0_158 = arith.constant 0 : index
    %332 = vector.load %arg2[%331, %c0_158] : memref<56x2xf32, #tpu.memory_space<vmem>>, vector<8x2xf32>
    %c1_i32_159 = arith.constant 1 : i32
    %333 = arith.addi %c1_i32_156, %c1_i32_159 : i32
    %334 = arith.index_cast %333 : i32 to index
    %c0_160 = arith.constant 0 : index
    %335 = vector.load %arg5[%334, %c0_160] : memref<16x16xf32, #tpu.memory_space<vmem>>, vector<8x16xf32>
    %cst_161 = arith.constant dense<0.000000e+00> : vector<8x16xf32>
    %336 = tpu.matmul %332, %3, %cst_161 {dimension_numbers = #tpu.dot_dimension_numbers<[1], [0], [0], [1], [0, 0, 1, 1], [], []>} : vector<8x2xf32>, vector<2x16xf32>, vector<8x16xf32> -> vector<8x16xf32>
    %337 = arith.addf %335, %336 : vector<8x16xf32>
    %cst_162 = arith.constant 0.000000e+00 : f32
    %338 = vector.broadcast %cst_162 : f32 to vector<8x16xf32>
    %339 = arith.maximumf %337, %338 : vector<8x16xf32>
    %cst_163 = arith.constant dense<0.000000e+00> : vector<8x32xf32>
    %340 = tpu.matmul %339, %5, %cst_163 {dimension_numbers = #tpu.dot_dimension_numbers<[1], [0], [0], [1], [0, 0, 1, 1], [], []>} : vector<8x16xf32>, vector<16x32xf32>, vector<8x32xf32> -> vector<8x32xf32>
    %341 = vector.broadcast %6 : vector<1x32xf32> to vector<8x32xf32>
    %342 = arith.addf %340, %341 : vector<8x32xf32>
    %cst_164 = arith.constant 0.000000e+00 : f32
    %343 = vector.broadcast %cst_164 : f32 to vector<8x32xf32>
    %344 = arith.maximumf %342, %343 : vector<8x32xf32>
    %345 = arith.maximumf %328, %344 : vector<8x32xf32>
    %c2_i32_165 = arith.constant 2 : i32
    %c8_i32_166 = arith.constant 8 : i32
    %346 = arith.muli %c2_i32_165, %c8_i32_166 : i32
    %347 = tpu.assume_multiple %346, 8 : i32
    %348 = arith.index_cast %347 : i32 to index
    %c0_167 = arith.constant 0 : index
    %349 = vector.load %arg2[%348, %c0_167] : memref<56x2xf32, #tpu.memory_space<vmem>>, vector<8x2xf32>
    %c1_i32_168 = arith.constant 1 : i32
    %350 = arith.addi %c2_i32_165, %c1_i32_168 : i32
    %351 = arith.index_cast %350 : i32 to index
    %c0_169 = arith.constant 0 : index
    %352 = vector.load %arg5[%351, %c0_169] : memref<16x16xf32, #tpu.memory_space<vmem>>, vector<8x16xf32>
    %cst_170 = arith.constant dense<0.000000e+00> : vector<8x16xf32>
    %353 = tpu.matmul %349, %3, %cst_170 {dimension_numbers = #tpu.dot_dimension_numbers<[1], [0], [0], [1], [0, 0, 1, 1], [], []>} : vector<8x2xf32>, vector<2x16xf32>, vector<8x16xf32> -> vector<8x16xf32>
    %354 = arith.addf %352, %353 : vector<8x16xf32>
    %cst_171 = arith.constant 0.000000e+00 : f32
    %355 = vector.broadcast %cst_171 : f32 to vector<8x16xf32>
    %356 = arith.maximumf %354, %355 : vector<8x16xf32>
    %cst_172 = arith.constant dense<0.000000e+00> : vector<8x32xf32>
    %357 = tpu.matmul %356, %5, %cst_172 {dimension_numbers = #tpu.dot_dimension_numbers<[1], [0], [0], [1], [0, 0, 1, 1], [], []>} : vector<8x16xf32>, vector<16x32xf32>, vector<8x32xf32> -> vector<8x32xf32>
    %358 = vector.broadcast %6 : vector<1x32xf32> to vector<8x32xf32>
    %359 = arith.addf %357, %358 : vector<8x32xf32>
    %cst_173 = arith.constant 0.000000e+00 : f32
    %360 = vector.broadcast %cst_173 : f32 to vector<8x32xf32>
    %361 = arith.maximumf %359, %360 : vector<8x32xf32>
    %362 = arith.maximumf %345, %361 : vector<8x32xf32>
    %c3_i32_174 = arith.constant 3 : i32
    %c8_i32_175 = arith.constant 8 : i32
    %363 = arith.muli %c3_i32_174, %c8_i32_175 : i32
    %364 = tpu.assume_multiple %363, 8 : i32
    %365 = arith.index_cast %364 : i32 to index
    %c0_176 = arith.constant 0 : index
    %366 = vector.load %arg2[%365, %c0_176] : memref<56x2xf32, #tpu.memory_space<vmem>>, vector<8x2xf32>
    %c1_i32_177 = arith.constant 1 : i32
    %367 = arith.addi %c3_i32_174, %c1_i32_177 : i32
    %368 = arith.index_cast %367 : i32 to index
    %c0_178 = arith.constant 0 : index
    %369 = vector.load %arg5[%368, %c0_178] : memref<16x16xf32, #tpu.memory_space<vmem>>, vector<8x16xf32>
    %cst_179 = arith.constant dense<0.000000e+00> : vector<8x16xf32>
    %370 = tpu.matmul %366, %3, %cst_179 {dimension_numbers = #tpu.dot_dimension_numbers<[1], [0], [0], [1], [0, 0, 1, 1], [], []>} : vector<8x2xf32>, vector<2x16xf32>, vector<8x16xf32> -> vector<8x16xf32>
    %371 = arith.addf %369, %370 : vector<8x16xf32>
    %cst_180 = arith.constant 0.000000e+00 : f32
    %372 = vector.broadcast %cst_180 : f32 to vector<8x16xf32>
    %373 = arith.maximumf %371, %372 : vector<8x16xf32>
    %cst_181 = arith.constant dense<0.000000e+00> : vector<8x32xf32>
    %374 = tpu.matmul %373, %5, %cst_181 {dimension_numbers = #tpu.dot_dimension_numbers<[1], [0], [0], [1], [0, 0, 1, 1], [], []>} : vector<8x16xf32>, vector<16x32xf32>, vector<8x32xf32> -> vector<8x32xf32>
    %375 = vector.broadcast %6 : vector<1x32xf32> to vector<8x32xf32>
    %376 = arith.addf %374, %375 : vector<8x32xf32>
    %cst_182 = arith.constant 0.000000e+00 : f32
    %377 = vector.broadcast %cst_182 : f32 to vector<8x32xf32>
    %378 = arith.maximumf %376, %377 : vector<8x32xf32>
    %379 = arith.maximumf %362, %378 : vector<8x32xf32>
    %c4_i32_183 = arith.constant 4 : i32
    %c8_i32_184 = arith.constant 8 : i32
    %380 = arith.muli %c4_i32_183, %c8_i32_184 : i32
    %381 = tpu.assume_multiple %380, 8 : i32
    %382 = arith.index_cast %381 : i32 to index
    %c0_185 = arith.constant 0 : index
    %383 = vector.load %arg2[%382, %c0_185] : memref<56x2xf32, #tpu.memory_space<vmem>>, vector<8x2xf32>
    %c1_i32_186 = arith.constant 1 : i32
    %384 = arith.addi %c4_i32_183, %c1_i32_186 : i32
    %385 = arith.index_cast %384 : i32 to index
    %c0_187 = arith.constant 0 : index
    %386 = vector.load %arg5[%385, %c0_187] : memref<16x16xf32, #tpu.memory_space<vmem>>, vector<8x16xf32>
    %cst_188 = arith.constant dense<0.000000e+00> : vector<8x16xf32>
    %387 = tpu.matmul %383, %3, %cst_188 {dimension_numbers = #tpu.dot_dimension_numbers<[1], [0], [0], [1], [0, 0, 1, 1], [], []>} : vector<8x2xf32>, vector<2x16xf32>, vector<8x16xf32> -> vector<8x16xf32>
    %388 = arith.addf %386, %387 : vector<8x16xf32>
    %cst_189 = arith.constant 0.000000e+00 : f32
    %389 = vector.broadcast %cst_189 : f32 to vector<8x16xf32>
    %390 = arith.maximumf %388, %389 : vector<8x16xf32>
    %cst_190 = arith.constant dense<0.000000e+00> : vector<8x32xf32>
    %391 = tpu.matmul %390, %5, %cst_190 {dimension_numbers = #tpu.dot_dimension_numbers<[1], [0], [0], [1], [0, 0, 1, 1], [], []>} : vector<8x16xf32>, vector<16x32xf32>, vector<8x32xf32> -> vector<8x32xf32>
    %392 = vector.broadcast %6 : vector<1x32xf32> to vector<8x32xf32>
    %393 = arith.addf %391, %392 : vector<8x32xf32>
    %cst_191 = arith.constant 0.000000e+00 : f32
    %394 = vector.broadcast %cst_191 : f32 to vector<8x32xf32>
    %395 = arith.maximumf %393, %394 : vector<8x32xf32>
    %396 = arith.maximumf %379, %395 : vector<8x32xf32>
    %c5_i32_192 = arith.constant 5 : i32
    %c8_i32_193 = arith.constant 8 : i32
    %397 = arith.muli %c5_i32_192, %c8_i32_193 : i32
    %398 = tpu.assume_multiple %397, 8 : i32
    %399 = arith.index_cast %398 : i32 to index
    %c0_194 = arith.constant 0 : index
    %400 = vector.load %arg2[%399, %c0_194] : memref<56x2xf32, #tpu.memory_space<vmem>>, vector<8x2xf32>
    %c1_i32_195 = arith.constant 1 : i32
    %401 = arith.addi %c5_i32_192, %c1_i32_195 : i32
    %402 = arith.index_cast %401 : i32 to index
    %c0_196 = arith.constant 0 : index
    %403 = vector.load %arg5[%402, %c0_196] : memref<16x16xf32, #tpu.memory_space<vmem>>, vector<8x16xf32>
    %cst_197 = arith.constant dense<0.000000e+00> : vector<8x16xf32>
    %404 = tpu.matmul %400, %3, %cst_197 {dimension_numbers = #tpu.dot_dimension_numbers<[1], [0], [0], [1], [0, 0, 1, 1], [], []>} : vector<8x2xf32>, vector<2x16xf32>, vector<8x16xf32> -> vector<8x16xf32>
    %405 = arith.addf %403, %404 : vector<8x16xf32>
    %cst_198 = arith.constant 0.000000e+00 : f32
    %406 = vector.broadcast %cst_198 : f32 to vector<8x16xf32>
    %407 = arith.maximumf %405, %406 : vector<8x16xf32>
    %cst_199 = arith.constant dense<0.000000e+00> : vector<8x32xf32>
    %408 = tpu.matmul %407, %5, %cst_199 {dimension_numbers = #tpu.dot_dimension_numbers<[1], [0], [0], [1], [0, 0, 1, 1], [], []>} : vector<8x16xf32>, vector<16x32xf32>, vector<8x32xf32> -> vector<8x32xf32>
    %409 = vector.broadcast %6 : vector<1x32xf32> to vector<8x32xf32>
    %410 = arith.addf %408, %409 : vector<8x32xf32>
    %cst_200 = arith.constant 0.000000e+00 : f32
    %411 = vector.broadcast %cst_200 : f32 to vector<8x32xf32>
    %412 = arith.maximumf %410, %411 : vector<8x32xf32>
    %413 = arith.maximumf %396, %412 : vector<8x32xf32>
    %c6_i32_201 = arith.constant 6 : i32
    %c8_i32_202 = arith.constant 8 : i32
    %414 = arith.muli %c6_i32_201, %c8_i32_202 : i32
    %415 = tpu.assume_multiple %414, 8 : i32
    %416 = arith.index_cast %415 : i32 to index
    %c0_203 = arith.constant 0 : index
    %417 = vector.load %arg2[%416, %c0_203] : memref<56x2xf32, #tpu.memory_space<vmem>>, vector<8x2xf32>
    %c1_i32_204 = arith.constant 1 : i32
    %418 = arith.addi %c6_i32_201, %c1_i32_204 : i32
    %419 = arith.index_cast %418 : i32 to index
    %c0_205 = arith.constant 0 : index
    %420 = vector.load %arg5[%419, %c0_205] : memref<16x16xf32, #tpu.memory_space<vmem>>, vector<8x16xf32>
    %cst_206 = arith.constant dense<0.000000e+00> : vector<8x16xf32>
    %421 = tpu.matmul %417, %3, %cst_206 {dimension_numbers = #tpu.dot_dimension_numbers<[1], [0], [0], [1], [0, 0, 1, 1], [], []>} : vector<8x2xf32>, vector<2x16xf32>, vector<8x16xf32> -> vector<8x16xf32>
    %422 = arith.addf %420, %421 : vector<8x16xf32>
    %cst_207 = arith.constant 0.000000e+00 : f32
    %423 = vector.broadcast %cst_207 : f32 to vector<8x16xf32>
    %424 = arith.maximumf %422, %423 : vector<8x16xf32>
    %cst_208 = arith.constant dense<0.000000e+00> : vector<8x32xf32>
    %425 = tpu.matmul %424, %5, %cst_208 {dimension_numbers = #tpu.dot_dimension_numbers<[1], [0], [0], [1], [0, 0, 1, 1], [], []>} : vector<8x16xf32>, vector<16x32xf32>, vector<8x32xf32> -> vector<8x32xf32>
    %426 = vector.broadcast %6 : vector<1x32xf32> to vector<8x32xf32>
    %427 = arith.addf %425, %426 : vector<8x32xf32>
    %cst_209 = arith.constant 0.000000e+00 : f32
    %428 = vector.broadcast %cst_209 : f32 to vector<8x32xf32>
    %429 = arith.maximumf %427, %428 : vector<8x32xf32>
    %430 = arith.maximumf %413, %429 : vector<8x32xf32>
    %c7_i32_210 = arith.constant 7 : i32
    %431 = vector.broadcast %304 : vector<8x1xf32> to vector<8x16xf32>
    %432 = vector.broadcast %8 : vector<1x16xf32> to vector<8x16xf32>
    %433 = arith.mulf %431, %432 : vector<8x16xf32>
    %434 = arith.addf %19, %433 : vector<8x16xf32>
    %cst_211 = arith.constant dense<0.000000e+00> : vector<8x16xf32>
    %435 = tpu.matmul %430, %9, %cst_211 {dimension_numbers = #tpu.dot_dimension_numbers<[1], [0], [0], [1], [0, 0, 1, 1], [], []>} : vector<8x32xf32>, vector<32x16xf32>, vector<8x16xf32> -> vector<8x16xf32>
    %436 = arith.addf %434, %435 : vector<8x16xf32>
    %cst_212 = arith.constant 0.000000e+00 : f32
    %437 = vector.broadcast %cst_212 : f32 to vector<8x16xf32>
    %438 = arith.maximumf %436, %437 : vector<8x16xf32>
    %cst_213 = arith.constant dense<0.000000e+00> : vector<8x1xf32>
    %439 = tpu.matmul %438, %11, %cst_213 {dimension_numbers = #tpu.dot_dimension_numbers<[1], [0], [0], [1], [0, 0, 1, 1], [], []>} : vector<8x16xf32>, vector<16x1xf32>, vector<8x1xf32> -> vector<8x1xf32>
    %440 = vector.broadcast %12 : vector<1x1xf32> to vector<8x1xf32>
    %441 = arith.addf %439, %440 : vector<8x1xf32>
    %442 = arith.negf %441 : vector<8x1xf32>
    %443 = math.exp %442 : vector<8x1xf32>
    %cst_214 = arith.constant 1.000000e+00 : f32
    %444 = vector.broadcast %cst_214 : f32 to vector<8x1xf32>
    %445 = arith.addf %444, %443 : vector<8x1xf32>
    %446 = arith.divf %444, %445 : vector<8x1xf32>
    %c0_215 = arith.constant 0 : index
    %c0_216 = arith.constant 0 : index
    %447 = vector.load %arg4[%c0_215, %c0_216] : memref<8x1xf32, #tpu.memory_space<vmem>>, vector<8x1xf32>
    tpu.vector_store %arg4[%c0_215, %c0_216], %446 {strides = array<i32>} : memref<8x1xf32, #tpu.memory_space<vmem>>, vector<8x1xf32>,
    return
  }
}

</mosaic_0001>

<llo_original>
// kernel: igcnet_forward.1
$region0: #{igcnet_forward.1}
  #allocation0 [shape = 'u32[]', space=smem, size = 0x4, offset = 0x4, fixed_abs, tag = 'smem constant byte address 0x4 - core index']
  #allocation1 [shape = 'u32[144,128]{1,0:T(1,128)}', space=vmem, size = 0x12000, scoped, tag = 'internal scratch']
  #allocation2 [shape = 'f32[16,16]{1,0:T(8,128)}', space=vmem, size = 0x2000, scoped, tag = 'scratch operand']
  %s0 = inlined_call_operand.vmem [shape: f32[8,2], index: 0, kind: input, shape index: {}]
  %s1 = inlined_call_operand.vmem [shape: f32[8,1], index: 1, kind: input, shape index: {}]
  %s2 = inlined_call_operand.vmem [shape: f32[56,2], index: 2, kind: input, shape index: {}]
  %s3 = inlined_call_operand.vmem [shape: f32[80,32], index: 3, kind: input, shape index: {}]
  %s4 = inlined_call_operand.vmem [shape: f32[8,1], index: 4, kind: output, shape index: {}]
  %s5 = sld [smem:[#allocation0]]
  $region26: #{igcnet_forward.1} parent=0
    _
  %s7 = ssub.s32 1, %s5
  %s8 = scalar_select 0, %s7, %s5
  // Predicated region
  $region2: #{igcnet_forward.1} parent=0 // pred_check
    _
  $region3: #{igcnet_forward.1} parent=0 // pred_check_branch
    %10 = sbr.rel (0) target = $region5
  $region4: #{igcnet_forward.1} parent=0 // pred_region
    _
  $region5: #{igcnet_forward.1} parent=0 // pred_fallthru
    _
  // Predicated region
  $region6: #{igcnet_forward.1} parent=0 // pred_check
    _
  $region7: #{igcnet_forward.1} parent=0 // pred_check_branch
    %12 = sbr.rel (0) target = $region9
  $region8: #{igcnet_forward.1} parent=0 // pred_region
    _
  $region9: #{igcnet_forward.1} parent=0 // pred_fallthru
    _
  // Predicated region
  $region10: #{igcnet_forward.1} parent=0 // pred_check
    _
  $region11: #{igcnet_forward.1} parent=0 // pred_check_branch
    %14 = sbr.rel (0) target = $region13
  $region12: #{igcnet_forward.1} parent=0 // pred_region
    _
  $region13: #{igcnet_forward.1} parent=0 // pred_fallthru
    _
  // Predicated region
  $region14: #{igcnet_forward.1} parent=0 // pred_check
    _
  $region15: #{igcnet_forward.1} parent=0 // pred_check_branch
    %16 = sbr.rel (0) target = $region17
  $region16: #{igcnet_forward.1} parent=0 // pred_region
    _
  $region17: #{igcnet_forward.1} parent=0 // pred_fallthru
    _
  %v17 = vld [vmem:[%s3] sm:$0xff]
  %v18 = vld [vmem:[%s3 + $0x8] sm:$0xff]
  %v19 = vld [vmem:[%s3 + $0x10] sm:$0xff]
  %v20 = vld [vmem:[%s3 + $0x18] sm:$0xff]
  %v21 = vld [vmem:[%s3 + $0x20] sm:$0xff]
  %v22 = vld [vmem:[%s3 + $0x28] sm:$0xff]
  %v23 = vld [vmem:[%s3 + $0x30] sm:$0xff]
  %v24 = vld [vmem:[%s3 + $0x38] sm:$0xff]
  %v25 = vld [vmem:[%s3 + $0x40] sm:$0xff]
  %v26 = vld [vmem:[%s3 + $0x48] sm:$0xff]
  %v27 = vld [vmem:[%s0] sm:$0xff]
  %v28 = vlaneseq
  %v29 = vshrl.u32 %v28, 7
  %v30 = vsub.s32 5, %v29
  %v31 = vrot.slane %v17, %v30
  %vm32 = vcmask 15360
  %v34 = vsel %vm32, %v27, 0
  %vm36 = vcmask 1041408
  %v38 = vsel %vm36, %v17, 0
  %40 = vmatprep.subr.mxu0 0.0
  %41 = vmatpush1.msra.mxu0 %v38
  %42 = vmatprep.subr.mxu0 0.0
  %43 = vmatpush1.msra.mxu0 0.0
  %44 = vmatprep.subr.mxu0 0.0
  %45 = vmatpush1.msra.mxu0 0.0
  %46 = vmatprep.subr.mxu0 0.0
  %47 = vmatpush1.msra.mxu0 0.0
  %48 = vmatprep.subr.mxu0 0.0
  %49 = vmatpush1.msra.mxu0 0.0
  %50 = vmatprep.subr.mxu0 0.0
  %51 = vmatpush1.msra.mxu0 0.0
  %52 = vmatprep.subr.mxu0 0.0
  %53 = vmatpush1.msra.mxu0 0.0
  %54 = vmatprep.subr.mxu0 0.0
  %55 = vmatpush1.msra.mxu0 0.0
  %56 = vmatprep.subr.mxu0 0.0
  %57 = vmatpush1.msra.mxu0 0.0
  %58 = vmatprep.subr.mxu0 0.0
  %59 = vmatpush1.msra.mxu0 0.0
  %60 = vmatprep.subr.mxu0 0.0
  %61 = vmatpush1.msra.mxu0 0.0
  %62 = vmatprep.subr.mxu0 0.0
  %63 = vmatpush1.msra.mxu0 0.0
  %64 = vmatprep.subr.mxu0 0.0
  %65 = vmatpush1.msra.mxu0 0.0
  %66 = vmatprep.subr.mxu0 0.0
  %67 = vmatpush1.msra.mxu0 0.0
  %68 = vmatprep.subr.mxu0 0.0
  %69 = vmatpush1.msra.mxu0 0.0
  %70 = vmatprep.subr.mxu0 0.0
  %71 = vmatpush1.msra.mxu0 0.0
  %72 = vmatprep.subr.mxu0 0.0
  %73 = vmatpush1.msra.mxu0 0.0
  %74 = vmatprep.subr.mxu0 0.0
  %75 = vmatpush1.msra.mxu0 0.0
  %76 = vmatprep.subr.mxu0 0.0
  %77 = vmatpush1.msra.mxu0 0.0
  %78 = vmatprep.subr.mxu0 0.0
  %79 = vmatpush1.msra.mxu0 0.0
  %80 = vmatprep.subr.mxu0 0.0
  %81 = vmatpush1.msra.mxu0 0.0
  %82 = vmatprep.subr.mxu0 0.0
  %83 = vmatpush1.msra.mxu0 0.0
  %84 = vmatprep.subr.mxu0 0.0
  %85 = vmatpush1.msra.mxu0 0.0
  %86 = vmatprep.subr.mxu0 0.0
  %87 = vmatpush1.msra.mxu0 0.0
  %88 = vmatprep.subr.mxu0 0.0
  %89 = vmatpush1.msra.mxu0 0.0
  %90 = vmatprep.subr.mxu0 0.0
  %91 = vmatpush1.msra.mxu0 0.0
  %92 = vmatprep.subr.mxu0 0.0
  %93 = vmatpush1.msra.mxu0 0.0
  %94 = vmatprep.subr.mxu0 0.0
  %95 = vmatpush1.msra.mxu0 0.0
  %96 = vmatprep.subr.mxu0 0.0
  %97 = vmatpush1.msra.mxu0 0.0
  %98 = vmatprep.subr.mxu0 0.0
  %99 = vmatpush1.msra.mxu0 0.0
  %100 = vmatprep.subr.mxu0 0.0
  %101 = vmatpush1.msra.mxu0 0.0
  %102 = vmatprep.subr.mxu0 0.0
  %103 = vmatpush1.msra.mxu0 0.0
  %104 = vmatprep.mubr.f32.mxu0 0.0
  %105 = vmatmul.mubr.f32.gmra.mrb[0].mxu0 %v34
  %v106 = vpop.f32.mrb[0].mxu0
  %v107 = vadd.f32 %v31, %v106
  %v108 = vpop.f32.mrb[0].mxu0
  %109 = vdwg.mxu0
  %v110 = vlaneseq
  %v111 = vshrl.u32 %v110, 7
  %v112 = vsub.s32 2, %v111
  %v113 = vrot.slane %v24, %v112
  %vm116 = vcmask 1040384
  %v117 = vrot.slane %v19, 7
  %v118 = vrot.slane %v20, 7
  %v119 = vsel %vm116, %v117, %v118
  %v120 = vsel %vm36, %v119, 0
  %122 = vmatprep.subr.mxu0 0.0
  %123 = vmatpush1.msra.mxu0 %v120
  %124 = vmatprep.subr.mxu0 0.0
  %125 = vmatpush1.msra.mxu0 0.0
  %126 = vmatprep.subr.mxu0 0.0
  %127 = vmatpush1.msra.mxu0 0.0
  %128 = vmatprep.subr.mxu0 0.0
  %129 = vmatpush1.msra.mxu0 0.0
  %130 = vmatprep.subr.mxu0 0.0
  %131 = vmatpush1.msra.mxu0 0.0
  %132 = vmatprep.subr.mxu0 0.0
  %133 = vmatpush1.msra.mxu0 0.0
  %134 = vmatprep.subr.mxu0 0.0
  %135 = vmatpush1.msra.mxu0 0.0
  %136 = vmatprep.subr.mxu0 0.0
  %137 = vmatpush1.msra.mxu0 0.0
  %138 = vmatprep.subr.mxu0 0.0
  %139 = vmatpush1.msra.mxu0 0.0
  %140 = vmatprep.subr.mxu0 0.0
  %141 = vmatpush1.msra.mxu0 0.0
  %142 = vmatprep.subr.mxu0 0.0
  %143 = vmatpush1.msra.mxu0 0.0
  %144 = vmatprep.subr.mxu0 0.0
  %145 = vmatpush1.msra.mxu0 0.0
  %146 = vmatprep.subr.mxu0 0.0
  %147 = vmatpush1.msra.mxu0 0.0
  %148 = vmatprep.subr.mxu0 0.0
  %149 = vmatpush1.msra.mxu0 0.0
  %150 = vmatprep.subr.mxu0 0.0
  %151 = vmatpush1.msra.mxu0 0.0
  %152 = vmatprep.subr.mxu0 0.0
  %153 = vmatpush1.msra.mxu0 0.0
  %154 = vmatprep.subr.mxu0 0.0
  %155 = vmatpush1.msra.mxu0 0.0
  %156 = vmatprep.subr.mxu0 0.0
  %157 = vmatpush1.msra.mxu0 0.0
  %158 = vmatprep.subr.mxu0 0.0
  %159 = vmatpush1.msra.mxu0 0.0
  %160 = vmatprep.subr.mxu0 0.0
  %161 = vmatpush1.msra.mxu0 0.0
  %162 = vmatprep.subr.mxu0 0.0
  %163 = vmatpush1.msra.mxu0 0.0
  %164 = vmatprep.subr.mxu0 0.0
  %165 = vmatpush1.msra.mxu0 0.0
  %166 = vmatprep.subr.mxu0 0.0
  %167 = vmatpush1.msra.mxu0 0.0
  %168 = vmatprep.subr.mxu0 0.0
  %169 = vmatpush1.msra.mxu0 0.0
  %170 = vmatprep.subr.mxu0 0.0
  %171 = vmatpush1.msra.mxu0 0.0
  %172 = vmatprep.subr.mxu0 0.0
  %173 = vmatpush1.msra.mxu0 0.0
  %174 = vmatprep.subr.mxu0 0.0
  %175 = vmatpush1.msra.mxu0 0.0
  %176 = vmatprep.subr.mxu0 0.0
  %177 = vmatpush1.msra.mxu0 0.0
  %178 = vmatprep.subr.mxu0 0.0
  %179 = vmatpush1.msra.mxu0 0.0
  %180 = vmatprep.subr.mxu0 0.0
  %181 = vmatpush1.msra.mxu0 0.0
  %182 = vmatprep.subr.mxu0 0.0
  %183 = vmatpush1.msra.mxu0 0.0
  %184 = vmatprep.subr.mxu0 0.0
  %185 = vmatpush1.msra.mxu0 0.0
  %186 = vmatprep.mubr.f32.mxu0 0.0
  %187 = vmatmul.mubr.f32.gmra.mrb[0].mxu0 %v34
  %v188 = vpop.f32.mrb[0].mxu0
  %v189 = vadd.f32 %v113, %v188
  %v190 = vpop.f32.mrb[0].mxu0
  %191 = vdwg.mxu0
  %v192 = vld [vmem:[%s1] sm:$0xff]
  %194 = vset.pattern.permute.xlu0 0
  %195 = vperm.xlu0 %194, %v192
  %v196 = vpop.permute.xlu0 %195
  %v198 = vlaneseq
  %v199 = vshrl.u32 %v198, 7
  %v200 = vsub.s32 2, %v199
  %v201 = vrot.slane %v17, %v200
  %v202 = vmul.f32 %v196, %v201
  %v203 = vadd.f32 %v107, %v202
  %vm204 = vcmask 130048
  %205 = vst.msk [vmem:[#allocation2] sm:$0xff] %vm204, %v203
  %206 = vst.msk [vmem:[#allocation2 + $0x8] sm:$0xff] %vm204, %v203
  %v207 = vld [vmem:[%s2] sm:$0xff]
  %v208 = vld [vmem:[#allocation2 + $0x1] sm:$0xff]
  %v209 = vrot.slane %v17, 3
  %v211 = vsel %vm32, %v207, 0
  %v213 = vsel %vm36, %v209, 0
  %215 = vmatprep.subr.mxu0 0.0
  %216 = vmatpush1.msra.mxu0 %v213
  %217 = vmatprep.subr.mxu0 0.0
  %218 = vmatpush1.msra.mxu0 0.0
  %219 = vmatprep.subr.mxu0 0.0
  %220 = vmatpush1.msra.mxu0 0.0
  %221 = vmatprep.subr.mxu0 0.0
  %222 = vmatpush1.msra.mxu0 0.0
  %223 = vmatprep.subr.mxu0 0.0
  %224 = vmatpush1.msra.mxu0 0.0
  %225 = vmatprep.subr.mxu0 0.0
  %226 = vmatpush1.msra.mxu0 0.0
  %227 = vmatprep.subr.mxu0 0.0
  %228 = vmatpush1.msra.mxu0 0.0
  %229 = vmatprep.subr.mxu0 0.0
  %230 = vmatpush1.msra.mxu0 0.0
  %231 = vmatprep.subr.mxu0 0.0
  %232 = vmatpush1.msra.mxu0 0.0
  %233 = vmatprep.subr.mxu0 0.0
  %234 = vmatpush1.msra.mxu0 0.0
  %235 = vmatprep.subr.mxu0 0.0
  %236 = vmatpush1.msra.mxu0 0.0
  %237 = vmatprep.subr.mxu0 0.0
  %238 = vmatpush1.msra.mxu0 0.0
  %239 = vmatprep.subr.mxu0 0.0
  %240 = vmatpush1.msra.mxu0 0.0
  %241 = vmatprep.subr.mxu0 0.0
  %242 = vmatpush1.msra.mxu0 0.0
  %243 = vmatprep.subr.mxu0 0.0
  %244 = vmatpush1.msra.mxu0 0.0
  %245 = vmatprep.subr.mxu0 0.0
  %246 = vmatpush1.msra.mxu0 0.0
  %247 = vmatprep.subr.mxu0 0.0
  %248 = vmatpush1.msra.mxu0 0.0
  %249 = vmatprep.subr.mxu0 0.0
  %250 = vmatpush1.msra.mxu0 0.0
  %251 = vmatprep.subr.mxu0 0.0
  %252 = vmatpush1.msra.mxu0 0.0
  %253 = vmatprep.subr.mxu0 0.0
  %254 = vmatpush1.msra.mxu0 0.0
  %255 = vmatprep.subr.mxu0 0.0
  %256 = vmatpush1.msra.mxu0 0.0
  %257 = vmatprep.subr.mxu0 0.0
  %258 = vmatpush1.msra.mxu0 0.0
  %259 = vmatprep.subr.mxu0 0.0
  %260 = vmatpush1.msra.mxu0 0.0
  %261 = vmatprep.subr.mxu0 0.0
  %262 = vmatpush1.msra.mxu0 0.0
  %263 = vmatprep.subr.mxu0 0.0
  %264 = vmatpush1.msra.mxu0 0.0
  %265 = vmatprep.subr.mxu0 0.0
  %266 = vmatpush1.msra.mxu0 0.0
  %267 = vmatprep.subr.mxu0 0.0
  %268 = vmatpush1.msra.mxu0 0.0
  %269 = vmatprep.subr.mxu0 0.0
  %270 = vmatpush1.msra.mxu0 0.0
  %271 = vmatprep.subr.mxu0 0.0
  %272 = vmatpush1.msra.mxu0 0.0
  %273 = vmatprep.subr.mxu0 0.0
  %274 = vmatpush1.msra.mxu0 0.0
  %275 = vmatprep.subr.mxu0 0.0
  %276 = vmatpush1.msra.mxu0 0.0
  %277 = vmatprep.subr.mxu0 0.0
  %278 = vmatpush1.msra.mxu0 0.0
  %279 = vmatprep.mubr.f32.mxu0 0.0
  %280 = vmatmul.mubr.f32.gmra.mrb[0].mxu0 %v211
  %v281 = vpop.f32.mrb[0].mxu0
  %v282 = vadd.f32 0.0, %v281
  %v283 = vpop.f32.mrb[0].mxu0
  %284 = vdwg.mxu0
  %v285 = vadd.f32 %v208, %v282
  %v286 = vmax.f32 %v285, 0.0
  %v287 = vlaneseq
  %v288 = vshrl.u32 %v287, 7
  %v289 = vsub.s32 6, %v288
  %v290 = vrot.slane %v19, %v289
  %v292 = vrot.slane %v17, 6
  %v293 = vrot.slane %v18, 6
  %v294 = vsel %vm36, %v292, %v293
  %v295 = vrot.slane %v19, 6
  %v296 = vsel %vm36, %v293, %v295
  %v300 = vsel %vm204, %v286, 0
  %302 = vmatprep.subr.mxu0 0.0
  %303 = vmatpush1.msra.mxu0 %v294
  %304 = vmatprep.subr.mxu0 0.0
  %305 = vmatpush1.msra.mxu0 %v296
  %306 = vmatprep.subr.mxu0 0.0
  %307 = vmatpush1.msra.mxu0 0.0
  %308 = vmatprep.subr.mxu0 0.0
  %309 = vmatpush1.msra.mxu0 0.0
  %310 = vmatprep.subr.mxu0 0.0
  %311 = vmatpush1.msra.mxu0 0.0
  %312 = vmatprep.subr.mxu0 0.0
  %313 = vmatpush1.msra.mxu0 0.0
  %314 = vmatprep.subr.mxu0 0.0
  %315 = vmatpush1.msra.mxu0 0.0
  %316 = vmatprep.subr.mxu0 0.0
  %317 = vmatpush1.msra.mxu0 0.0
  %318 = vmatprep.subr.mxu0 0.0
  %319 = vmatpush1.msra.mxu0 0.0
  %320 = vmatprep.subr.mxu0 0.0
  %321 = vmatpush1.msra.mxu0 0.0
  %322 = vmatprep.subr.mxu0 0.0
  %323 = vmatpush1.msra.mxu0 0.0
  %324 = vmatprep.subr.mxu0 0.0
  %325 = vmatpush1.msra.mxu0 0.0
  %326 = vmatprep.subr.mxu0 0.0
  %327 = vmatpush1.msra.mxu0 0.0
  %328 = vmatprep.subr.mxu0 0.0
  %329 = vmatpush1.msra.mxu0 0.0
  %330 = vmatprep.subr.mxu0 0.0
  %331 = vmatpush1.msra.mxu0 0.0
  %332 = vmatprep.subr.mxu0 0.0
  %333 = vmatpush1.msra.mxu0 0.0
  %334 = vmatprep.subr.mxu0 0.0
  %335 = vmatpush1.msra.mxu0 0.0
  %336 = vmatprep.subr.mxu0 0.0
  %337 = vmatpush1.msra.mxu0 0.0
  %338 = vmatprep.subr.mxu0 0.0
  %339 = vmatpush1.msra.mxu0 0.0
  %340 = vmatprep.subr.mxu0 0.0
  %341 = vmatpush1.msra.mxu0 0.0
  %342 = vmatprep.subr.mxu0 0.0
  %343 = vmatpush1.msra.mxu0 0.0
  %344 = vmatprep.subr.mxu0 0.0
  %345 = vmatpush1.msra.mxu0 0.0
  %346 = vmatprep.subr.mxu0 0.0
  %347 = vmatpush1.msra.mxu0 0.0
  %348 = vmatprep.subr.mxu0 0.0
  %349 = vmatpush1.msra.mxu0 0.0
  %350 = vmatprep.subr.mxu0 0.0
  %351 = vmatpush1.msra.mxu0 0.0
  %352 = vmatprep.subr.mxu0 0.0
  %353 = vmatpush1.msra.mxu0 0.0
  %354 = vmatprep.subr.mxu0 0.0
  %355 = vmatpush1.msra.mxu0 0.0
  %356 = vmatprep.subr.mxu0 0.0
  %357 = vmatpush1.msra.mxu0 0.0
  %358 = vmatprep.subr.mxu0 0.0
  %359 = vmatpush1.msra.mxu0 0.0
  %360 = vmatprep.subr.mxu0 0.0
  %361 = vmatpush1.msra.mxu0 0.0
  %362 = vmatprep.subr.mxu0 0.0
  %363 = vmatpush1.msra.mxu0 0.0
  %364 = vmatprep.subr.mxu0 0.0
  %365 = vmatpush1.msra.mxu0 0.0
  %366 = vmatprep.mubr.f32.mxu0 0.0
  %367 = vmatmul.mubr.f32.gmra.mrb[0].mxu0 %v300
  %v368 = vpop.f32.mrb[0].mxu0
  %v369 = vadd.f32 %v290, %v368
  %v370 = vpop.f32.mrb[0].mxu0
  %371 = vdwg.mxu0
  %v372 = vmax.f32 %v369, 0.0
  %v373 = vmax.f32 %v372, 0.0
  %s374 = scalar_lea.vmem %s2, 8
  %v375 = vld [vmem:[%s374] sm:$0xff]
  %v376 = vld [vmem:[#allocation2 + $0x2] sm:$0xff]
  %v378 = vsel %vm32, %v375, 0
  %380 = vmatprep.subr.mxu0 0.0
  %381 = vmatpush1.msra.mxu0 %v213
  %382 = vmatprep.subr.mxu0 0.0
  %383 = vmatpush1.msra.mxu0 0.0
  %384 = vmatprep.subr.mxu0 0.0
  %385 = vmatpush1.msra.mxu0 0.0
  %386 = vmatprep.subr.mxu0 0.0
  %387 = vmatpush1.msra.mxu0 0.0
  %388 = vmatprep.subr.mxu0 0.0
  %389 = vmatpush1.msra.mxu0 0.0
  %390 = vmatprep.subr.mxu0 0.0
  %391 = vmatpush1.msra.mxu0 0.0
  %392 = vmatprep.subr.mxu0 0.0
  %393 = vmatpush1.msra.mxu0 0.0
  %394 = vmatprep.subr.mxu0 0.0
  %395 = vmatpush1.msra.mxu0 0.0
  %396 = vmatprep.subr.mxu0 0.0
  %397 = vmatpush1.msra.mxu0 0.0
  %398 = vmatprep.subr.mxu0 0.0
  %399 = vmatpush1.msra.mxu0 0.0
  %400 = vmatprep.subr.mxu0 0.0
  %401 = vmatpush1.msra.mxu0 0.0
  %402 = vmatprep.subr.mxu0 0.0
  %403 = vmatpush1.msra.mxu0 0.0
  %404 = vmatprep.subr.mxu0 0.0
  %405 = vmatpush1.msra.mxu0 0.0
  %406 = vmatprep.subr.mxu0 0.0
  %407 = vmatpush1.msra.mxu0 0.0
  %408 = vmatprep.subr.mxu0 0.0
  %409 = vmatpush1.msra.mxu0 0.0
  %410 = vmatprep.subr.mxu0 0.0
  %411 = vmatpush1.msra.mxu0 0.0
  %412 = vmatprep.subr.mxu0 0.0
  %413 = vmatpush1.msra.mxu0 0.0
  %414 = vmatprep.subr.mxu0 0.0
  %415 = vmatpush1.msra.mxu0 0.0
  %416 = vmatprep.subr.mxu0 0.0
  %417 = vmatpush1.msra.mxu0 0.0
  %418 = vmatprep.subr.mxu0 0.0
  %419 = vmatpush1.msra.mxu0 0.0
  %420 = vmatprep.subr.mxu0 0.0
  %421 = vmatpush1.msra.mxu0 0.0
  %422 = vmatprep.subr.mxu0 0.0
  %423 = vmatpush1.msra.mxu0 0.0
  %424 = vmatprep.subr.mxu0 0.0
  %425 = vmatpush1.msra.mxu0 0.0
  %426 = vmatprep.subr.mxu0 0.0
  %427 = vmatpush1.msra.mxu0 0.0
  %428 = vmatprep.subr.mxu0 0.0
  %429 = vmatpush1.msra.mxu0 0.0
  %430 = vmatprep.subr.mxu0 0.0
  %431 = vmatpush1.msra.mxu0 0.0
  %432 = vmatprep.subr.mxu0 0.0
  %433 = vmatpush1.msra.mxu0 0.0
  %434 = vmatprep.subr.mxu0 0.0
  %435 = vmatpush1.msra.mxu0 0.0
  %436 = vmatprep.subr.mxu0 0.0
  %437 = vmatpush1.msra.mxu0 0.0
  %438 = vmatprep.subr.mxu0 0.0
  %439 = vmatpush1.msra.mxu0 0.0
  %440 = vmatprep.subr.mxu0 0.0
  %441 = vmatpush1.msra.mxu0 0.0
  %442 = vmatprep.subr.mxu0 0.0
  %443 = vmatpush1.msra.mxu0 0.0
  %444 = vmatprep.mubr.f32.mxu0 0.0
  %445 = vmatmul.mubr.f32.gmra.mrb[0].mxu0 %v378
  %v446 = vpop.f32.mrb[0].mxu0
  %v447 = vadd.f32 0.0, %v446
  %v448 = vpop.f32.mrb[0].mxu0
  %449 = vdwg.mxu0
  %v450 = vadd.f32 %v376, %v447
  %v451 = vmax.f32 %v450, 0.0
  %v453 = vsel %vm204, %v451, 0
  %455 = vmatprep.subr.mxu0 0.0
  %456 = vmatpush1.msra.mxu0 %v294
  %457 = vmatprep.subr.mxu0 0.0
  %458 = vmatpush1.msra.mxu0 %v296
  %459 = vmatprep.subr.mxu0 0.0
  %460 = vmatpush1.msra.mxu0 0.0
  %461 = vmatprep.subr.mxu0 0.0
  %462 = vmatpush1.msra.mxu0 0.0
  %463 = vmatprep.subr.mxu0 0.0
  %464 = vmatpush1.msra.mxu0 0.0
  %465 = vmatprep.subr.mxu0 0.0
  %466 = vmatpush1.msra.mxu0 0.0
  %467 = vmatprep.subr.mxu0 0.0
  %468 = vmatpush1.msra.mxu0 0.0
  %469 = vmatprep.subr.mxu0 0.0
  %470 = vmatpush1.msra.mxu0 0.0
  %471 = vmatprep.subr.mxu0 0.0
  %472 = vmatpush1.msra.mxu0 0.0
  %473 = vmatprep.subr.mxu0 0.0
  %474 = vmatpush1.msra.mxu0 0.0
  %475 = vmatprep.subr.mxu0 0.0
  %476 = vmatpush1.msra.mxu0 0.0
  %477 = vmatprep.subr.mxu0 0.0
  %478 = vmatpush1.msra.mxu0 0.0
  %479 = vmatprep.subr.mxu0 0.0
  %480 = vmatpush1.msra.mxu0 0.0
  %481 = vmatprep.subr.mxu0 0.0
  %482 = vmatpush1.msra.mxu0 0.0
  %483 = vmatprep.subr.mxu0 0.0
  %484 = vmatpush1.msra.mxu0 0.0
  %485 = vmatprep.subr.mxu0 0.0
  %486 = vmatpush1.msra.mxu0 0.0
  %487 = vmatprep.subr.mxu0 0.0
  %488 = vmatpush1.msra.mxu0 0.0
  %489 = vmatprep.subr.mxu0 0.0
  %490 = vmatpush1.msra.mxu0 0.0
  %491 = vmatprep.subr.mxu0 0.0
  %492 = vmatpush1.msra.mxu0 0.0
  %493 = vmatprep.subr.mxu0 0.0
  %494 = vmatpush1.msra.mxu0 0.0
  %495 = vmatprep.subr.mxu0 0.0
  %496 = vmatpush1.msra.mxu0 0.0
  %497 = vmatprep.subr.mxu0 0.0
  %498 = vmatpush1.msra.mxu0 0.0
  %499 = vmatprep.subr.mxu0 0.0
  %500 = vmatpush1.msra.mxu0 0.0
  %501 = vmatprep.subr.mxu0 0.0
  %502 = vmatpush1.msra.mxu0 0.0
  %503 = vmatprep.subr.mxu0 0.0
  %504 = vmatpush1.msra.mxu0 0.0
  %505 = vmatprep.subr.mxu0 0.0
  %506 = vmatpush1.msra.mxu0 0.0
  %507 = vmatprep.subr.mxu0 0.0
  %508 = vmatpush1.msra.mxu0 0.0
  %509 = vmatprep.subr.mxu0 0.0
  %510 = vmatpush1.msra.mxu0 0.0
  %511 = vmatprep.subr.mxu0 0.0
  %512 = vmatpush1.msra.mxu0 0.0
  %513 = vmatprep.subr.mxu0 0.0
  %514 = vmatpush1.msra.mxu0 0.0
  %515 = vmatprep.subr.mxu0 0.0
  %516 = vmatpush1.msra.mxu0 0.0
  %517 = vmatprep.subr.mxu0 0.0
  %518 = vmatpush1.msra.mxu0 0.0
  %519 = vmatprep.mubr.f32.mxu0 0.0
  %520 = vmatmul.mubr.f32.gmra.mrb[0].mxu0 %v453
  %v521 = vpop.f32.mrb[0].mxu0
  %v522 = vadd.f32 %v290, %v521
  %v523 = vpop.f32.mrb[0].mxu0
  %524 = vdwg.mxu0
  %v525 = vmax.f32 %v522, 0.0
  %v526 = vmax.f32 %v373, %v525
  %s527 = scalar_lea.vmem %s2, 16
  %v528 = vld [vmem:[%s527] sm:$0xff]
  %v529 = vld [vmem:[#allocation2 + $0x3] sm:$0xff]
  %v531 = vsel %vm32, %v528, 0
  %533 = vmatprep.subr.mxu0 0.0
  %534 = vmatpush1.msra.mxu0 %v213
  %535 = vmatprep.subr.mxu0 0.0
  %536 = vmatpush1.msra.mxu0 0.0
  %537 = vmatprep.subr.mxu0 0.0
  %538 = vmatpush1.msra.mxu0 0.0
  %539 = vmatprep.subr.mxu0 0.0
  %540 = vmatpush1.msra.mxu0 0.0
  %541 = vmatprep.subr.mxu0 0.0
  %542 = vmatpush1.msra.mxu0 0.0
  %543 = vmatprep.subr.mxu0 0.0
  %544 = vmatpush1.msra.mxu0 0.0
  %545 = vmatprep.subr.mxu0 0.0
  %546 = vmatpush1.msra.mxu0 0.0
  %547 = vmatprep.subr.mxu0 0.0
  %548 = vmatpush1.msra.mxu0 0.0
  %549 = vmatprep.subr.mxu0 0.0
  %550 = vmatpush1.msra.mxu0 0.0
  %551 = vmatprep.subr.mxu0 0.0
  %552 = vmatpush1.msra.mxu0 0.0
  %553 = vmatprep.subr.mxu0 0.0
  %554 = vmatpush1.msra.mxu0 0.0
  %555 = vmatprep.subr.mxu0 0.0
  %556 = vmatpush1.msra.mxu0 0.0
  %557 = vmatprep.subr.mxu0 0.0
  %558 = vmatpush1.msra.mxu0 0.0
  %559 = vmatprep.subr.mxu0 0.0
  %560 = vmatpush1.msra.mxu0 0.0
  %561 = vmatprep.subr.mxu0 0.0
  %562 = vmatpush1.msra.mxu0 0.0
  %563 = vmatprep.subr.mxu0 0.0
  %564 = vmatpush1.msra.mxu0 0.0
  %565 = vmatprep.subr.mxu0 0.0
  %566 = vmatpush1.msra.mxu0 0.0
  %567 = vmatprep.subr.mxu0 0.0
  %568 = vmatpush1.msra.mxu0 0.0
  %569 = vmatprep.subr.mxu0 0.0
  %570 = vmatpush1.msra.mxu0 0.0
  %571 = vmatprep.subr.mxu0 0.0
  %572 = vmatpush1.msra.mxu0 0.0
  %573 = vmatprep.subr.mxu0 0.0
  %574 = vmatpush1.msra.mxu0 0.0
  %575 = vmatprep.subr.mxu0 0.0
  %576 = vmatpush1.msra.mxu0 0.0
  %577 = vmatprep.subr.mxu0 0.0
  %578 = vmatpush1.msra.mxu0 0.0
  %579 = vmatprep.subr.mxu0 0.0
  %580 = vmatpush1.msra.mxu0 0.0
  %581 = vmatprep.subr.mxu0 0.0
  %582 = vmatpush1.msra.mxu0 0.0
  %583 = vmatprep.subr.mxu0 0.0
  %584 = vmatpush1.msra.mxu0 0.0
  %585 = vmatprep.subr.mxu0 0.0
  %586 = vmatpush1.msra.mxu0 0.0
  %587 = vmatprep.subr.mxu0 0.0
  %588 = vmatpush1.msra.mxu0 0.0
  %589 = vmatprep.subr.mxu0 0.0
  %590 = vmatpush1.msra.mxu0 0.0
  %591 = vmatprep.subr.mxu0 0.0
  %592 = vmatpush1.msra.mxu0 0.0
  %593 = vmatprep.subr.mxu0 0.0
  %594 = vmatpush1.msra.mxu0 0.0
  %595 = vmatprep.subr.mxu0 0.0
  %596 = vmatpush1.msra.mxu0 0.0
  %597 = vmatprep.mubr.f32.mxu0 0.0
  %598 = vmatmul.mubr.f32.gmra.mrb[0].mxu0 %v531
  %v599 = vpop.f32.mrb[0].mxu0
  %v600 = vadd.f32 0.0, %v599
  %v601 = vpop.f32.mrb[0].mxu0
  %602 = vdwg.mxu0
  %v603 = vadd.f32 %v529, %v600
  %v604 = vmax.f32 %v603, 0.0
  %v606 = vsel %vm204, %v604, 0
  %608 = vmatprep.subr.mxu0 0.0
  %609 = vmatpush1.msra.mxu0 %v294
  %610 = vmatprep.subr.mxu0 0.0
  %611 = vmatpush1.msra.mxu0 %v296
  %612 = vmatprep.subr.mxu0 0.0
  %613 = vmatpush1.msra.mxu0 0.0
  %614 = vmatprep.subr.mxu0 0.0
  %615 = vmatpush1.msra.mxu0 0.0
  %616 = vmatprep.subr.mxu0 0.0
  %617 = vmatpush1.msra.mxu0 0.0
  %618 = vmatprep.subr.mxu0 0.0
  %619 = vmatpush1.msra.mxu0 0.0
  %620 = vmatprep.subr.mxu0 0.0
  %621 = vmatpush1.msra.mxu0 0.0
  %622 = vmatprep.subr.mxu0 0.0
  %623 = vmatpush1.msra.mxu0 0.0
  %624 = vmatprep.subr.mxu0 0.0
  %625 = vmatpush1.msra.mxu0 0.0
  %626 = vmatprep.subr.mxu0 0.0
  %627 = vmatpush1.msra.mxu0 0.0
  %628 = vmatprep.subr.mxu0 0.0
  %629 = vmatpush1.msra.mxu0 0.0
  %630 = vmatprep.subr.mxu0 0.0
  %631 = vmatpush1.msra.mxu0 0.0
  %632 = vmatprep.subr.mxu0 0.0
  %633 = vmatpush1.msra.mxu0 0.0
  %634 = vmatprep.subr.mxu0 0.0
  %635 = vmatpush1.msra.mxu0 0.0
  %636 = vmatprep.subr.mxu0 0.0
  %637 = vmatpush1.msra.mxu0 0.0
  %638 = vmatprep.subr.mxu0 0.0
  %639 = vmatpush1.msra.mxu0 0.0
  %640 = vmatprep.subr.mxu0 0.0
  %641 = vmatpush1.msra.mxu0 0.0
  %642 = vmatprep.subr.mxu0 0.0
  %643 = vmatpush1.msra.mxu0 0.0
  %644 = vmatprep.subr.mxu0 0.0
  %645 = vmatpush1.msra.mxu0 0.0
  %646 = vmatprep.subr.mxu0 0.0
  %647 = vmatpush1.msra.mxu0 0.0
  %648 = vmatprep.subr.mxu0 0.0
  %649 = vmatpush1.msra.mxu0 0.0
  %650 = vmatprep.subr.mxu0 0.0
  %651 = vmatpush1.msra.mxu0 0.0
  %652 = vmatprep.subr.mxu0 0.0
  %653 = vmatpush1.msra.mxu0 0.0
  %654 = vmatprep.subr.mxu0 0.0
  %655 = vmatpush1.msra.mxu0 0.0
  %656 = vmatprep.subr.mxu0 0.0
  %657 = vmatpush1.msra.mxu0 0.0
  %658 = vmatprep.subr.mxu0 0.0
  %659 = vmatpush1.msra.mxu0 0.0
  %660 = vmatprep.subr.mxu0 0.0
  %661 = vmatpush1.msra.mxu0 0.0
  %662 = vmatprep.subr.mxu0 0.0
  %663 = vmatpush1.msra.mxu0 0.0
  %664 = vmatprep.subr.mxu0 0.0
  %665 = vmatpush1.msra.mxu0 0.0
  %666 = vmatprep.subr.mxu0 0.0
  %667 = vmatpush1.msra.mxu0 0.0
  %668 = vmatprep.subr.mxu0 0.0
  %669 = vmatpush1.msra.mxu0 0.0
  %670 = vmatprep.subr.mxu0 0.0
  %671 = vmatpush1.msra.mxu0 0.0
  %672 = vmatprep.mubr.f32.mxu0 0.0
  %673 = vmatmul.mubr.f32.gmra.mrb[0].mxu0 %v606
  %v674 = vpop.f32.mrb[0].mxu0
  %v675 = vadd.f32 %v290, %v674
  %v676 = vpop.f32.mrb[0].mxu0
  %677 = vdwg.mxu0
  %v678 = vmax.f32 %v675, 0.0
  %v679 = vmax.f32 %v526, %v678
  %s680 = scalar_lea.vmem %s2, 24
  %v681 = vld [vmem:[%s680] sm:$0xff]
  %v682 = vld [vmem:[#allocation2 + $0x4] sm:$0xff]
  %v684 = vsel %vm32, %v681, 0
  %686 = vmatprep.subr.mxu0 0.0
  %687 = vmatpush1.msra.mxu0 %v213
  %688 = vmatprep.subr.mxu0 0.0
  %689 = vmatpush1.msra.mxu0 0.0
  %690 = vmatprep.subr.mxu0 0.0
  %691 = vmatpush1.msra.mxu0 0.0
  %692 = vmatprep.subr.mxu0 0.0
  %693 = vmatpush1.msra.mxu0 0.0
  %694 = vmatprep.subr.mxu0 0.0
  %695 = vmatpush1.msra.mxu0 0.0
  %696 = vmatprep.subr.mxu0 0.0
  %697 = vmatpush1.msra.mxu0 0.0
  %698 = vmatprep.subr.mxu0 0.0
  %699 = vmatpush1.msra.mxu0 0.0
  %700 = vmatprep.subr.mxu0 0.0
  %701 = vmatpush1.msra.mxu0 0.0
  %702 = vmatprep.subr.mxu0 0.0
  %703 = vmatpush1.msra.mxu0 0.0
  %704 = vmatprep.subr.mxu0 0.0
  %705 = vmatpush1.msra.mxu0 0.0
  %706 = vmatprep.subr.mxu0 0.0
  %707 = vmatpush1.msra.mxu0 0.0
  %708 = vmatprep.subr.mxu0 0.0
  %709 = vmatpush1.msra.mxu0 0.0
  %710 = vmatprep.subr.mxu0 0.0
  %711 = vmatpush1.msra.mxu0 0.0
  %712 = vmatprep.subr.mxu0 0.0
  %713 = vmatpush1.msra.mxu0 0.0
  %714 = vmatprep.subr.mxu0 0.0
  %715 = vmatpush1.msra.mxu0 0.0
  %716 = vmatprep.subr.mxu0 0.0
  %717 = vmatpush1.msra.mxu0 0.0
  %718 = vmatprep.subr.mxu0 0.0
  %719 = vmatpush1.msra.mxu0 0.0
  %720 = vmatprep.subr.mxu0 0.0
  %721 = vmatpush1.msra.mxu0 0.0
  %722 = vmatprep.subr.mxu0 0.0
  %723 = vmatpush1.msra.mxu0 0.0
  %724 = vmatprep.subr.mxu0 0.0
  %725 = vmatpush1.msra.mxu0 0.0
  %726 = vmatprep.subr.mxu0 0.0
  %727 = vmatpush1.msra.mxu0 0.0
  %728 = vmatprep.subr.mxu0 0.0
  %729 = vmatpush1.msra.mxu0 0.0
  %730 = vmatprep.subr.mxu0 0.0
  %731 = vmatpush1.msra.mxu0 0.0
  %732 = vmatprep.subr.mxu0 0.0
  %733 = vmatpush1.msra.mxu0 0.0
  %734 = vmatprep.subr.mxu0 0.0
  %735 = vmatpush1.msra.mxu0 0.0
  %736 = vmatprep.subr.mxu0 0.0
  %737 = vmatpush1.msra.mxu0 0.0
  %738 = vmatprep.subr.mxu0 0.0
  %739 = vmatpush1.msra.mxu0 0.0
  %740 = vmatprep.subr.mxu0 0.0
  %741 = vmatpush1.msra.mxu0 0.0
  %742 = vmatprep.subr.mxu0 0.0
  %743 = vmatpush1.msra.mxu0 0.0
  %744 = vmatprep.subr.mxu0 0.0
  %745 = vmatpush1.msra.mxu0 0.0
  %746 = vmatprep.subr.mxu0 0.0
  %747 = vmatpush1.msra.mxu0 0.0
  %748 = vmatprep.subr.mxu0 0.0
  %749 = vmatpush1.msra.mxu0 0.0
  %750 = vmatprep.mubr.f32.mxu0 0.0
  %751 = vmatmul.mubr.f32.gmra.mrb[0].mxu0 %v684
  %v752 = vpop.f32.mrb[0].mxu0
  %v753 = vadd.f32 0.0, %v752
  %v754 = vpop.f32.mrb[0].mxu0
  %755 = vdwg.mxu0
  %v756 = vadd.f32 %v682, %v753
  %v757 = vmax.f32 %v756, 0.0
  %v759 = vsel %vm204, %v757, 0
  %761 = vmatprep.subr.mxu0 0.0
  %762 = vmatpush1.msra.mxu0 %v294
  %763 = vmatprep.subr.mxu0 0.0
  %764 = vmatpush1.msra.mxu0 %v296
  %765 = vmatprep.subr.mxu0 0.0
  %766 = vmatpush1.msra.mxu0 0.0
  %767 = vmatprep.subr.mxu0 0.0
  %768 = vmatpush1.msra.mxu0 0.0
  %769 = vmatprep.subr.mxu0 0.0
  %770 = vmatpush1.msra.mxu0 0.0
  %771 = vmatprep.subr.mxu0 0.0
  %772 = vmatpush1.msra.mxu0 0.0
  %773 = vmatprep.subr.mxu0 0.0
  %774 = vmatpush1.msra.mxu0 0.0
  %775 = vmatprep.subr.mxu0 0.0
  %776 = vmatpush1.msra.mxu0 0.0
  %777 = vmatprep.subr.mxu0 0.0
  %778 = vmatpush1.msra.mxu0 0.0
  %779 = vmatprep.subr.mxu0 0.0
  %780 = vmatpush1.msra.mxu0 0.0
  %781 = vmatprep.subr.mxu0 0.0
  %782 = vmatpush1.msra.mxu0 0.0
  %783 = vmatprep.subr.mxu0 0.0
  %784 = vmatpush1.msra.mxu0 0.0
  %785 = vmatprep.subr.mxu0 0.0
  %786 = vmatpush1.msra.mxu0 0.0
  %787 = vmatprep.subr.mxu0 0.0
  %788 = vmatpush1.msra.mxu0 0.0
  %789 = vmatprep.subr.mxu0 0.0
  %790 = vmatpush1.msra.mxu0 0.0
  %791 = vmatprep.subr.mxu0 0.0
  %792 = vmatpush1.msra.mxu0 0.0
  %793 = vmatprep.subr.mxu0 0.0
  %794 = vmatpush1.msra.mxu0 0.0
  %795 = vmatprep.subr.mxu0 0.0
  %796 = vmatpush1.msra.mxu0 0.0
  %797 = vmatprep.subr.mxu0 0.0
  %798 = vmatpush1.msra.mxu0 0.0
  %799 = vmatprep.subr.mxu0 0.0
  %800 = vmatpush1.msra.mxu0 0.0
  %801 = vmatprep.subr.mxu0 0.0
  %802 = vmatpush1.msra.mxu0 0.0
  %803 = vmatprep.subr.mxu0 0.0
  %804 = vmatpush1.msra.mxu0 0.0
  %805 = vmatprep.subr.mxu0 0.0
  %806 = vmatpush1.msra.mxu0 0.0
  %807 = vmatprep.subr.mxu0 0.0
  %808 = vmatpush1.msra.mxu0 0.0
  %809 = vmatprep.subr.mxu0 0.0
  %810 = vmatpush1.msra.mxu0 0.0
  %811 = vmatprep.subr.mxu0 0.0
  %812 = vmatpush1.msra.mxu0 0.0
  %813 = vmatprep.subr.mxu0 0.0
  %814 = vmatpush1.msra.mxu0 0.0
  %815 = vmatprep.subr.mxu0 0.0
  %816 = vmatpush1.msra.mxu0 0.0
  %817 = vmatprep.subr.mxu0 0.0
  %818 = vmatpush1.msra.mxu0 0.0
  %819 = vmatprep.subr.mxu0 0.0
  %820 = vmatpush1.msra.mxu0 0.0
  %821 = vmatprep.subr.mxu0 0.0
  %822 = vmatpush1.msra.mxu0 0.0
  %823 = vmatprep.subr.mxu0 0.0
  %824 = vmatpush1.msra.mxu0 0.0
  %825 = vmatprep.mubr.f32.mxu0 0.0
  %826 = vmatmul.mubr.f32.gmra.mrb[0].mxu0 %v759
  %v827 = vpop.f32.mrb[0].mxu0
  %v828 = vadd.f32 %v290, %v827
  %v829 = vpop.f32.mrb[0].mxu0
  %830 = vdwg.mxu0
  %v831 = vmax.f32 %v828, 0.0
  %v832 = vmax.f32 %v679, %v831
  %s833 = scalar_lea.vmem %s2, 32
  %v834 = vld [vmem:[%s833] sm:$0xff]
  %v835 = vld [vmem:[#allocation2 + $0x5] sm:$0xff]
  %v837 = vsel %vm32, %v834, 0
  %839 = vmatprep.subr.mxu0 0.0
  %840 = vmatpush1.msra.mxu0 %v213
  %841 = vmatprep.subr.mxu0 0.0
  %842 = vmatpush1.msra.mxu0 0.0
  %843 = vmatprep.subr.mxu0 0.0
  %844 = vmatpush1.msra.mxu0 0.0
  %845 = vmatprep.subr.mxu0 0.0
  %846 = vmatpush1.msra.mxu0 0.0
  %847 = vmatprep.subr.mxu0 0.0
  %848 = vmatpush1.msra.mxu0 0.0
  %849 = vmatprep.subr.mxu0 0.0
  %850 = vmatpush1.msra.mxu0 0.0
  %851 = vmatprep.subr.mxu0 0.0
  %852 = vmatpush1.msra.mxu0 0.0
  %853 = vmatprep.subr.mxu0 0.0
  %854 = vmatpush1.msra.mxu0 0.0
  %855 = vmatprep.subr.mxu0 0.0
  %856 = vmatpush1.msra.mxu0 0.0
  %857 = vmatprep.subr.mxu0 0.0
  %858 = vmatpush1.msra.mxu0 0.0
  %859 = vmatprep.subr.mxu0 0.0
  %860 = vmatpush1.msra.mxu0 0.0
  %861 = vmatprep.subr.mxu0 0.0
  %862 = vmatpush1.msra.mxu0 0.0
  %863 = vmatprep.subr.mxu0 0.0
  %864 = vmatpush1.msra.mxu0 0.0
  %865 = vmatprep.subr.mxu0 0.0
  %866 = vmatpush1.msra.mxu0 0.0
  %867 = vmatprep.subr.mxu0 0.0
  %868 = vmatpush1.msra.mxu0 0.0
  %869 = vmatprep.subr.mxu0 0.0
  %870 = vmatpush1.msra.mxu0 0.0
  %871 = vmatprep.subr.mxu0 0.0
  %872 = vmatpush1.msra.mxu0 0.0
  %873 = vmatprep.subr.mxu0 0.0
  %874 = vmatpush1.msra.mxu0 0.0
  %875 = vmatprep.subr.mxu0 0.0
  %876 = vmatpush1.msra.mxu0 0.0
  %877 = vmatprep.subr.mxu0 0.0
  %878 = vmatpush1.msra.mxu0 0.0
  %879 = vmatprep.subr.mxu0 0.0
  %880 = vmatpush1.msra.mxu0 0.0
  %881 = vmatprep.subr.mxu0 0.0
  %882 = vmatpush1.msra.mxu0 0.0
  %883 = vmatprep.subr.mxu0 0.0
  %884 = vmatpush1.msra.mxu0 0.0
  %885 = vmatprep.subr.mxu0 0.0
  %886 = vmatpush1.msra.mxu0 0.0
  %887 = vmatprep.subr.mxu0 0.0
  %888 = vmatpush1.msra.mxu0 0.0
  %889 = vmatprep.subr.mxu0 0.0
  %890 = vmatpush1.msra.mxu0 0.0
  %891 = vmatprep.subr.mxu0 0.0
  %892 = vmatpush1.msra.mxu0 0.0
  %893 = vmatprep.subr.mxu0 0.0
  %894 = vmatpush1.msra.mxu0 0.0
  %895 = vmatprep.subr.mxu0 0.0
  %896 = vmatpush1.msra.mxu0 0.0
  %897 = vmatprep.subr.mxu0 0.0
  %898 = vmatpush1.msra.mxu0 0.0
  %899 = vmatprep.subr.mxu0 0.0
  %900 = vmatpush1.msra.mxu0 0.0
  %901 = vmatprep.subr.mxu0 0.0
  %902 = vmatpush1.msra.mxu0 0.0
  %903 = vmatprep.mubr.f32.mxu0 0.0
  %904 = vmatmul.mubr.f32.gmra.mrb[0].mxu0 %v837
  %v905 = vpop.f32.mrb[0].mxu0
  %v906 = vadd.f32 0.0, %v905
  %v907 = vpop.f32.mrb[0].mxu0
  %908 = vdwg.mxu0
  %v909 = vadd.f32 %v835, %v906
  %v910 = vmax.f32 %v909, 0.0
  %v912 = vsel %vm204, %v910, 0
  %914 = vmatprep.subr.mxu0 0.0
  %915 = vmatpush1.msra.mxu0 %v294
  %916 = vmatprep.subr.mxu0 0.0
  %917 = vmatpush1.msra.mxu0 %v296
  %918 = vmatprep.subr.mxu0 0.0
  %919 = vmatpush1.msra.mxu0 0.0
  %920 = vmatprep.subr.mxu0 0.0
  %921 = vmatpush1.msra.mxu0 0.0
  %922 = vmatprep.subr.mxu0 0.0
  %923 = vmatpush1.msra.mxu0 0.0
  %924 = vmatprep.subr.mxu0 0.0
  %925 = vmatpush1.msra.mxu0 0.0
  %926 = vmatprep.subr.mxu0 0.0
  %927 = vmatpush1.msra.mxu0 0.0
  %928 = vmatprep.subr.mxu0 0.0
  %929 = vmatpush1.msra.mxu0 0.0
  %930 = vmatprep.subr.mxu0 0.0
  %931 = vmatpush1.msra.mxu0 0.0
  %932 = vmatprep.subr.mxu0 0.0
  %933 = vmatpush1.msra.mxu0 0.0
  %934 = vmatprep.subr.mxu0 0.0
  %935 = vmatpush1.msra.mxu0 0.0
  %936 = vmatprep.subr.mxu0 0.0
  %937 = vmatpush1.msra.mxu0 0.0
  %938 = vmatprep.subr.mxu0 0.0
  %939 = vmatpush1.msra.mxu0 0.0
  %940 = vmatprep.subr.mxu0 0.0
  %941 = vmatpush1.msra.mxu0 0.0
  %942 = vmatprep.subr.mxu0 0.0
  %943 = vmatpush1.msra.mxu0 0.0
  %944 = vmatprep.subr.mxu0 0.0
  %945 = vmatpush1.msra.mxu0 0.0
  %946 = vmatprep.subr.mxu0 0.0
  %947 = vmatpush1.msra.mxu0 0.0
  %948 = vmatprep.subr.mxu0 0.0
  %949 = vmatpush1.msra.mxu0 0.0
  %950 = vmatprep.subr.mxu0 0.0
  %951 = vmatpush1.msra.mxu0 0.0
  %952 = vmatprep.subr.mxu0 0.0
  %953 = vmatpush1.msra.mxu0 0.0
  %954 = vmatprep.subr.mxu0 0.0
  %955 = vmatpush1.msra.mxu0 0.0
  %956 = vmatprep.subr.mxu0 0.0
  %957 = vmatpush1.msra.mxu0 0.0
  %958 = vmatprep.subr.mxu0 0.0
  %959 = vmatpush1.msra.mxu0 0.0
  %960 = vmatprep.subr.mxu0 0.0
  %961 = vmatpush1.msra.mxu0 0.0
  %962 = vmatprep.subr.mxu0 0.0
  %963 = vmatpush1.msra.mxu0 0.0
  %964 = vmatprep.subr.mxu0 0.0
  %965 = vmatpush1.msra.mxu0 0.0
  %966 = vmatprep.subr.mxu0 0.0
  %967 = vmatpush1.msra.mxu0 0.0
  %968 = vmatprep.subr.mxu0 0.0
  %969 = vmatpush1.msra.mxu0 0.0
  %970 = vmatprep.subr.mxu0 0.0
  %971 = vmatpush1.msra.mxu0 0.0
  %972 = vmatprep.subr.mxu0 0.0
  %973 = vmatpush1.msra.mxu0 0.0
  %974 = vmatprep.subr.mxu0 0.0
  %975 = vmatpush1.msra.mxu0 0.0
  %976 = vmatprep.subr.mxu0 0.0
  %977 = vmatpush1.msra.mxu0 0.0
  %978 = vmatprep.mubr.f32.mxu0 0.0
  %979 = vmatmul.mubr.f32.gmra.mrb[0].mxu0 %v912
  %v980 = vpop.f32.mrb[0].mxu0
  %v981 = vadd.f32 %v290, %v980
  %v982 = vpop.f32.mrb[0].mxu0
  %983 = vdwg.mxu0
  %v984 = vmax.f32 %v981, 0.0
  %v985 = vmax.f32 %v832, %v984
  %s986 = scalar_lea.vmem %s2, 40
  %v987 = vld [vmem:[%s986] sm:$0xff]
  %v988 = vld [vmem:[#allocation2 + $0x6] sm:$0xff]
  %v990 = vsel %vm32, %v987, 0
  %992 = vmatprep.subr.mxu0 0.0
  %993 = vmatpush1.msra.mxu0 %v213
  %994 = vmatprep.subr.mxu0 0.0
  %995 = vmatpush1.msra.mxu0 0.0
  %996 = vmatprep.subr.mxu0 0.0
  %997 = vmatpush1.msra.mxu0 0.0
  %998 = vmatprep.subr.mxu0 0.0
  %999 = vmatpush1.msra.mxu0 0.0
  %1000 = vmatprep.subr.mxu0 0.0
  %1001 = vmatpush1.msra.mxu0 0.0
  %1002 = vmatprep.subr.mxu0 0.0
  %1003 = vmatpush1.msra.mxu0 0.0
  %1004 = vmatprep.subr.mxu0 0.0
  %1005 = vmatpush1.msra.mxu0 0.0
  %1006 = vmatprep.subr.mxu0 0.0
  %1007 = vmatpush1.msra.mxu0 0.0
  %1008 = vmatprep.subr.mxu0 0.0
  %1009 = vmatpush1.msra.mxu0 0.0
  %1010 = vmatprep.subr.mxu0 0.0
  %1011 = vmatpush1.msra.mxu0 0.0
  %1012 = vmatprep.subr.mxu0 0.0
  %1013 = vmatpush1.msra.mxu0 0.0
  %1014 = vmatprep.subr.mxu0 0.0
  %1015 = vmatpush1.msra.mxu0 0.0
  %1016 = vmatprep.subr.mxu0 0.0
  %1017 = vmatpush1.msra.mxu0 0.0
  %1018 = vmatprep.subr.mxu0 0.0
  %1019 = vmatpush1.msra.mxu0 0.0
  %1020 = vmatprep.subr.mxu0 0.0
  %1021 = vmatpush1.msra.mxu0 0.0
  %1022 = vmatprep.subr.mxu0 0.0
  %1023 = vmatpush1.msra.mxu0 0.0
  %1024 = vmatprep.subr.mxu0 0.0
  %1025 = vmatpush1.msra.mxu0 0.0
  %1026 = vmatprep.subr.mxu0 0.0
  %1027 = vmatpush1.msra.mxu0 0.0
  %1028 = vmatprep.subr.mxu0 0.0
  %1029 = vmatpush1.msra.mxu0 0.0
  %1030 = vmatprep.subr.mxu0 0.0
  %1031 = vmatpush1.msra.mxu0 0.0
  %1032 = vmatprep.subr.mxu0 0.0
  %1033 = vmatpush1.msra.mxu0 0.0
  %1034 = vmatprep.subr.mxu0 0.0
  %1035 = vmatpush1.msra.mxu0 0.0
  %1036 = vmatprep.subr.mxu0 0.0
  %1037 = vmatpush1.msra.mxu0 0.0
  %1038 = vmatprep.subr.mxu0 0.0
  %1039 = vmatpush1.msra.mxu0 0.0
  %1040 = vmatprep.subr.mxu0 0.0
  %1041 = vmatpush1.msra.mxu0 0.0
  %1042 = vmatprep.subr.mxu0 0.0
  %1043 = vmatpush1.msra.mxu0 0.0
  %1044 = vmatprep.subr.mxu0 0.0
  %1045 = vmatpush1.msra.mxu0 0.0
  %1046 = vmatprep.subr.mxu0 0.0
  %1047 = vmatpush1.msra.mxu0 0.0
  %1048 = vmatprep.subr.mxu0 0.0
  %1049 = vmatpush1.msra.mxu0 0.0
  %1050 = vmatprep.subr.mxu0 0.0
  %1051 = vmatpush1.msra.mxu0 0.0
  %1052 = vmatprep.subr.mxu0 0.0
  %1053 = vmatpush1.msra.mxu0 0.0
  %1054 = vmatprep.subr.mxu0 0.0
  %1055 = vmatpush1.msra.mxu0 0.0
  %1056 = vmatprep.mubr.f32.mxu0 0.0
  %1057 = vmatmul.mubr.f32.gmra.mrb[0].mxu0 %v990
  %v1058 = vpop.f32.mrb[0].mxu0
  %v1059 = vadd.f32 0.0, %v1058
  %v1060 = vpop.f32.mrb[0].mxu0
  %1061 = vdwg.mxu0
  %v1062 = vadd.f32 %v988, %v1059
  %v1063 = vmax.f32 %v1062, 0.0
  %v1065 = vsel %vm204, %v1063, 0
  %1067 = vmatprep.subr.mxu0 0.0
  %1068 = vmatpush1.msra.mxu0 %v294
  %1069 = vmatprep.subr.mxu0 0.0
  %1070 = vmatpush1.msra.mxu0 %v296
  %1071 = vmatprep.subr.mxu0 0.0
  %1072 = vmatpush1.msra.mxu0 0.0
  %1073 = vmatprep.subr.mxu0 0.0
  %1074 = vmatpush1.msra.mxu0 0.0
  %1075 = vmatprep.subr.mxu0 0.0
  %1076 = vmatpush1.msra.mxu0 0.0
  %1077 = vmatprep.subr.mxu0 0.0
  %1078 = vmatpush1.msra.mxu0 0.0
  %1079 = vmatprep.subr.mxu0 0.0
  %1080 = vmatpush1.msra.mxu0 0.0
  %1081 = vmatprep.subr.mxu0 0.0
  %1082 = vmatpush1.msra.mxu0 0.0
  %1083 = vmatprep.subr.mxu0 0.0
  %1084 = vmatpush1.msra.mxu0 0.0
  %1085 = vmatprep.subr.mxu0 0.0
  %1086 = vmatpush1.msra.mxu0 0.0
  %1087 = vmatprep.subr.mxu0 0.0
  %1088 = vmatpush1.msra.mxu0 0.0
  %1089 = vmatprep.subr.mxu0 0.0
  %1090 = vmatpush1.msra.mxu0 0.0
  %1091 = vmatprep.subr.mxu0 0.0
  %1092 = vmatpush1.msra.mxu0 0.0
  %1093 = vmatprep.subr.mxu0 0.0
  %1094 = vmatpush1.msra.mxu0 0.0
  %1095 = vmatprep.subr.mxu0 0.0
  %1096 = vmatpush1.msra.mxu0 0.0
  %1097 = vmatprep.subr.mxu0 0.0
  %1098 = vmatpush1.msra.mxu0 0.0
  %1099 = vmatprep.subr.mxu0 0.0
  %1100 = vmatpush1.msra.mxu0 0.0
  %1101 = vmatprep.subr.mxu0 0.0
  %1102 = vmatpush1.msra.mxu0 0.0
  %1103 = vmatprep.subr.mxu0 0.0
  %1104 = vmatpush1.msra.mxu0 0.0
  %1105 = vmatprep.subr.mxu0 0.0
  %1106 = vmatpush1.msra.mxu0 0.0
  %1107 = vmatprep.subr.mxu0 0.0
  %1108 = vmatpush1.msra.mxu0 0.0
  %1109 = vmatprep.subr.mxu0 0.0
  %1110 = vmatpush1.msra.mxu0 0.0
  %1111 = vmatprep.subr.mxu0 0.0
  %1112 = vmatpush1.msra.mxu0 0.0
  %1113 = vmatprep.subr.mxu0 0.0
  %1114 = vmatpush1.msra.mxu0 0.0
  %1115 = vmatprep.subr.mxu0 0.0
  %1116 = vmatpush1.msra.mxu0 0.0
  %1117 = vmatprep.subr.mxu0 0.0
  %1118 = vmatpush1.msra.mxu0 0.0
  %1119 = vmatprep.subr.mxu0 0.0
  %1120 = vmatpush1.msra.mxu0 0.0
  %1121 = vmatprep.subr.mxu0 0.0
  %1122 = vmatpush1.msra.mxu0 0.0
  %1123 = vmatprep.subr.mxu0 0.0
  %1124 = vmatpush1.msra.mxu0 0.0
  %1125 = vmatprep.subr.mxu0 0.0
  %1126 = vmatpush1.msra.mxu0 0.0
  %1127 = vmatprep.subr.mxu0 0.0
  %1128 = vmatpush1.msra.mxu0 0.0
  %1129 = vmatprep.subr.mxu0 0.0
  %1130 = vmatpush1.msra.mxu0 0.0
  %1131 = vmatprep.mubr.f32.mxu0 0.0
  %1132 = vmatmul.mubr.f32.gmra.mrb[0].mxu0 %v1065
  %v1133 = vpop.f32.mrb[0].mxu0
  %v1134 = vadd.f32 %v290, %v1133
  %v1135 = vpop.f32.mrb[0].mxu0
  %1136 = vdwg.mxu0
  %v1137 = vmax.f32 %v1134, 0.0
  %v1138 = vmax.f32 %v985, %v1137
  %s1139 = scalar_lea.vmem %s2, 48
  %v1140 = vld [vmem:[%s1139] sm:$0xff]
  %v1141 = vld [vmem:[#allocation2 + $0x7] sm:$0xff]
  %v1143 = vsel %vm32, %v1140, 0
  %1145 = vmatprep.subr.mxu0 0.0
  %1146 = vmatpush1.msra.mxu0 %v213
  %1147 = vmatprep.subr.mxu0 0.0
  %1148 = vmatpush1.msra.mxu0 0.0
  %1149 = vmatprep.subr.mxu0 0.0
  %1150 = vmatpush1.msra.mxu0 0.0
  %1151 = vmatprep.subr.mxu0 0.0
  %1152 = vmatpush1.msra.mxu0 0.0
  %1153 = vmatprep.subr.mxu0 0.0
  %1154 = vmatpush1.msra.mxu0 0.0
  %1155 = vmatprep.subr.mxu0 0.0
  %1156 = vmatpush1.msra.mxu0 0.0
  %1157 = vmatprep.subr.mxu0 0.0
  %1158 = vmatpush1.msra.mxu0 0.0
  %1159 = vmatprep.subr.mxu0 0.0
  %1160 = vmatpush1.msra.mxu0 0.0
  %1161 = vmatprep.subr.mxu0 0.0
  %1162 = vmatpush1.msra.mxu0 0.0
  %1163 = vmatprep.subr.mxu0 0.0
  %1164 = vmatpush1.msra.mxu0 0.0
  %1165 = vmatprep.subr.mxu0 0.0
  %1166 = vmatpush1.msra.mxu0 0.0
  %1167 = vmatprep.subr.mxu0 0.0
  %1168 = vmatpush1.msra.mxu0 0.0
  %1169 = vmatprep.subr.mxu0 0.0
  %1170 = vmatpush1.msra.mxu0 0.0
  %1171 = vmatprep.subr.mxu0 0.0
  %1172 = vmatpush1.msra.mxu0 0.0
  %1173 = vmatprep.subr.mxu0 0.0
  %1174 = vmatpush1.msra.mxu0 0.0
  %1175 = vmatprep.subr.mxu0 0.0
  %1176 = vmatpush1.msra.mxu0 0.0
  %1177 = vmatprep.subr.mxu0 0.0
  %1178 = vmatpush1.msra.mxu0 0.0
  %1179 = vmatprep.subr.mxu0 0.0
  %1180 = vmatpush1.msra.mxu0 0.0
  %1181 = vmatprep.subr.mxu0 0.0
  %1182 = vmatpush1.msra.mxu0 0.0
  %1183 = vmatprep.subr.mxu0 0.0
  %1184 = vmatpush1.msra.mxu0 0.0
  %1185 = vmatprep.subr.mxu0 0.0
  %1186 = vmatpush1.msra.mxu0 0.0
  %1187 = vmatprep.subr.mxu0 0.0
  %1188 = vmatpush1.msra.mxu0 0.0
  %1189 = vmatprep.subr.mxu0 0.0
  %1190 = vmatpush1.msra.mxu0 0.0
  %1191 = vmatprep.subr.mxu0 0.0
  %1192 = vmatpush1.msra.mxu0 0.0
  %1193 = vmatprep.subr.mxu0 0.0
  %1194 = vmatpush1.msra.mxu0 0.0
  %1195 = vmatprep.subr.mxu0 0.0
  %1196 = vmatpush1.msra.mxu0 0.0
  %1197 = vmatprep.subr.mxu0 0.0
  %1198 = vmatpush1.msra.mxu0 0.0
  %1199 = vmatprep.subr.mxu0 0.0
  %1200 = vmatpush1.msra.mxu0 0.0
  %1201 = vmatprep.subr.mxu0 0.0
  %1202 = vmatpush1.msra.mxu0 0.0
  %1203 = vmatprep.subr.mxu0 0.0
  %1204 = vmatpush1.msra.mxu0 0.0
  %1205 = vmatprep.subr.mxu0 0.0
  %1206 = vmatpush1.msra.mxu0 0.0
  %1207 = vmatprep.subr.mxu0 0.0
  %1208 = vmatpush1.msra.mxu0 0.0
  %1209 = vmatprep.mubr.f32.mxu0 0.0
  %1210 = vmatmul.mubr.f32.gmra.mrb[0].mxu0 %v1143
  %v1211 = vpop.f32.mrb[0].mxu0
  %v1212 = vadd.f32 0.0, %v1211
  %v1213 = vpop.f32.mrb[0].mxu0
  %1214 = vdwg.mxu0
  %v1215 = vadd.f32 %v1141, %v1212
  %v1216 = vmax.f32 %v1215, 0.0
  %v1218 = vsel %vm204, %v1216, 0
  %1220 = vmatprep.subr.mxu0 0.0
  %1221 = vmatpush1.msra.mxu0 %v294
  %1222 = vmatprep.subr.mxu0 0.0
  %1223 = vmatpush1.msra.mxu0 %v296
  %1224 = vmatprep.subr.mxu0 0.0
  %1225 = vmatpush1.msra.mxu0 0.0
  %1226 = vmatprep.subr.mxu0 0.0
  %1227 = vmatpush1.msra.mxu0 0.0
  %1228 = vmatprep.subr.mxu0 0.0
  %1229 = vmatpush1.msra.mxu0 0.0
  %1230 = vmatprep.subr.mxu0 0.0
  %1231 = vmatpush1.msra.mxu0 0.0
  %1232 = vmatprep.subr.mxu0 0.0
  %1233 = vmatpush1.msra.mxu0 0.0
  %1234 = vmatprep.subr.mxu0 0.0
  %1235 = vmatpush1.msra.mxu0 0.0
  %1236 = vmatprep.subr.mxu0 0.0
  %1237 = vmatpush1.msra.mxu0 0.0
  %1238 = vmatprep.subr.mxu0 0.0
  %1239 = vmatpush1.msra.mxu0 0.0
  %1240 = vmatprep.subr.mxu0 0.0
  %1241 = vmatpush1.msra.mxu0 0.0
  %1242 = vmatprep.subr.mxu0 0.0
  %1243 = vmatpush1.msra.mxu0 0.0
  %1244 = vmatprep.subr.mxu0 0.0
  %1245 = vmatpush1.msra.mxu0 0.0
  %1246 = vmatprep.subr.mxu0 0.0
  %1247 = vmatpush1.msra.mxu0 0.0
  %1248 = vmatprep.subr.mxu0 0.0
  %1249 = vmatpush1.msra.mxu0 0.0
  %1250 = vmatprep.subr.mxu0 0.0
  %1251 = vmatpush1.msra.mxu0 0.0
  %1252 = vmatprep.subr.mxu0 0.0
  %1253 = vmatpush1.msra.mxu0 0.0
  %1254 = vmatprep.subr.mxu0 0.0
  %1255 = vmatpush1.msra.mxu0 0.0
  %1256 = vmatprep.subr.mxu0 0.0
  %1257 = vmatpush1.msra.mxu0 0.0
  %1258 = vmatprep.subr.mxu0 0.0
  %1259 = vmatpush1.msra.mxu0 0.0
  %1260 = vmatprep.subr.mxu0 0.0
  %1261 = vmatpush1.msra.mxu0 0.0
  %1262 = vmatprep.subr.mxu0 0.0
  %1263 = vmatpush1.msra.mxu0 0.0
  %1264 = vmatprep.subr.mxu0 0.0
  %1265 = vmatpush1.msra.mxu0 0.0
  %1266 = vmatprep.subr.mxu0 0.0
  %1267 = vmatpush1.msra.mxu0 0.0
  %1268 = vmatprep.subr.mxu0 0.0
  %1269 = vmatpush1.msra.mxu0 0.0
  %1270 = vmatprep.subr.mxu0 0.0
  %1271 = vmatpush1.msra.mxu0 0.0
  %1272 = vmatprep.subr.mxu0 0.0
  %1273 = vmatpush1.msra.mxu0 0.0
  %1274 = vmatprep.subr.mxu0 0.0
  %1275 = vmatpush1.msra.mxu0 0.0
  %1276 = vmatprep.subr.mxu0 0.0
  %1277 = vmatpush1.msra.mxu0 0.0
  %1278 = vmatprep.subr.mxu0 0.0
  %1279 = vmatpush1.msra.mxu0 0.0
  %1280 = vmatprep.subr.mxu0 0.0
  %1281 = vmatpush1.msra.mxu0 0.0
  %1282 = vmatprep.subr.mxu0 0.0
  %1283 = vmatpush1.msra.mxu0 0.0
  %1284 = vmatprep.mubr.f32.mxu0 0.0
  %1285 = vmatmul.mubr.f32.gmra.mrb[0].mxu0 %v1218
  %v1286 = vpop.f32.mrb[0].mxu0
  %v1287 = vadd.f32 %v290, %v1286
  %v1288 = vpop.f32.mrb[0].mxu0
  %1289 = vdwg.mxu0
  %v1290 = vmax.f32 %v1287, 0.0
  %v1291 = vmax.f32 %v1138, %v1290
  %v1292 = vlaneseq
  %v1293 = vshrl.u32 %v1292, 7
  %v1294 = vsub.s32 1, %v1293
  %v1295 = vrot.slane %v20, %v1294
  %v1296 = vmul.f32 %v196, %v1295
  %v1297 = vadd.f32 %v189, %v1296
  %vm1302 = vcmask 1045504
  %v1303 = vrot.slane %v20, 2
  %v1304 = vrot.slane %v21, 2
  %v1305 = vsel %vm1302, %v1303, %v1304
  %v1306 = vrot.slane %v22, 2
  %v1307 = vsel %vm1302, %v1304, %v1306
  %v1308 = vrot.slane %v23, 2
  %v1309 = vsel %vm1302, %v1306, %v1308
  %v1310 = vrot.slane %v24, 2
  %v1311 = vsel %vm1302, %v1308, %v1310
  %vm1316 = vcmask 261120
  %v1318 = vsel %vm1316, %v1291, 0
  %1320 = vmatprep.subr.mxu0 0.0
  %1321 = vmatpush1.msra.mxu0 %v1305
  %1322 = vmatprep.subr.mxu0 0.0
  %1323 = vmatpush1.msra.mxu0 %v1307
  %1324 = vmatprep.subr.mxu0 0.0
  %1325 = vmatpush1.msra.mxu0 %v1309
  %1326 = vmatprep.subr.mxu0 0.0
  %1327 = vmatpush1.msra.mxu0 %v1311
  %1328 = vmatprep.subr.mxu0 0.0
  %1329 = vmatpush1.msra.mxu0 0.0
  %1330 = vmatprep.subr.mxu0 0.0
  %1331 = vmatpush1.msra.mxu0 0.0
  %1332 = vmatprep.subr.mxu0 0.0
  %1333 = vmatpush1.msra.mxu0 0.0
  %1334 = vmatprep.subr.mxu0 0.0
  %1335 = vmatpush1.msra.mxu0 0.0
  %1336 = vmatprep.subr.mxu0 0.0
  %1337 = vmatpush1.msra.mxu0 0.0
  %1338 = vmatprep.subr.mxu0 0.0
  %1339 = vmatpush1.msra.mxu0 0.0
  %1340 = vmatprep.subr.mxu0 0.0
  %1341 = vmatpush1.msra.mxu0 0.0
  %1342 = vmatprep.subr.mxu0 0.0
  %1343 = vmatpush1.msra.mxu0 0.0
  %1344 = vmatprep.subr.mxu0 0.0
  %1345 = vmatpush1.msra.mxu0 0.0
  %1346 = vmatprep.subr.mxu0 0.0
  %1347 = vmatpush1.msra.mxu0 0.0
  %1348 = vmatprep.subr.mxu0 0.0
  %1349 = vmatpush1.msra.mxu0 0.0
  %1350 = vmatprep.subr.mxu0 0.0
  %1351 = vmatpush1.msra.mxu0 0.0
  %1352 = vmatprep.subr.mxu0 0.0
  %1353 = vmatpush1.msra.mxu0 0.0
  %1354 = vmatprep.subr.mxu0 0.0
  %1355 = vmatpush1.msra.mxu0 0.0
  %1356 = vmatprep.subr.mxu0 0.0
  %1357 = vmatpush1.msra.mxu0 0.0
  %1358 = vmatprep.subr.mxu0 0.0
  %1359 = vmatpush1.msra.mxu0 0.0
  %1360 = vmatprep.subr.mxu0 0.0
  %1361 = vmatpush1.msra.mxu0 0.0
  %1362 = vmatprep.subr.mxu0 0.0
  %1363 = vmatpush1.msra.mxu0 0.0
  %1364 = vmatprep.subr.mxu0 0.0
  %1365 = vmatpush1.msra.mxu0 0.0
  %1366 = vmatprep.subr.mxu0 0.0
  %1367 = vmatpush1.msra.mxu0 0.0
  %1368 = vmatprep.subr.mxu0 0.0
  %1369 = vmatpush1.msra.mxu0 0.0
  %1370 = vmatprep.subr.mxu0 0.0
  %1371 = vmatpush1.msra.mxu0 0.0
  %1372 = vmatprep.subr.mxu0 0.0
  %1373 = vmatpush1.msra.mxu0 0.0
  %1374 = vmatprep.subr.mxu0 0.0
  %1375 = vmatpush1.msra.mxu0 0.0
  %1376 = vmatprep.subr.mxu0 0.0
  %1377 = vmatpush1.msra.mxu0 0.0
  %1378 = vmatprep.subr.mxu0 0.0
  %1379 = vmatpush1.msra.mxu0 0.0
  %1380 = vmatprep.subr.mxu0 0.0
  %1381 = vmatpush1.msra.mxu0 0.0
  %1382 = vmatprep.subr.mxu0 0.0
  %1383 = vmatpush1.msra.mxu0 0.0
  %1384 = vmatprep.mubr.f32.mxu0 0.0
  %1385 = vmatmul.mubr.f32.gmra.mrb[0].mxu0 %v1318
  %v1386 = vpop.f32.mrb[0].mxu0
  %v1387 = vadd.f32 0.0, %v1386
  %v1388 = vpop.f32.mrb[0].mxu0
  %1389 = vdwg.mxu0
  %v1390 = vadd.f32 %v1297, %v1387
  %v1391 = vmax.f32 %v1390, 0.0
  %v1392 = vlaneseq
  %v1393 = vshrl.u32 %v1392, 7
  %v1394 = vsub.s32 3, %v1393
  %v1395 = vrot.slane %v26, %v1394
  %vm1398 = vcmask 1044480
  %v1399 = vrot.slane %v24, 3
  %v1400 = vrot.slane %v25, 3
  %v1401 = vsel %vm1398, %v1399, %v1400
  %v1402 = vrot.slane %v26, 3
  %v1403 = vsel %vm1398, %v1400, %v1402
  %v1407 = vsel %vm204, %v1391, 0
  %1409 = vmatprep.subr.mxu0 0.0
  %1410 = vmatpush1.msra.mxu0 %v1401
  %1411 = vmatprep.subr.mxu0 0.0
  %1412 = vmatpush1.msra.mxu0 %v1403
  %1413 = vmatprep.subr.mxu0 0.0
  %1414 = vmatpush1.msra.mxu0 0.0
  %1415 = vmatprep.subr.mxu0 0.0
  %1416 = vmatpush1.msra.mxu0 0.0
  %1417 = vmatprep.subr.mxu0 0.0
  %1418 = vmatpush1.msra.mxu0 0.0
  %1419 = vmatprep.subr.mxu0 0.0
  %1420 = vmatpush1.msra.mxu0 0.0
  %1421 = vmatprep.subr.mxu0 0.0
  %1422 = vmatpush1.msra.mxu0 0.0
  %1423 = vmatprep.subr.mxu0 0.0
  %1424 = vmatpush1.msra.mxu0 0.0
  %1425 = vmatprep.subr.mxu0 0.0
  %1426 = vmatpush1.msra.mxu0 0.0
  %1427 = vmatprep.subr.mxu0 0.0
  %1428 = vmatpush1.msra.mxu0 0.0
  %1429 = vmatprep.subr.mxu0 0.0
  %1430 = vmatpush1.msra.mxu0 0.0
  %1431 = vmatprep.subr.mxu0 0.0
  %1432 = vmatpush1.msra.mxu0 0.0
  %1433 = vmatprep.subr.mxu0 0.0
  %1434 = vmatpush1.msra.mxu0 0.0
  %1435 = vmatprep.subr.mxu0 0.0
  %1436 = vmatpush1.msra.mxu0 0.0
  %1437 = vmatprep.subr.mxu0 0.0
  %1438 = vmatpush1.msra.mxu0 0.0
  %1439 = vmatprep.subr.mxu0 0.0
  %1440 = vmatpush1.msra.mxu0 0.0
  %1441 = vmatprep.subr.mxu0 0.0
  %1442 = vmatpush1.msra.mxu0 0.0
  %1443 = vmatprep.subr.mxu0 0.0
  %1444 = vmatpush1.msra.mxu0 0.0
  %1445 = vmatprep.subr.mxu0 0.0
  %1446 = vmatpush1.msra.mxu0 0.0
  %1447 = vmatprep.subr.mxu0 0.0
  %1448 = vmatpush1.msra.mxu0 0.0
  %1449 = vmatprep.subr.mxu0 0.0
  %1450 = vmatpush1.msra.mxu0 0.0
  %1451 = vmatprep.subr.mxu0 0.0
  %1452 = vmatpush1.msra.mxu0 0.0
  %1453 = vmatprep.subr.mxu0 0.0
  %1454 = vmatpush1.msra.mxu0 0.0
  %1455 = vmatprep.subr.mxu0 0.0
  %1456 = vmatpush1.msra.mxu0 0.0
  %1457 = vmatprep.subr.mxu0 0.0
  %1458 = vmatpush1.msra.mxu0 0.0
  %1459 = vmatprep.subr.mxu0 0.0
  %1460 = vmatpush1.msra.mxu0 0.0
  %1461 = vmatprep.subr.mxu0 0.0
  %1462 = vmatpush1.msra.mxu0 0.0
  %1463 = vmatprep.subr.mxu0 0.0
  %1464 = vmatpush1.msra.mxu0 0.0
  %1465 = vmatprep.subr.mxu0 0.0
  %1466 = vmatpush1.msra.mxu0 0.0
  %1467 = vmatprep.subr.mxu0 0.0
  %1468 = vmatpush1.msra.mxu0 0.0
  %1469 = vmatprep.subr.mxu0 0.0
  %1470 = vmatpush1.msra.mxu0 0.0
  %1471 = vmatprep.subr.mxu0 0.0
  %1472 = vmatpush1.msra.mxu0 0.0
  %1473 = vmatprep.mubr.f32.mxu0 0.0
  %1474 = vmatmul.mubr.f32.gmra.mrb[0].mxu0 %v1407
  %v1475 = vpop.f32.mrb[0].mxu0
  %v1476 = vadd.f32 %v1395, %v1475
  %v1477 = vpop.f32.mrb[0].mxu0
  %1478 = vdwg.mxu0
  %v1479 = vxor.u32 %v1476, 2147483648
  %v1480 = vmul.f32 %v1479, 1.442695
  %v1481 = vpow.pop %v1480
  %v1482 = vadd.f32 %v1481, 1.0
  %v1483 = vrcp.pop %v1482
  %v1484 = vmul.f32 1.0, %v1483
  %1486 = vset.pattern.permute.xlu0 0
  %1487 = vperm.xlu0 %1486, %v1484
  %v1488 = vpop.permute.xlu0 %1487
  %v1490 = vmul.f32 %v1488, %v201
  %v1491 = vadd.f32 %v107, %v1490
  %1492 = vst.msk [vmem:[#allocation2] sm:$0xff] %vm204, %v1491
  %1493 = vst.msk [vmem:[#allocation2 + $0x8] sm:$0xff] %vm204, %v1491
  %v1494 = vld [vmem:[%s2] sm:$0xff]
  %v1495 = vld [vmem:[#allocation2 + $0x1] sm:$0xff]
  %v1497 = vsel %vm32, %v1494, 0
  %1499 = vmatprep.subr.mxu0 0.0
  %1500 = vmatpush1.msra.mxu0 %v213
  %1501 = vmatprep.subr.mxu0 0.0
  %1502 = vmatpush1.msra.mxu0 0.0
  %1503 = vmatprep.subr.mxu0 0.0
  %1504 = vmatpush1.msra.mxu0 0.0
  %1505 = vmatprep.subr.mxu0 0.0
  %1506 = vmatpush1.msra.mxu0 0.0
  %1507 = vmatprep.subr.mxu0 0.0
  %1508 = vmatpush1.msra.mxu0 0.0
  %1509 = vmatprep.subr.mxu0 0.0
  %1510 = vmatpush1.msra.mxu0 0.0
  %1511 = vmatprep.subr.mxu0 0.0
  %1512 = vmatpush1.msra.mxu0 0.0
  %1513 = vmatprep.subr.mxu0 0.0
  %1514 = vmatpush1.msra.mxu0 0.0
  %1515 = vmatprep.subr.mxu0 0.0
  %1516 = vmatpush1.msra.mxu0 0.0
  %1517 = vmatprep.subr.mxu0 0.0
  %1518 = vmatpush1.msra.mxu0 0.0
  %1519 = vmatprep.subr.mxu0 0.0
  %1520 = vmatpush1.msra.mxu0 0.0
  %1521 = vmatprep.subr.mxu0 0.0
  %1522 = vmatpush1.msra.mxu0 0.0
  %1523 = vmatprep.subr.mxu0 0.0
  %1524 = vmatpush1.msra.mxu0 0.0
  %1525 = vmatprep.subr.mxu0 0.0
  %1526 = vmatpush1.msra.mxu0 0.0
  %1527 = vmatprep.subr.mxu0 0.0
  %1528 = vmatpush1.msra.mxu0 0.0
  %1529 = vmatprep.subr.mxu0 0.0
  %1530 = vmatpush1.msra.mxu0 0.0
  %1531 = vmatprep.subr.mxu0 0.0
  %1532 = vmatpush1.msra.mxu0 0.0
  %1533 = vmatprep.subr.mxu0 0.0
  %1534 = vmatpush1.msra.mxu0 0.0
  %1535 = vmatprep.subr.mxu0 0.0
  %1536 = vmatpush1.msra.mxu0 0.0
  %1537 = vmatprep.subr.mxu0 0.0
  %1538 = vmatpush1.msra.mxu0 0.0
  %1539 = vmatprep.subr.mxu0 0.0
  %1540 = vmatpush1.msra.mxu0 0.0
  %1541 = vmatprep.subr.mxu0 0.0
  %1542 = vmatpush1.msra.mxu0 0.0
  %1543 = vmatprep.subr.mxu0 0.0
  %1544 = vmatpush1.msra.mxu0 0.0
  %1545 = vmatprep.subr.mxu0 0.0
  %1546 = vmatpush1.msra.mxu0 0.0
  %1547 = vmatprep.subr.mxu0 0.0
  %1548 = vmatpush1.msra.mxu0 0.0
  %1549 = vmatprep.subr.mxu0 0.0
  %1550 = vmatpush1.msra.mxu0 0.0
  %1551 = vmatprep.subr.mxu0 0.0
  %1552 = vmatpush1.msra.mxu0 0.0
  %1553 = vmatprep.subr.mxu0 0.0
  %1554 = vmatpush1.msra.mxu0 0.0
  %1555 = vmatprep.subr.mxu0 0.0
  %1556 = vmatpush1.msra.mxu0 0.0
  %1557 = vmatprep.subr.mxu0 0.0
  %1558 = vmatpush1.msra.mxu0 0.0
  %1559 = vmatprep.subr.mxu0 0.0
  %1560 = vmatpush1.msra.mxu0 0.0
  %1561 = vmatprep.subr.mxu0 0.0
  %1562 = vmatpush1.msra.mxu0 0.0
  %1563 = vmatprep.mubr.f32.mxu0 0.0
  %1564 = vmatmul.mubr.f32.gmra.mrb[0].mxu0 %v1497
  %v1565 = vpop.f32.mrb[0].mxu0
  %v1566 = vadd.f32 0.0, %v1565
  %v1567 = vpop.f32.mrb[0].mxu0
  %1568 = vdwg.mxu0
  %v1569 = vadd.f32 %v1495, %v1566
  %v1570 = vmax.f32 %v1569, 0.0
  %v1572 = vsel %vm204, %v1570, 0
  %1574 = vmatprep.subr.mxu0 0.0
  %1575 = vmatpush1.msra.mxu0 %v294
  %1576 = vmatprep.subr.mxu0 0.0
  %1577 = vmatpush1.msra.mxu0 %v296
  %1578 = vmatprep.subr.mxu0 0.0
  %1579 = vmatpush1.msra.mxu0 0.0
  %1580 = vmatprep.subr.mxu0 0.0
  %1581 = vmatpush1.msra.mxu0 0.0
  %1582 = vmatprep.subr.mxu0 0.0
  %1583 = vmatpush1.msra.mxu0 0.0
  %1584 = vmatprep.subr.mxu0 0.0
  %1585 = vmatpush1.msra.mxu0 0.0
  %1586 = vmatprep.subr.mxu0 0.0
  %1587 = vmatpush1.msra.mxu0 0.0
  %1588 = vmatprep.subr.mxu0 0.0
  %1589 = vmatpush1.msra.mxu0 0.0
  %1590 = vmatprep.subr.mxu0 0.0
  %1591 = vmatpush1.msra.mxu0 0.0
  %1592 = vmatprep.subr.mxu0 0.0
  %1593 = vmatpush1.msra.mxu0 0.0
  %1594 = vmatprep.subr.mxu0 0.0
  %1595 = vmatpush1.msra.mxu0 0.0
  %1596 = vmatprep.subr.mxu0 0.0
  %1597 = vmatpush1.msra.mxu0 0.0
  %1598 = vmatprep.subr.mxu0 0.0
  %1599 = vmatpush1.msra.mxu0 0.0
  %1600 = vmatprep.subr.mxu0 0.0
  %1601 = vmatpush1.msra.mxu0 0.0
  %1602 = vmatprep.subr.mxu0 0.0
  %1603 = vmatpush1.msra.mxu0 0.0
  %1604 = vmatprep.subr.mxu0 0.0
  %1605 = vmatpush1.msra.mxu0 0.0
  %1606 = vmatprep.subr.mxu0 0.0
  %1607 = vmatpush1.msra.mxu0 0.0
  %1608 = vmatprep.subr.mxu0 0.0
  %1609 = vmatpush1.msra.mxu0 0.0
  %1610 = vmatprep.subr.mxu0 0.0
  %1611 = vmatpush1.msra.mxu0 0.0
  %1612 = vmatprep.subr.mxu0 0.0
  %1613 = vmatpush1.msra.mxu0 0.0
  %1614 = vmatprep.subr.mxu0 0.0
  %1615 = vmatpush1.msra.mxu0 0.0
  %1616 = vmatprep.subr.mxu0 0.0
  %1617 = vmatpush1.msra.mxu0 0.0
  %1618 = vmatprep.subr.mxu0 0.0
  %1619 = vmatpush1.msra.mxu0 0.0
  %1620 = vmatprep.subr.mxu0 0.0
  %1621 = vmatpush1.msra.mxu0 0.0
  %1622 = vmatprep.subr.mxu0 0.0
  %1623 = vmatpush1.msra.mxu0 0.0
  %1624 = vmatprep.subr.mxu0 0.0
  %1625 = vmatpush1.msra.mxu0 0.0
  %1626 = vmatprep.subr.mxu0 0.0
  %1627 = vmatpush1.msra.mxu0 0.0
  %1628 = vmatprep.subr.mxu0 0.0
  %1629 = vmatpush1.msra.mxu0 0.0
  %1630 = vmatprep.subr.mxu0 0.0
  %1631 = vmatpush1.msra.mxu0 0.0
  %1632 = vmatprep.subr.mxu0 0.0
  %1633 = vmatpush1.msra.mxu0 0.0
  %1634 = vmatprep.subr.mxu0 0.0
  %1635 = vmatpush1.msra.mxu0 0.0
  %1636 = vmatprep.subr.mxu0 0.0
  %1637 = vmatpush1.msra.mxu0 0.0
  %1638 = vmatprep.mubr.f32.mxu0 0.0
  %1639 = vmatmul.mubr.f32.gmra.mrb[0].mxu0 %v1572
  %v1640 = vpop.f32.mrb[0].mxu0
  %v1641 = vadd.f32 %v290, %v1640
  %v1642 = vpop.f32.mrb[0].mxu0
  %1643 = vdwg.mxu0
  %v1644 = vmax.f32 %v1641, 0.0
  %v1645 = vmax.f32 %v1644, 0.0
  %v1646 = vld [vmem:[%s374] sm:$0xff]
  %v1647 = vld [vmem:[#allocation2 + $0x2] sm:$0xff]
  %v1649 = vsel %vm32, %v1646, 0
  %1651 = vmatprep.subr.mxu0 0.0
  %1652 = vmatpush1.msra.mxu0 %v213
  %1653 = vmatprep.subr.mxu0 0.0
  %1654 = vmatpush1.msra.mxu0 0.0
  %1655 = vmatprep.subr.mxu0 0.0
  %1656 = vmatpush1.msra.mxu0 0.0
  %1657 = vmatprep.subr.mxu0 0.0
  %1658 = vmatpush1.msra.mxu0 0.0
  %1659 = vmatprep.subr.mxu0 0.0
  %1660 = vmatpush1.msra.mxu0 0.0
  %1661 = vmatprep.subr.mxu0 0.0
  %1662 = vmatpush1.msra.mxu0 0.0
  %1663 = vmatprep.subr.mxu0 0.0
  %1664 = vmatpush1.msra.mxu0 0.0
  %1665 = vmatprep.subr.mxu0 0.0
  %1666 = vmatpush1.msra.mxu0 0.0
  %1667 = vmatprep.subr.mxu0 0.0
  %1668 = vmatpush1.msra.mxu0 0.0
  %1669 = vmatprep.subr.mxu0 0.0
  %1670 = vmatpush1.msra.mxu0 0.0
  %1671 = vmatprep.subr.mxu0 0.0
  %1672 = vmatpush1.msra.mxu0 0.0
  %1673 = vmatprep.subr.mxu0 0.0
  %1674 = vmatpush1.msra.mxu0 0.0
  %1675 = vmatprep.subr.mxu0 0.0
  %1676 = vmatpush1.msra.mxu0 0.0
  %1677 = vmatprep.subr.mxu0 0.0
  %1678 = vmatpush1.msra.mxu0 0.0
  %1679 = vmatprep.subr.mxu0 0.0
  %1680 = vmatpush1.msra.mxu0 0.0
  %1681 = vmatprep.subr.mxu0 0.0
  %1682 = vmatpush1.msra.mxu0 0.0
  %1683 = vmatprep.subr.mxu0 0.0
  %1684 = vmatpush1.msra.mxu0 0.0
  %1685 = vmatprep.subr.mxu0 0.0
  %1686 = vmatpush1.msra.mxu0 0.0
  %1687 = vmatprep.subr.mxu0 0.0
  %1688 = vmatpush1.msra.mxu0 0.0
  %1689 = vmatprep.subr.mxu0 0.0
  %1690 = vmatpush1.msra.mxu0 0.0
  %1691 = vmatprep.subr.mxu0 0.0
  %1692 = vmatpush1.msra.mxu0 0.0
  %1693 = vmatprep.subr.mxu0 0.0
  %1694 = vmatpush1.msra.mxu0 0.0
  %1695 = vmatprep.subr.mxu0 0.0
  %1696 = vmatpush1.msra.mxu0 0.0
  %1697 = vmatprep.subr.mxu0 0.0
  %1698 = vmatpush1.msra.mxu0 0.0
  %1699 = vmatprep.subr.mxu0 0.0
  %1700 = vmatpush1.msra.mxu0 0.0
  %1701 = vmatprep.subr.mxu0 0.0
  %1702 = vmatpush1.msra.mxu0 0.0
  %1703 = vmatprep.subr.mxu0 0.0
  %1704 = vmatpush1.msra.mxu0 0.0
  %1705 = vmatprep.subr.mxu0 0.0
  %1706 = vmatpush1.msra.mxu0 0.0
  %1707 = vmatprep.subr.mxu0 0.0
  %1708 = vmatpush1.msra.mxu0 0.0
  %1709 = vmatprep.subr.mxu0 0.0
  %1710 = vmatpush1.msra.mxu0 0.0
  %1711 = vmatprep.subr.mxu0 0.0
  %1712 = vmatpush1.msra.mxu0 0.0
  %1713 = vmatprep.subr.mxu0 0.0
  %1714 = vmatpush1.msra.mxu0 0.0
  %1715 = vmatprep.mubr.f32.mxu0 0.0
  %1716 = vmatmul.mubr.f32.gmra.mrb[0].mxu0 %v1649
  %v1717 = vpop.f32.mrb[0].mxu0
  %v1718 = vadd.f32 0.0, %v1717
  %v1719 = vpop.f32.mrb[0].mxu0
  %1720 = vdwg.mxu0
  %v1721 = vadd.f32 %v1647, %v1718
  %v1722 = vmax.f32 %v1721, 0.0
  %v1724 = vsel %vm204, %v1722, 0
  %1726 = vmatprep.subr.mxu0 0.0
  %1727 = vmatpush1.msra.mxu0 %v294
  %1728 = vmatprep.subr.mxu0 0.0
  %1729 = vmatpush1.msra.mxu0 %v296
  %1730 = vmatprep.subr.mxu0 0.0
  %1731 = vmatpush1.msra.mxu0 0.0
  %1732 = vmatprep.subr.mxu0 0.0
  %1733 = vmatpush1.msra.mxu0 0.0
  %1734 = vmatprep.subr.mxu0 0.0
  %1735 = vmatpush1.msra.mxu0 0.0
  %1736 = vmatprep.subr.mxu0 0.0
  %1737 = vmatpush1.msra.mxu0 0.0
  %1738 = vmatprep.subr.mxu0 0.0
  %1739 = vmatpush1.msra.mxu0 0.0
  %1740 = vmatprep.subr.mxu0 0.0
  %1741 = vmatpush1.msra.mxu0 0.0
  %1742 = vmatprep.subr.mxu0 0.0
  %1743 = vmatpush1.msra.mxu0 0.0
  %1744 = vmatprep.subr.mxu0 0.0
  %1745 = vmatpush1.msra.mxu0 0.0
  %1746 = vmatprep.subr.mxu0 0.0
  %1747 = vmatpush1.msra.mxu0 0.0
  %1748 = vmatprep.subr.mxu0 0.0
  %1749 = vmatpush1.msra.mxu0 0.0
  %1750 = vmatprep.subr.mxu0 0.0
  %1751 = vmatpush1.msra.mxu0 0.0
  %1752 = vmatprep.subr.mxu0 0.0
  %1753 = vmatpush1.msra.mxu0 0.0
  %1754 = vmatprep.subr.mxu0 0.0
  %1755 = vmatpush1.msra.mxu0 0.0
  %1756 = vmatprep.subr.mxu0 0.0
  %1757 = vmatpush1.msra.mxu0 0.0
  %1758 = vmatprep.subr.mxu0 0.0
  %1759 = vmatpush1.msra.mxu0 0.0
  %1760 = vmatprep.subr.mxu0 0.0
  %1761 = vmatpush1.msra.mxu0 0.0
  %1762 = vmatprep.subr.mxu0 0.0
  %1763 = vmatpush1.msra.mxu0 0.0
  %1764 = vmatprep.subr.mxu0 0.0
  %1765 = vmatpush1.msra.mxu0 0.0
  %1766 = vmatprep.subr.mxu0 0.0
  %1767 = vmatpush1.msra.mxu0 0.0
  %1768 = vmatprep.subr.mxu0 0.0
  %1769 = vmatpush1.msra.mxu0 0.0
  %1770 = vmatprep.subr.mxu0 0.0
  %1771 = vmatpush1.msra.mxu0 0.0
  %1772 = vmatprep.subr.mxu0 0.0
  %1773 = vmatpush1.msra.mxu0 0.0
  %1774 = vmatprep.subr.mxu0 0.0
  %1775 = vmatpush1.msra.mxu0 0.0
  %1776 = vmatprep.subr.mxu0 0.0
  %1777 = vmatpush1.msra.mxu0 0.0
  %1778 = vmatprep.subr.mxu0 0.0
  %1779 = vmatpush1.msra.mxu0 0.0
  %1780 = vmatprep.subr.mxu0 0.0
  %1781 = vmatpush1.msra.mxu0 0.0
  %1782 = vmatprep.subr.mxu0 0.0
  %1783 = vmatpush1.msra.mxu0 0.0
  %1784 = vmatprep.subr.mxu0 0.0
  %1785 = vmatpush1.msra.mxu0 0.0
  %1786 = vmatprep.subr.mxu0 0.0
  %1787 = vmatpush1.msra.mxu0 0.0
  %1788 = vmatprep.subr.mxu0 0.0
  %1789 = vmatpush1.msra.mxu0 0.0
  %1790 = vmatprep.mubr.f32.mxu0 0.0
  %1791 = vmatmul.mubr.f32.gmra.mrb[0].mxu0 %v1724
  %v1792 = vpop.f32.mrb[0].mxu0
  %v1793 = vadd.f32 %v290, %v1792
  %v1794 = vpop.f32.mrb[0].mxu0
  %1795 = vdwg.mxu0
  %v1796 = vmax.f32 %v1793, 0.0
  %v1797 = vmax.f32 %v1645, %v1796
  %v1798 = vld [vmem:[%s527] sm:$0xff]
  %v1799 = vld [vmem:[#allocation2 + $0x3] sm:$0xff]
  %v1801 = vsel %vm32, %v1798, 0
  %1803 = vmatprep.subr.mxu0 0.0
  %1804 = vmatpush1.msra.mxu0 %v213
  %1805 = vmatprep.subr.mxu0 0.0
  %1806 = vmatpush1.msra.mxu0 0.0
  %1807 = vmatprep.subr.mxu0 0.0
  %1808 = vmatpush1.msra.mxu0 0.0
  %1809 = vmatprep.subr.mxu0 0.0
  %1810 = vmatpush1.msra.mxu0 0.0
  %1811 = vmatprep.subr.mxu0 0.0
  %1812 = vmatpush1.msra.mxu0 0.0
  %1813 = vmatprep.subr.mxu0 0.0
  %1814 = vmatpush1.msra.mxu0 0.0
  %1815 = vmatprep.subr.mxu0 0.0
  %1816 = vmatpush1.msra.mxu0 0.0
  %1817 = vmatprep.subr.mxu0 0.0
  %1818 = vmatpush1.msra.mxu0 0.0
  %1819 = vmatprep.subr.mxu0 0.0
  %1820 = vmatpush1.msra.mxu0 0.0
  %1821 = vmatprep.subr.mxu0 0.0
  %1822 = vmatpush1.msra.mxu0 0.0
  %1823 = vmatprep.subr.mxu0 0.0
  %1824 = vmatpush1.msra.mxu0 0.0
  %1825 = vmatprep.subr.mxu0 0.0
  %1826 = vmatpush1.msra.mxu0 0.0
  %1827 = vmatprep.subr.mxu0 0.0
  %1828 = vmatpush1.msra.mxu0 0.0
  %1829 = vmatprep.subr.mxu0 0.0
  %1830 = vmatpush1.msra.mxu0 0.0
  %1831 = vmatprep.subr.mxu0 0.0
  %1832 = vmatpush1.msra.mxu0 0.0
  %1833 = vmatprep.subr.mxu0 0.0
  %1834 = vmatpush1.msra.mxu0 0.0
  %1835 = vmatprep.subr.mxu0 0.0
  %1836 = vmatpush1.msra.mxu0 0.0
  %1837 = vmatprep.subr.mxu0 0.0
  %1838 = vmatpush1.msra.mxu0 0.0
  %1839 = vmatprep.subr.mxu0 0.0
  %1840 = vmatpush1.msra.mxu0 0.0
  %1841 = vmatprep.subr.mxu0 0.0
  %1842 = vmatpush1.msra.mxu0 0.0
  %1843 = vmatprep.subr.mxu0 0.0
  %1844 = vmatpush1.msra.mxu0 0.0
  %1845 = vmatprep.subr.mxu0 0.0
  %1846 = vmatpush1.msra.mxu0 0.0
  %1847 = vmatprep.subr.mxu0 0.0
  %1848 = vmatpush1.msra.mxu0 0.0
  %1849 = vmatprep.subr.mxu0 0.0
  %1850 = vmatpush1.msra.mxu0 0.0
  %1851 = vmatprep.subr.mxu0 0.0
  %1852 = vmatpush1.msra.mxu0 0.0
  %1853 = vmatprep.subr.mxu0 0.0
  %1854 = vmatpush1.msra.mxu0 0.0
  %1855 = vmatprep.subr.mxu0 0.0
  %1856 = vmatpush1.msra.mxu0 0.0
  %1857 = vmatprep.subr.mxu0 0.0
  %1858 = vmatpush1.msra.mxu0 0.0
  %1859 = vmatprep.subr.mxu0 0.0
  %1860 = vmatpush1.msra.mxu0 0.0
  %1861 = vmatprep.subr.mxu0 0.0
  %1862 = vmatpush1.msra.mxu0 0.0
  %1863 = vmatprep.subr.mxu0 0.0
  %1864 = vmatpush1.msra.mxu0 0.0
  %1865 = vmatprep.subr.mxu0 0.0
  %1866 = vmatpush1.msra.mxu0 0.0
  %1867 = vmatprep.mubr.f32.mxu0 0.0
  %1868 = vmatmul.mubr.f32.gmra.mrb[0].mxu0 %v1801
  %v1869 = vpop.f32.mrb[0].mxu0
  %v1870 = vadd.f32 0.0, %v1869
  %v1871 = vpop.f32.mrb[0].mxu0
  %1872 = vdwg.mxu0
  %v1873 = vadd.f32 %v1799, %v1870
  %v1874 = vmax.f32 %v1873, 0.0
  %v1876 = vsel %vm204, %v1874, 0
  %1878 = vmatprep.subr.mxu0 0.0
  %1879 = vmatpush1.msra.mxu0 %v294
  %1880 = vmatprep.subr.mxu0 0.0
  %1881 = vmatpush1.msra.mxu0 %v296
  %1882 = vmatprep.subr.mxu0 0.0
  %1883 = vmatpush1.msra.mxu0 0.0
  %1884 = vmatprep.subr.mxu0 0.0
  %1885 = vmatpush1.msra.mxu0 0.0
  %1886 = vmatprep.subr.mxu0 0.0
  %1887 = vmatpush1.msra.mxu0 0.0
  %1888 = vmatprep.subr.mxu0 0.0
  %1889 = vmatpush1.msra.mxu0 0.0
  %1890 = vmatprep.subr.mxu0 0.0
  %1891 = vmatpush1.msra.mxu0 0.0
  %1892 = vmatprep.subr.mxu0 0.0
  %1893 = vmatpush1.msra.mxu0 0.0
  %1894 = vmatprep.subr.mxu0 0.0
  %1895 = vmatpush1.msra.mxu0 0.0
  %1896 = vmatprep.subr.mxu0 0.0
  %1897 = vmatpush1.msra.mxu0 0.0
  %1898 = vmatprep.subr.mxu0 0.0
  %1899 = vmatpush1.msra.mxu0 0.0
  %1900 = vmatprep.subr.mxu0 0.0
  %1901 = vmatpush1.msra.mxu0 0.0
  %1902 = vmatprep.subr.mxu0 0.0
  %1903 = vmatpush1.msra.mxu0 0.0
  %1904 = vmatprep.subr.mxu0 0.0
  %1905 = vmatpush1.msra.mxu0 0.0
  %1906 = vmatprep.subr.mxu0 0.0
  %1907 = vmatpush1.msra.mxu0 0.0
  %1908 = vmatprep.subr.mxu0 0.0
  %1909 = vmatpush1.msra.mxu0 0.0
  %1910 = vmatprep.subr.mxu0 0.0
  %1911 = vmatpush1.msra.mxu0 0.0
  %1912 = vmatprep.subr.mxu0 0.0
  %1913 = vmatpush1.msra.mxu0 0.0
  %1914 = vmatprep.subr.mxu0 0.0
  %1915 = vmatpush1.msra.mxu0 0.0
  %1916 = vmatprep.subr.mxu0 0.0
  %1917 = vmatpush1.msra.mxu0 0.0
  %1918 = vmatprep.subr.mxu0 0.0
  %1919 = vmatpush1.msra.mxu0 0.0
  %1920 = vmatprep.subr.mxu0 0.0
  %1921 = vmatpush1.msra.mxu0 0.0
  %1922 = vmatprep.subr.mxu0 0.0
  %1923 = vmatpush1.msra.mxu0 0.0
  %1924 = vmatprep.subr.mxu0 0.0
  %1925 = vmatpush1.msra.mxu0 0.0
  %1926 = vmatprep.subr.mxu0 0.0
  %1927 = vmatpush1.msra.mxu0 0.0
  %1928 = vmatprep.subr.mxu0 0.0
  %1929 = vmatpush1.msra.mxu0 0.0
  %1930 = vmatprep.subr.mxu0 0.0
  %1931 = vmatpush1.msra.mxu0 0.0
  %1932 = vmatprep.subr.mxu0 0.0
  %1933 = vmatpush1.msra.mxu0 0.0
  %1934 = vmatprep.subr.mxu0 0.0
  %1935 = vmatpush1.msra.mxu0 0.0
  %1936 = vmatprep.subr.mxu0 0.0
  %1937 = vmatpush1.msra.mxu0 0.0
  %1938 = vmatprep.subr.mxu0 0.0
  %1939 = vmatpush1.msra.mxu0 0.0
  %1940 = vmatprep.subr.mxu0 0.0
  %1941 = vmatpush1.msra.mxu0 0.0
  %1942 = vmatprep.mubr.f32.mxu0 0.0
  %1943 = vmatmul.mubr.f32.gmra.mrb[0].mxu0 %v1876
  %v1944 = vpop.f32.mrb[0].mxu0
  %v1945 = vadd.f32 %v290, %v1944
  %v1946 = vpop.f32.mrb[0].mxu0
  %1947 = vdwg.mxu0
  %v1948 = vmax.f32 %v1945, 0.0
  %v1949 = vmax.f32 %v1797, %v1948
  %v1950 = vld [vmem:[%s680] sm:$0xff]
  %v1951 = vld [vmem:[#allocation2 + $0x4] sm:$0xff]
  %v1953 = vsel %vm32, %v1950, 0
  %1955 = vmatprep.subr.mxu0 0.0
  %1956 = vmatpush1.msra.mxu0 %v213
  %1957 = vmatprep.subr.mxu0 0.0
  %1958 = vmatpush1.msra.mxu0 0.0
  %1959 = vmatprep.subr.mxu0 0.0
  %1960 = vmatpush1.msra.mxu0 0.0
  %1961 = vmatprep.subr.mxu0 0.0
  %1962 = vmatpush1.msra.mxu0 0.0
  %1963 = vmatprep.subr.mxu0 0.0
  %1964 = vmatpush1.msra.mxu0 0.0
  %1965 = vmatprep.subr.mxu0 0.0
  %1966 = vmatpush1.msra.mxu0 0.0
  %1967 = vmatprep.subr.mxu0 0.0
  %1968 = vmatpush1.msra.mxu0 0.0
  %1969 = vmatprep.subr.mxu0 0.0
  %1970 = vmatpush1.msra.mxu0 0.0
  %1971 = vmatprep.subr.mxu0 0.0
  %1972 = vmatpush1.msra.mxu0 0.0
  %1973 = vmatprep.subr.mxu0 0.0
  %1974 = vmatpush1.msra.mxu0 0.0
  %1975 = vmatprep.subr.mxu0 0.0
  %1976 = vmatpush1.msra.mxu0 0.0
  %1977 = vmatprep.subr.mxu0 0.0
  %1978 = vmatpush1.msra.mxu0 0.0
  %1979 = vmatprep.subr.mxu0 0.0
  %1980 = vmatpush1.msra.mxu0 0.0
  %1981 = vmatprep.subr.mxu0 0.0
  %1982 = vmatpush1.msra.mxu0 0.0
  %1983 = vmatprep.subr.mxu0 0.0
  %1984 = vmatpush1.msra.mxu0 0.0
  %1985 = vmatprep.subr.mxu0 0.0
  %1986 = vmatpush1.msra.mxu0 0.0
  %1987 = vmatprep.subr.mxu0 0.0
  %1988 = vmatpush1.msra.mxu0 0.0
  %1989 = vmatprep.subr.mxu0 0.0
  %1990 = vmatpush1.msra.mxu0 0.0
  %1991 = vmatprep.subr.mxu0 0.0
  %1992 = vmatpush1.msra.mxu0 0.0
  %1993 = vmatprep.subr.mxu0 0.0
  %1994 = vmatpush1.msra.mxu0 0.0
  %1995 = vmatprep.subr.mxu0 0.0
  %1996 = vmatpush1.msra.mxu0 0.0
  %1997 = vmatprep.subr.mxu0 0.0
  %1998 = vmatpush1.msra.mxu0 0.0
  %1999 = vmatprep.subr.mxu0 0.0
  %2000 = vmatpush1.msra.mxu0 0.0
  %2001 = vmatprep.subr.mxu0 0.0
  %2002 = vmatpush1.msra.mxu0 0.0
  %2003 = vmatprep.subr.mxu0 0.0
  %2004 = vmatpush1.msra.mxu0 0.0
  %2005 = vmatprep.subr.mxu0 0.0
  %2006 = vmatpush1.msra.mxu0 0.0
  %2007 = vmatprep.subr.mxu0 0.0
  %2008 = vmatpush1.msra.mxu0 0.0
  %2009 = vmatprep.subr.mxu0 0.0
  %2010 = vmatpush1.msra.mxu0 0.0
  %2011 = vmatprep.subr.mxu0 0.0
  %2012 = vmatpush1.msra.mxu0 0.0
  %2013 = vmatprep.subr.mxu0 0.0
  %2014 = vmatpush1.msra.mxu0 0.0
  %2015 = vmatprep.subr.mxu0 0.0
  %2016 = vmatpush1.msra.mxu0 0.0
  %2017 = vmatprep.subr.mxu0 0.0
  %2018 = vmatpush1.msra.mxu0 0.0
  %2019 = vmatprep.mubr.f32.mxu0 0.0
  %2020 = vmatmul.mubr.f32.gmra.mrb[0].mxu0 %v1953
  %v2021 = vpop.f32.mrb[0].mxu0
  %v2022 = vadd.f32 0.0, %v2021
  %v2023 = vpop.f32.mrb[0].mxu0
  %2024 = vdwg.mxu0
  %v2025 = vadd.f32 %v1951, %v2022
  %v2026 = vmax.f32 %v2025, 0.0
  %v2028 = vsel %vm204, %v2026, 0
  %2030 = vmatprep.subr.mxu0 0.0
  %2031 = vmatpush1.msra.mxu0 %v294
  %2032 = vmatprep.subr.mxu0 0.0
  %2033 = vmatpush1.msra.mxu0 %v296
  %2034 = vmatprep.subr.mxu0 0.0
  %2035 = vmatpush1.msra.mxu0 0.0
  %2036 = vmatprep.subr.mxu0 0.0
  %2037 = vmatpush1.msra.mxu0 0.0
  %2038 = vmatprep.subr.mxu0 0.0
  %2039 = vmatpush1.msra.mxu0 0.0
  %2040 = vmatprep.subr.mxu0 0.0
  %2041 = vmatpush1.msra.mxu0 0.0
  %2042 = vmatprep.subr.mxu0 0.0
  %2043 = vmatpush1.msra.mxu0 0.0
  %2044 = vmatprep.subr.mxu0 0.0
  %2045 = vmatpush1.msra.mxu0 0.0
  %2046 = vmatprep.subr.mxu0 0.0
  %2047 = vmatpush1.msra.mxu0 0.0
  %2048 = vmatprep.subr.mxu0 0.0
  %2049 = vmatpush1.msra.mxu0 0.0
  %2050 = vmatprep.subr.mxu0 0.0
  %2051 = vmatpush1.msra.mxu0 0.0
  %2052 = vmatprep.subr.mxu0 0.0
  %2053 = vmatpush1.msra.mxu0 0.0
  %2054 = vmatprep.subr.mxu0 0.0
  %2055 = vmatpush1.msra.mxu0 0.0
  %2056 = vmatprep.subr.mxu0 0.0
  %2057 = vmatpush1.msra.mxu0 0.0
  %2058 = vmatprep.subr.mxu0 0.0
  %2059 = vmatpush1.msra.mxu0 0.0
  %2060 = vmatprep.subr.mxu0 0.0
  %2061 = vmatpush1.msra.mxu0 0.0
  %2062 = vmatprep.subr.mxu0 0.0
  %2063 = vmatpush1.msra.mxu0 0.0
  %2064 = vmatprep.subr.mxu0 0.0
  %2065 = vmatpush1.msra.mxu0 0.0
  %2066 = vmatprep.subr.mxu0 0.0
  %2067 = vmatpush1.msra.mxu0 0.0
  %2068 = vmatprep.subr.mxu0 0.0
  %2069 = vmatpush1.msra.mxu0 0.0
  %2070 = vmatprep.subr.mxu0 0.0
  %2071 = vmatpush1.msra.mxu0 0.0
  %2072 = vmatprep.subr.mxu0 0.0
  %2073 = vmatpush1.msra.mxu0 0.0
  %2074 = vmatprep.subr.mxu0 0.0
  %2075 = vmatpush1.msra.mxu0 0.0
  %2076 = vmatprep.subr.mxu0 0.0
  %2077 = vmatpush1.msra.mxu0 0.0
  %2078 = vmatprep.subr.mxu0 0.0
  %2079 = vmatpush1.msra.mxu0 0.0
  %2080 = vmatprep.subr.mxu0 0.0
  %2081 = vmatpush1.msra.mxu0 0.0
  %2082 = vmatprep.subr.mxu0 0.0
  %2083 = vmatpush1.msra.mxu0 0.0
  %2084 = vmatprep.subr.mxu0 0.0
  %2085 = vmatpush1.msra.mxu0 0.0
  %2086 = vmatprep.subr.mxu0 0.0
  %2087 = vmatpush1.msra.mxu0 0.0
  %2088 = vmatprep.subr.mxu0 0.0
  %2089 = vmatpush1.msra.mxu0 0.0
  %2090 = vmatprep.subr.mxu0 0.0
  %2091 = vmatpush1.msra.mxu0 0.0
  %2092 = vmatprep.subr.mxu0 0.0
  %2093 = vmatpush1.msra.mxu0 0.0
  %2094 = vmatprep.mubr.f32.mxu0 0.0
  %2095 = vmatmul.mubr.f32.gmra.mrb[0].mxu0 %v2028
  %v2096 = vpop.f32.mrb[0].mxu0
  %v2097 = vadd.f32 %v290, %v2096
  %v2098 = vpop.f32.mrb[0].mxu0
  %2099 = vdwg.mxu0
  %v2100 = vmax.f32 %v2097, 0.0
  %v2101 = vmax.f32 %v1949, %v2100
  %v2102 = vld [vmem:[%s833] sm:$0xff]
  %v2103 = vld [vmem:[#allocation2 + $0x5] sm:$0xff]
  %v2105 = vsel %vm32, %v2102, 0
  %2107 = vmatprep.subr.mxu0 0.0
  %2108 = vmatpush1.msra.mxu0 %v213
  %2109 = vmatprep.subr.mxu0 0.0
  %2110 = vmatpush1.msra.mxu0 0.0
  %2111 = vmatprep.subr.mxu0 0.0
  %2112 = vmatpush1.msra.mxu0 0.0
  %2113 = vmatprep.subr.mxu0 0.0
  %2114 = vmatpush1.msra.mxu0 0.0
  %2115 = vmatprep.subr.mxu0 0.0
  %2116 = vmatpush1.msra.mxu0 0.0
  %2117 = vmatprep.subr.mxu0 0.0
  %2118 = vmatpush1.msra.mxu0 0.0
  %2119 = vmatprep.subr.mxu0 0.0
  %2120 = vmatpush1.msra.mxu0 0.0
  %2121 = vmatprep.subr.mxu0 0.0
  %2122 = vmatpush1.msra.mxu0 0.0
  %2123 = vmatprep.subr.mxu0 0.0
  %2124 = vmatpush1.msra.mxu0 0.0
  %2125 = vmatprep.subr.mxu0 0.0
  %2126 = vmatpush1.msra.mxu0 0.0
  %2127 = vmatprep.subr.mxu0 0.0
  %2128 = vmatpush1.msra.mxu0 0.0
  %2129 = vmatprep.subr.mxu0 0.0
  %2130 = vmatpush1.msra.mxu0 0.0
  %2131 = vmatprep.subr.mxu0 0.0
  %2132 = vmatpush1.msra.mxu0 0.0
  %2133 = vmatprep.subr.mxu0 0.0
  %2134 = vmatpush1.msra.mxu0 0.0
  %2135 = vmatprep.subr.mxu0 0.0
  %2136 = vmatpush1.msra.mxu0 0.0
  %2137 = vmatprep.subr.mxu0 0.0
  %2138 = vmatpush1.msra.mxu0 0.0
  %2139 = vmatprep.subr.mxu0 0.0
  %2140 = vmatpush1.msra.mxu0 0.0
  %2141 = vmatprep.subr.mxu0 0.0
  %2142 = vmatpush1.msra.mxu0 0.0
  %2143 = vmatprep.subr.mxu0 0.0
  %2144 = vmatpush1.msra.mxu0 0.0
  %2145 = vmatprep.subr.mxu0 0.0
  %2146 = vmatpush1.msra.mxu0 0.0
  %2147 = vmatprep.subr.mxu0 0.0
  %2148 = vmatpush1.msra.mxu0 0.0
  %2149 = vmatprep.subr.mxu0 0.0
  %2150 = vmatpush1.msra.mxu0 0.0
  %2151 = vmatprep.subr.mxu0 0.0
  %2152 = vmatpush1.msra.mxu0 0.0
  %2153 = vmatprep.subr.mxu0 0.0
  %2154 = vmatpush1.msra.mxu0 0.0
  %2155 = vmatprep.subr.mxu0 0.0
  %2156 = vmatpush1.msra.mxu0 0.0
  %2157 = vmatprep.subr.mxu0 0.0
  %2158 = vmatpush1.msra.mxu0 0.0
  %2159 = vmatprep.subr.mxu0 0.0
  %2160 = vmatpush1.msra.mxu0 0.0
  %2161 = vmatprep.subr.mxu0 0.0
  %2162 = vmatpush1.msra.mxu0 0.0
  %2163 = vmatprep.subr.mxu0 0.0
  %2164 = vmatpush1.msra.mxu0 0.0
  %2165 = vmatprep.subr.mxu0 0.0
  %2166 = vmatpush1.msra.mxu0 0.0
  %2167 = vmatprep.subr.mxu0 0.0
  %2168 = vmatpush1.msra.mxu0 0.0
  %2169 = vmatprep.subr.mxu0 0.0
  %2170 = vmatpush1.msra.mxu0 0.0
  %2171 = vmatprep.mubr.f32.mxu0 0.0
  %2172 = vmatmul.mubr.f32.gmra.mrb[0].mxu0 %v2105
  %v2173 = vpop.f32.mrb[0].mxu0
  %v2174 = vadd.f32 0.0, %v2173
  %v2175 = vpop.f32.mrb[0].mxu0
  %2176 = vdwg.mxu0
  %v2177 = vadd.f32 %v2103, %v2174
  %v2178 = vmax.f32 %v2177, 0.0
  %v2180 = vsel %vm204, %v2178, 0
  %2182 = vmatprep.subr.mxu0 0.0
  %2183 = vmatpush1.msra.mxu0 %v294
  %2184 = vmatprep.subr.mxu0 0.0
  %2185 = vmatpush1.msra.mxu0 %v296
  %2186 = vmatprep.subr.mxu0 0.0
  %2187 = vmatpush1.msra.mxu0 0.0
  %2188 = vmatprep.subr.mxu0 0.0
  %2189 = vmatpush1.msra.mxu0 0.0
  %2190 = vmatprep.subr.mxu0 0.0
  %2191 = vmatpush1.msra.mxu0 0.0
  %2192 = vmatprep.subr.mxu0 0.0
  %2193 = vmatpush1.msra.mxu0 0.0
  %2194 = vmatprep.subr.mxu0 0.0
  %2195 = vmatpush1.msra.mxu0 0.0
  %2196 = vmatprep.subr.mxu0 0.0
  %2197 = vmatpush1.msra.mxu0 0.0
  %2198 = vmatprep.subr.mxu0 0.0
  %2199 = vmatpush1.msra.mxu0 0.0
  %2200 = vmatprep.subr.mxu0 0.0
  %2201 = vmatpush1.msra.mxu0 0.0
  %2202 = vmatprep.subr.mxu0 0.0
  %2203 = vmatpush1.msra.mxu0 0.0
  %2204 = vmatprep.subr.mxu0 0.0
  %2205 = vmatpush1.msra.mxu0 0.0
  %2206 = vmatprep.subr.mxu0 0.0
  %2207 = vmatpush1.msra.mxu0 0.0
  %2208 = vmatprep.subr.mxu0 0.0
  %2209 = vmatpush1.msra.mxu0 0.0
  %2210 = vmatprep.subr.mxu0 0.0
  %2211 = vmatpush1.msra.mxu0 0.0
  %2212 = vmatprep.subr.mxu0 0.0
  %2213 = vmatpush1.msra.mxu0 0.0
  %2214 = vmatprep.subr.mxu0 0.0
  %2215 = vmatpush1.msra.mxu0 0.0
  %2216 = vmatprep.subr.mxu0 0.0
  %2217 = vmatpush1.msra.mxu0 0.0
  %2218 = vmatprep.subr.mxu0 0.0
  %2219 = vmatpush1.msra.mxu0 0.0
  %2220 = vmatprep.subr.mxu0 0.0
  %2221 = vmatpush1.msra.mxu0 0.0
  %2222 = vmatprep.subr.mxu0 0.0
  %2223 = vmatpush1.msra.mxu0 0.0
  %2224 = vmatprep.subr.mxu0 0.0
  %2225 = vmatpush1.msra.mxu0 0.0
  %2226 = vmatprep.subr.mxu0 0.0
  %2227 = vmatpush1.msra.mxu0 0.0
  %2228 = vmatprep.subr.mxu0 0.0
  %2229 = vmatpush1.msra.mxu0 0.0
  %2230 = vmatprep.subr.mxu0 0.0
  %2231 = vmatpush1.msra.mxu0 0.0
  %2232 = vmatprep.subr.mxu0 0.0
  %2233 = vmatpush1.msra.mxu0 0.0
  %2234 = vmatprep.subr.mxu0 0.0
  %2235 = vmatpush1.msra.mxu0 0.0
  %2236 = vmatprep.subr.mxu0 0.0
  %2237 = vmatpush1.msra.mxu0 0.0
  %2238 = vmatprep.subr.mxu0 0.0
  %2239 = vmatpush1.msra.mxu0 0.0
  %2240 = vmatprep.subr.mxu0 0.0
  %2241 = vmatpush1.msra.mxu0 0.0
  %2242 = vmatprep.subr.mxu0 0.0
  %2243 = vmatpush1.msra.mxu0 0.0
  %2244 = vmatprep.subr.mxu0 0.0
  %2245 = vmatpush1.msra.mxu0 0.0
  %2246 = vmatprep.mubr.f32.mxu0 0.0
  %2247 = vmatmul.mubr.f32.gmra.mrb[0].mxu0 %v2180
  %v2248 = vpop.f32.mrb[0].mxu0
  %v2249 = vadd.f32 %v290, %v2248
  %v2250 = vpop.f32.mrb[0].mxu0
  %2251 = vdwg.mxu0
  %v2252 = vmax.f32 %v2249, 0.0
  %v2253 = vmax.f32 %v2101, %v2252
  %v2254 = vld [vmem:[%s986] sm:$0xff]
  %v2255 = vld [vmem:[#allocation2 + $0x6] sm:$0xff]
  %v2257 = vsel %vm32, %v2254, 0
  %2259 = vmatprep.subr.mxu0 0.0
  %2260 = vmatpush1.msra.mxu0 %v213
  %2261 = vmatprep.subr.mxu0 0.0
  %2262 = vmatpush1.msra.mxu0 0.0
  %2263 = vmatprep.subr.mxu0 0.0
  %2264 = vmatpush1.msra.mxu0 0.0
  %2265 = vmatprep.subr.mxu0 0.0
  %2266 = vmatpush1.msra.mxu0 0.0
  %2267 = vmatprep.subr.mxu0 0.0
  %2268 = vmatpush1.msra.mxu0 0.0
  %2269 = vmatprep.subr.mxu0 0.0
  %2270 = vmatpush1.msra.mxu0 0.0
  %2271 = vmatprep.subr.mxu0 0.0
  %2272 = vmatpush1.msra.mxu0 0.0
  %2273 = vmatprep.subr.mxu0 0.0
  %2274 = vmatpush1.msra.mxu0 0.0
  %2275 = vmatprep.subr.mxu0 0.0
  %2276 = vmatpush1.msra.mxu0 0.0
  %2277 = vmatprep.subr.mxu0 0.0
  %2278 = vmatpush1.msra.mxu0 0.0
  %2279 = vmatprep.subr.mxu0 0.0
  %2280 = vmatpush1.msra.mxu0 0.0
  %2281 = vmatprep.subr.mxu0 0.0
  %2282 = vmatpush1.msra.mxu0 0.0
  %2283 = vmatprep.subr.mxu0 0.0
  %2284 = vmatpush1.msra.mxu0 0.0
  %2285 = vmatprep.subr.mxu0 0.0
  %2286 = vmatpush1.msra.mxu0 0.0
  %2287 = vmatprep.subr.mxu0 0.0
  %2288 = vmatpush1.msra.mxu0 0.0
  %2289 = vmatprep.subr.mxu0 0.0
  %2290 = vmatpush1.msra.mxu0 0.0
  %2291 = vmatprep.subr.mxu0 0.0
  %2292 = vmatpush1.msra.mxu0 0.0
  %2293 = vmatprep.subr.mxu0 0.0
  %2294 = vmatpush1.msra.mxu0 0.0
  %2295 = vmatprep.subr.mxu0 0.0
  %2296 = vmatpush1.msra.mxu0 0.0
  %2297 = vmatprep.subr.mxu0 0.0
  %2298 = vmatpush1.msra.mxu0 0.0
  %2299 = vmatprep.subr.mxu0 0.0
  %2300 = vmatpush1.msra.mxu0 0.0
  %2301 = vmatprep.subr.mxu0 0.0
  %2302 = vmatpush1.msra.mxu0 0.0
  %2303 = vmatprep.subr.mxu0 0.0
  %2304 = vmatpush1.msra.mxu0 0.0
  %2305 = vmatprep.subr.mxu0 0.0
  %2306 = vmatpush1.msra.mxu0 0.0
  %2307 = vmatprep.subr.mxu0 0.0
  %2308 = vmatpush1.msra.mxu0 0.0
  %2309 = vmatprep.subr.mxu0 0.0
  %2310 = vmatpush1.msra.mxu0 0.0
  %2311 = vmatprep.subr.mxu0 0.0
  %2312 = vmatpush1.msra.mxu0 0.0
  %2313 = vmatprep.subr.mxu0 0.0
  %2314 = vmatpush1.msra.mxu0 0.0
  %2315 = vmatprep.subr.mxu0 0.0
  %2316 = vmatpush1.msra.mxu0 0.0
  %2317 = vmatprep.subr.mxu0 0.0
  %2318 = vmatpush1.msra.mxu0 0.0
  %2319 = vmatprep.subr.mxu0 0.0
  %2320 = vmatpush1.msra.mxu0 0.0
  %2321 = vmatprep.subr.mxu0 0.0
  %2322 = vmatpush1.msra.mxu0 0.0
  %2323 = vmatprep.mubr.f32.mxu0 0.0
  %2324 = vmatmul.mubr.f32.gmra.mrb[0].mxu0 %v2257
  %v2325 = vpop.f32.mrb[0].mxu0
  %v2326 = vadd.f32 0.0, %v2325
  %v2327 = vpop.f32.mrb[0].mxu0
  %2328 = vdwg.mxu0
  %v2329 = vadd.f32 %v2255, %v2326
  %v2330 = vmax.f32 %v2329, 0.0
  %v2332 = vsel %vm204, %v2330, 0
  %2334 = vmatprep.subr.mxu0 0.0
  %2335 = vmatpush1.msra.mxu0 %v294
  %2336 = vmatprep.subr.mxu0 0.0
  %2337 = vmatpush1.msra.mxu0 %v296
  %2338 = vmatprep.subr.mxu0 0.0
  %2339 = vmatpush1.msra.mxu0 0.0
  %2340 = vmatprep.subr.mxu0 0.0
  %2341 = vmatpush1.msra.mxu0 0.0
  %2342 = vmatprep.subr.mxu0 0.0
  %2343 = vmatpush1.msra.mxu0 0.0
  %2344 = vmatprep.subr.mxu0 0.0
  %2345 = vmatpush1.msra.mxu0 0.0
  %2346 = vmatprep.subr.mxu0 0.0
  %2347 = vmatpush1.msra.mxu0 0.0
  %2348 = vmatprep.subr.mxu0 0.0
  %2349 = vmatpush1.msra.mxu0 0.0
  %2350 = vmatprep.subr.mxu0 0.0
  %2351 = vmatpush1.msra.mxu0 0.0
  %2352 = vmatprep.subr.mxu0 0.0
  %2353 = vmatpush1.msra.mxu0 0.0
  %2354 = vmatprep.subr.mxu0 0.0
  %2355 = vmatpush1.msra.mxu0 0.0
  %2356 = vmatprep.subr.mxu0 0.0
  %2357 = vmatpush1.msra.mxu0 0.0
  %2358 = vmatprep.subr.mxu0 0.0
  %2359 = vmatpush1.msra.mxu0 0.0
  %2360 = vmatprep.subr.mxu0 0.0
  %2361 = vmatpush1.msra.mxu0 0.0
  %2362 = vmatprep.subr.mxu0 0.0
  %2363 = vmatpush1.msra.mxu0 0.0
  %2364 = vmatprep.subr.mxu0 0.0
  %2365 = vmatpush1.msra.mxu0 0.0
  %2366 = vmatprep.subr.mxu0 0.0
  %2367 = vmatpush1.msra.mxu0 0.0
  %2368 = vmatprep.subr.mxu0 0.0
  %2369 = vmatpush1.msra.mxu0 0.0
  %2370 = vmatprep.subr.mxu0 0.0
  %2371 = vmatpush1.msra.mxu0 0.0
  %2372 = vmatprep.subr.mxu0 0.0
  %2373 = vmatpush1.msra.mxu0 0.0
  %2374 = vmatprep.subr.mxu0 0.0
  %2375 = vmatpush1.msra.mxu0 0.0
  %2376 = vmatprep.subr.mxu0 0.0
  %2377 = vmatpush1.msra.mxu0 0.0
  %2378 = vmatprep.subr.mxu0 0.0
  %2379 = vmatpush1.msra.mxu0 0.0
  %2380 = vmatprep.subr.mxu0 0.0
  %2381 = vmatpush1.msra.mxu0 0.0
  %2382 = vmatprep.subr.mxu0 0.0
  %2383 = vmatpush1.msra.mxu0 0.0
  %2384 = vmatprep.subr.mxu0 0.0
  %2385 = vmatpush1.msra.mxu0 0.0
  %2386 = vmatprep.subr.mxu0 0.0
  %2387 = vmatpush1.msra.mxu0 0.0
  %2388 = vmatprep.subr.mxu0 0.0
  %2389 = vmatpush1.msra.mxu0 0.0
  %2390 = vmatprep.subr.mxu0 0.0
  %2391 = vmatpush1.msra.mxu0 0.0
  %2392 = vmatprep.subr.mxu0 0.0
  %2393 = vmatpush1.msra.mxu0 0.0
  %2394 = vmatprep.subr.mxu0 0.0
  %2395 = vmatpush1.msra.mxu0 0.0
  %2396 = vmatprep.subr.mxu0 0.0
  %2397 = vmatpush1.msra.mxu0 0.0
  %2398 = vmatprep.mubr.f32.mxu0 0.0
  %2399 = vmatmul.mubr.f32.gmra.mrb[0].mxu0 %v2332
  %v2400 = vpop.f32.mrb[0].mxu0
  %v2401 = vadd.f32 %v290, %v2400
  %v2402 = vpop.f32.mrb[0].mxu0
  %2403 = vdwg.mxu0
  %v2404 = vmax.f32 %v2401, 0.0
  %v2405 = vmax.f32 %v2253, %v2404
  %v2406 = vld [vmem:[%s1139] sm:$0xff]
  %v2407 = vld [vmem:[#allocation2 + $0x7] sm:$0xff]
  %v2409 = vsel %vm32, %v2406, 0
  %2411 = vmatprep.subr.mxu0 0.0
  %2412 = vmatpush1.msra.mxu0 %v213
  %2413 = vmatprep.subr.mxu0 0.0
  %2414 = vmatpush1.msra.mxu0 0.0
  %2415 = vmatprep.subr.mxu0 0.0
  %2416 = vmatpush1.msra.mxu0 0.0
  %2417 = vmatprep.subr.mxu0 0.0
  %2418 = vmatpush1.msra.mxu0 0.0
  %2419 = vmatprep.subr.mxu0 0.0
  %2420 = vmatpush1.msra.mxu0 0.0
  %2421 = vmatprep.subr.mxu0 0.0
  %2422 = vmatpush1.msra.mxu0 0.0
  %2423 = vmatprep.subr.mxu0 0.0
  %2424 = vmatpush1.msra.mxu0 0.0
  %2425 = vmatprep.subr.mxu0 0.0
  %2426 = vmatpush1.msra.mxu0 0.0
  %2427 = vmatprep.subr.mxu0 0.0
  %2428 = vmatpush1.msra.mxu0 0.0
  %2429 = vmatprep.subr.mxu0 0.0
  %2430 = vmatpush1.msra.mxu0 0.0
  %2431 = vmatprep.subr.mxu0 0.0
  %2432 = vmatpush1.msra.mxu0 0.0
  %2433 = vmatprep.subr.mxu0 0.0
  %2434 = vmatpush1.msra.mxu0 0.0
  %2435 = vmatprep.subr.mxu0 0.0
  %2436 = vmatpush1.msra.mxu0 0.0
  %2437 = vmatprep.subr.mxu0 0.0
  %2438 = vmatpush1.msra.mxu0 0.0
  %2439 = vmatprep.subr.mxu0 0.0
  %2440 = vmatpush1.msra.mxu0 0.0
  %2441 = vmatprep.subr.mxu0 0.0
  %2442 = vmatpush1.msra.mxu0 0.0
  %2443 = vmatprep.subr.mxu0 0.0
  %2444 = vmatpush1.msra.mxu0 0.0
  %2445 = vmatprep.subr.mxu0 0.0
  %2446 = vmatpush1.msra.mxu0 0.0
  %2447 = vmatprep.subr.mxu0 0.0
  %2448 = vmatpush1.msra.mxu0 0.0
  %2449 = vmatprep.subr.mxu0 0.0
  %2450 = vmatpush1.msra.mxu0 0.0
  %2451 = vmatprep.subr.mxu0 0.0
  %2452 = vmatpush1.msra.mxu0 0.0
  %2453 = vmatprep.subr.mxu0 0.0
  %2454 = vmatpush1.msra.mxu0 0.0
  %2455 = vmatprep.subr.mxu0 0.0
  %2456 = vmatpush1.msra.mxu0 0.0
  %2457 = vmatprep.subr.mxu0 0.0
  %2458 = vmatpush1.msra.mxu0 0.0
  %2459 = vmatprep.subr.mxu0 0.0
  %2460 = vmatpush1.msra.mxu0 0.0
  %2461 = vmatprep.subr.mxu0 0.0
  %2462 = vmatpush1.msra.mxu0 0.0
  %2463 = vmatprep.subr.mxu0 0.0
  %2464 = vmatpush1.msra.mxu0 0.0
  %2465 = vmatprep.subr.mxu0 0.0
  %2466 = vmatpush1.msra.mxu0 0.0
  %2467 = vmatprep.subr.mxu0 0.0
  %2468 = vmatpush1.msra.mxu0 0.0
  %2469 = vmatprep.subr.mxu0 0.0
  %2470 = vmatpush1.msra.mxu0 0.0
  %2471 = vmatprep.subr.mxu0 0.0
  %2472 = vmatpush1.msra.mxu0 0.0
  %2473 = vmatprep.subr.mxu0 0.0
  %2474 = vmatpush1.msra.mxu0 0.0
  %2475 = vmatprep.mubr.f32.mxu0 0.0
  %2476 = vmatmul.mubr.f32.gmra.mrb[0].mxu0 %v2409
  %v2477 = vpop.f32.mrb[0].mxu0
  %v2478 = vadd.f32 0.0, %v2477
  %v2479 = vpop.f32.mrb[0].mxu0
  %2480 = vdwg.mxu0
  %v2481 = vadd.f32 %v2407, %v2478
  %v2482 = vmax.f32 %v2481, 0.0
  %v2484 = vsel %vm204, %v2482, 0
  %2486 = vmatprep.subr.mxu0 0.0
  %2487 = vmatpush1.msra.mxu0 %v294
  %2488 = vmatprep.subr.mxu0 0.0
  %2489 = vmatpush1.msra.mxu0 %v296
  %2490 = vmatprep.subr.mxu0 0.0
  %2491 = vmatpush1.msra.mxu0 0.0
  %2492 = vmatprep.subr.mxu0 0.0
  %2493 = vmatpush1.msra.mxu0 0.0
  %2494 = vmatprep.subr.mxu0 0.0
  %2495 = vmatpush1.msra.mxu0 0.0
  %2496 = vmatprep.subr.mxu0 0.0
  %2497 = vmatpush1.msra.mxu0 0.0
  %2498 = vmatprep.subr.mxu0 0.0
  %2499 = vmatpush1.msra.mxu0 0.0
  %2500 = vmatprep.subr.mxu0 0.0
  %2501 = vmatpush1.msra.mxu0 0.0
  %2502 = vmatprep.subr.mxu0 0.0
  %2503 = vmatpush1.msra.mxu0 0.0
  %2504 = vmatprep.subr.mxu0 0.0
  %2505 = vmatpush1.msra.mxu0 0.0
  %2506 = vmatprep.subr.mxu0 0.0
  %2507 = vmatpush1.msra.mxu0 0.0
  %2508 = vmatprep.subr.mxu0 0.0
  %2509 = vmatpush1.msra.mxu0 0.0
  %2510 = vmatprep.subr.mxu0 0.0
  %2511 = vmatpush1.msra.mxu0 0.0
  %2512 = vmatprep.subr.mxu0 0.0
  %2513 = vmatpush1.msra.mxu0 0.0
  %2514 = vmatprep.subr.mxu0 0.0
  %2515 = vmatpush1.msra.mxu0 0.0
  %2516 = vmatprep.subr.mxu0 0.0
  %2517 = vmatpush1.msra.mxu0 0.0
  %2518 = vmatprep.subr.mxu0 0.0
  %2519 = vmatpush1.msra.mxu0 0.0
  %2520 = vmatprep.subr.mxu0 0.0
  %2521 = vmatpush1.msra.mxu0 0.0
  %2522 = vmatprep.subr.mxu0 0.0
  %2523 = vmatpush1.msra.mxu0 0.0
  %2524 = vmatprep.subr.mxu0 0.0
  %2525 = vmatpush1.msra.mxu0 0.0
  %2526 = vmatprep.subr.mxu0 0.0
  %2527 = vmatpush1.msra.mxu0 0.0
  %2528 = vmatprep.subr.mxu0 0.0
  %2529 = vmatpush1.msra.mxu0 0.0
  %2530 = vmatprep.subr.mxu0 0.0
  %2531 = vmatpush1.msra.mxu0 0.0
  %2532 = vmatprep.subr.mxu0 0.0
  %2533 = vmatpush1.msra.mxu0 0.0
  %2534 = vmatprep.subr.mxu0 0.0
  %2535 = vmatpush1.msra.mxu0 0.0
  %2536 = vmatprep.subr.mxu0 0.0
  %2537 = vmatpush1.msra.mxu0 0.0
  %2538 = vmatprep.subr.mxu0 0.0
  %2539 = vmatpush1.msra.mxu0 0.0
  %2540 = vmatprep.subr.mxu0 0.0
  %2541 = vmatpush1.msra.mxu0 0.0
  %2542 = vmatprep.subr.mxu0 0.0
  %2543 = vmatpush1.msra.mxu0 0.0
  %2544 = vmatprep.subr.mxu0 0.0
  %2545 = vmatpush1.msra.mxu0 0.0
  %2546 = vmatprep.subr.mxu0 0.0
  %2547 = vmatpush1.msra.mxu0 0.0
  %2548 = vmatprep.subr.mxu0 0.0
  %2549 = vmatpush1.msra.mxu0 0.0
  %2550 = vmatprep.mubr.f32.mxu0 0.0
  %2551 = vmatmul.mubr.f32.gmra.mrb[0].mxu0 %v2484
  %v2552 = vpop.f32.mrb[0].mxu0
  %v2553 = vadd.f32 %v290, %v2552
  %v2554 = vpop.f32.mrb[0].mxu0
  %2555 = vdwg.mxu0
  %v2556 = vmax.f32 %v2553, 0.0
  %v2557 = vmax.f32 %v2405, %v2556
  %v2558 = vmul.f32 %v1488, %v1295
  %v2559 = vadd.f32 %v189, %v2558
  %v2561 = vsel %vm1316, %v2557, 0
  %2563 = vmatprep.subr.mxu0 0.0
  %2564 = vmatpush1.msra.mxu0 %v1305
  %2565 = vmatprep.subr.mxu0 0.0
  %2566 = vmatpush1.msra.mxu0 %v1307
  %2567 = vmatprep.subr.mxu0 0.0
  %2568 = vmatpush1.msra.mxu0 %v1309
  %2569 = vmatprep.subr.mxu0 0.0
  %2570 = vmatpush1.msra.mxu0 %v1311
  %2571 = vmatprep.subr.mxu0 0.0
  %2572 = vmatpush1.msra.mxu0 0.0
  %2573 = vmatprep.subr.mxu0 0.0
  %2574 = vmatpush1.msra.mxu0 0.0
  %2575 = vmatprep.subr.mxu0 0.0
  %2576 = vmatpush1.msra.mxu0 0.0
  %2577 = vmatprep.subr.mxu0 0.0
  %2578 = vmatpush1.msra.mxu0 0.0
  %2579 = vmatprep.subr.mxu0 0.0
  %2580 = vmatpush1.msra.mxu0 0.0
  %2581 = vmatprep.subr.mxu0 0.0
  %2582 = vmatpush1.msra.mxu0 0.0
  %2583 = vmatprep.subr.mxu0 0.0
  %2584 = vmatpush1.msra.mxu0 0.0
  %2585 = vmatprep.subr.mxu0 0.0
  %2586 = vmatpush1.msra.mxu0 0.0
  %2587 = vmatprep.subr.mxu0 0.0
  %2588 = vmatpush1.msra.mxu0 0.0
  %2589 = vmatprep.subr.mxu0 0.0
  %2590 = vmatpush1.msra.mxu0 0.0
  %2591 = vmatprep.subr.mxu0 0.0
  %2592 = vmatpush1.msra.mxu0 0.0
  %2593 = vmatprep.subr.mxu0 0.0
  %2594 = vmatpush1.msra.mxu0 0.0
  %2595 = vmatprep.subr.mxu0 0.0
  %2596 = vmatpush1.msra.mxu0 0.0
  %2597 = vmatprep.subr.mxu0 0.0
  %2598 = vmatpush1.msra.mxu0 0.0
  %2599 = vmatprep.subr.mxu0 0.0
  %2600 = vmatpush1.msra.mxu0 0.0
  %2601 = vmatprep.subr.mxu0 0.0
  %2602 = vmatpush1.msra.mxu0 0.0
  %2603 = vmatprep.subr.mxu0 0.0
  %2604 = vmatpush1.msra.mxu0 0.0
  %2605 = vmatprep.subr.mxu0 0.0
  %2606 = vmatpush1.msra.mxu0 0.0
  %2607 = vmatprep.subr.mxu0 0.0
  %2608 = vmatpush1.msra.mxu0 0.0
  %2609 = vmatprep.subr.mxu0 0.0
  %2610 = vmatpush1.msra.mxu0 0.0
  %2611 = vmatprep.subr.mxu0 0.0
  %2612 = vmatpush1.msra.mxu0 0.0
  %2613 = vmatprep.subr.mxu0 0.0
  %2614 = vmatpush1.msra.mxu0 0.0
  %2615 = vmatprep.subr.mxu0 0.0
  %2616 = vmatpush1.msra.mxu0 0.0
  %2617 = vmatprep.subr.mxu0 0.0
  %2618 = vmatpush1.msra.mxu0 0.0
  %2619 = vmatprep.subr.mxu0 0.0
  %2620 = vmatpush1.msra.mxu0 0.0
  %2621 = vmatprep.subr.mxu0 0.0
  %2622 = vmatpush1.msra.mxu0 0.0
  %2623 = vmatprep.subr.mxu0 0.0
  %2624 = vmatpush1.msra.mxu0 0.0
  %2625 = vmatprep.subr.mxu0 0.0
  %2626 = vmatpush1.msra.mxu0 0.0
  %2627 = vmatprep.mubr.f32.mxu0 0.0
  %2628 = vmatmul.mubr.f32.gmra.mrb[0].mxu0 %v2561
  %v2629 = vpop.f32.mrb[0].mxu0
  %v2630 = vadd.f32 0.0, %v2629
  %v2631 = vpop.f32.mrb[0].mxu0
  %2632 = vdwg.mxu0
  %v2633 = vadd.f32 %v2559, %v2630
  %v2634 = vmax.f32 %v2633, 0.0
  %v2636 = vsel %vm204, %v2634, 0
  %2638 = vmatprep.subr.mxu0 0.0
  %2639 = vmatpush1.msra.mxu0 %v1401
  %2640 = vmatprep.subr.mxu0 0.0
  %2641 = vmatpush1.msra.mxu0 %v1403
  %2642 = vmatprep.subr.mxu0 0.0
  %2643 = vmatpush1.msra.mxu0 0.0
  %2644 = vmatprep.subr.mxu0 0.0
  %2645 = vmatpush1.msra.mxu0 0.0
  %2646 = vmatprep.subr.mxu0 0.0
  %2647 = vmatpush1.msra.mxu0 0.0
  %2648 = vmatprep.subr.mxu0 0.0
  %2649 = vmatpush1.msra.mxu0 0.0
  %2650 = vmatprep.subr.mxu0 0.0
  %2651 = vmatpush1.msra.mxu0 0.0
  %2652 = vmatprep.subr.mxu0 0.0
  %2653 = vmatpush1.msra.mxu0 0.0
  %2654 = vmatprep.subr.mxu0 0.0
  %2655 = vmatpush1.msra.mxu0 0.0
  %2656 = vmatprep.subr.mxu0 0.0
  %2657 = vmatpush1.msra.mxu0 0.0
  %2658 = vmatprep.subr.mxu0 0.0
  %2659 = vmatpush1.msra.mxu0 0.0
  %2660 = vmatprep.subr.mxu0 0.0
  %2661 = vmatpush1.msra.mxu0 0.0
  %2662 = vmatprep.subr.mxu0 0.0
  %2663 = vmatpush1.msra.mxu0 0.0
  %2664 = vmatprep.subr.mxu0 0.0
  %2665 = vmatpush1.msra.mxu0 0.0
  %2666 = vmatprep.subr.mxu0 0.0
  %2667 = vmatpush1.msra.mxu0 0.0
  %2668 = vmatprep.subr.mxu0 0.0
  %2669 = vmatpush1.msra.mxu0 0.0
  %2670 = vmatprep.subr.mxu0 0.0
  %2671 = vmatpush1.msra.mxu0 0.0
  %2672 = vmatprep.subr.mxu0 0.0
  %2673 = vmatpush1.msra.mxu0 0.0
  %2674 = vmatprep.subr.mxu0 0.0
  %2675 = vmatpush1.msra.mxu0 0.0
  %2676 = vmatprep.subr.mxu0 0.0
  %2677 = vmatpush1.msra.mxu0 0.0
  %2678 = vmatprep.subr.mxu0 0.0
  %2679 = vmatpush1.msra.mxu0 0.0
  %2680 = vmatprep.subr.mxu0 0.0
  %2681 = vmatpush1.msra.mxu0 0.0
  %2682 = vmatprep.subr.mxu0 0.0
  %2683 = vmatpush1.msra.mxu0 0.0
  %2684 = vmatprep.subr.mxu0 0.0
  %2685 = vmatpush1.msra.mxu0 0.0
  %2686 = vmatprep.subr.mxu0 0.0
  %2687 = vmatpush1.msra.mxu0 0.0
  %2688 = vmatprep.subr.mxu0 0.0
  %2689 = vmatpush1.msra.mxu0 0.0
  %2690 = vmatprep.subr.mxu0 0.0
  %2691 = vmatpush1.msra.mxu0 0.0
  %2692 = vmatprep.subr.mxu0 0.0
  %2693 = vmatpush1.msra.mxu0 0.0
  %2694 = vmatprep.subr.mxu0 0.0
  %2695 = vmatpush1.msra.mxu0 0.0
  %2696 = vmatprep.subr.mxu0 0.0
  %2697 = vmatpush1.msra.mxu0 0.0
  %2698 = vmatprep.subr.mxu0 0.0
  %2699 = vmatpush1.msra.mxu0 0.0
  %2700 = vmatprep.subr.mxu0 0.0
  %2701 = vmatpush1.msra.mxu0 0.0
  %2702 = vmatprep.mubr.f32.mxu0 0.0
  %2703 = vmatmul.mubr.f32.gmra.mrb[0].mxu0 %v2636
  %v2704 = vpop.f32.mrb[0].mxu0
  %v2705 = vadd.f32 %v1395, %v2704
  %v2706 = vpop.f32.mrb[0].mxu0
  %2707 = vdwg.mxu0
  %v2708 = vxor.u32 %v2705, 2147483648
  %v2709 = vmul.f32 %v2708, 1.442695
  %v2710 = vpow.pop %v2709
  %v2711 = vadd.f32 %v2710, 1.0
  %v2712 = vrcp.pop %v2711
  %v2713 = vmul.f32 1.0, %v2712
  %2715 = vset.pattern.permute.xlu0 0
  %2716 = vperm.xlu0 %2715, %v2713
  %v2717 = vpop.permute.xlu0 %2716
  %v2719 = vmul.f32 %v2717, %v201
  %v2720 = vadd.f32 %v107, %v2719
  %2721 = vst.msk [vmem:[#allocation2] sm:$0xff] %vm204, %v2720
  %2722 = vst.msk [vmem:[#allocation2 + $0x8] sm:$0xff] %vm204, %v2720
  %v2723 = vld [vmem:[%s2] sm:$0xff]
  %v2724 = vld [vmem:[#allocation2 + $0x1] sm:$0xff]
  %v2726 = vsel %vm32, %v2723, 0
  %2728 = vmatprep.subr.mxu0 0.0
  %2729 = vmatpush1.msra.mxu0 %v213
  %2730 = vmatprep.subr.mxu0 0.0
  %2731 = vmatpush1.msra.mxu0 0.0
  %2732 = vmatprep.subr.mxu0 0.0
  %2733 = vmatpush1.msra.mxu0 0.0
  %2734 = vmatprep.subr.mxu0 0.0
  %2735 = vmatpush1.msra.mxu0 0.0
  %2736 = vmatprep.subr.mxu0 0.0
  %2737 = vmatpush1.msra.mxu0 0.0
  %2738 = vmatprep.subr.mxu0 0.0
  %2739 = vmatpush1.msra.mxu0 0.0
  %2740 = vmatprep.subr.mxu0 0.0
  %2741 = vmatpush1.msra.mxu0 0.0
  %2742 = vmatprep.subr.mxu0 0.0
  %2743 = vmatpush1.msra.mxu0 0.0
  %2744 = vmatprep.subr.mxu0 0.0
  %2745 = vmatpush1.msra.mxu0 0.0
  %2746 = vmatprep.subr.mxu0 0.0
  %2747 = vmatpush1.msra.mxu0 0.0
  %2748 = vmatprep.subr.mxu0 0.0
  %2749 = vmatpush1.msra.mxu0 0.0
  %2750 = vmatprep.subr.mxu0 0.0
  %2751 = vmatpush1.msra.mxu0 0.0
  %2752 = vmatprep.subr.mxu0 0.0
  %2753 = vmatpush1.msra.mxu0 0.0
  %2754 = vmatprep.subr.mxu0 0.0
  %2755 = vmatpush1.msra.mxu0 0.0
  %2756 = vmatprep.subr.mxu0 0.0
  %2757 = vmatpush1.msra.mxu0 0.0
  %2758 = vmatprep.subr.mxu0 0.0
  %2759 = vmatpush1.msra.mxu0 0.0
  %2760 = vmatprep.subr.mxu0 0.0
  %2761 = vmatpush1.msra.mxu0 0.0
  %2762 = vmatprep.subr.mxu0 0.0
  %2763 = vmatpush1.msra.mxu0 0.0
  %2764 = vmatprep.subr.mxu0 0.0
  %2765 = vmatpush1.msra.mxu0 0.0
  %2766 = vmatprep.subr.mxu0 0.0
  %2767 = vmatpush1.msra.mxu0 0.0
  %2768 = vmatprep.subr.mxu0 0.0
  %2769 = vmatpush1.msra.mxu0 0.0
  %2770 = vmatprep.subr.mxu0 0.0
  %2771 = vmatpush1.msra.mxu0 0.0
  %2772 = vmatprep.subr.mxu0 0.0
  %2773 = vmatpush1.msra.mxu0 0.0
  %2774 = vmatprep.subr.mxu0 0.0
  %2775 = vmatpush1.msra.mxu0 0.0
  %2776 = vmatprep.subr.mxu0 0.0
  %2777 = vmatpush1.msra.mxu0 0.0
  %2778 = vmatprep.subr.mxu0 0.0
  %2779 = vmatpush1.msra.mxu0 0.0
  %2780 = vmatprep.subr.mxu0 0.0
  %2781 = vmatpush1.msra.mxu0 0.0
  %2782 = vmatprep.subr.mxu0 0.0
  %2783 = vmatpush1.msra.mxu0 0.0
  %2784 = vmatprep.subr.mxu0 0.0
  %2785 = vmatpush1.msra.mxu0 0.0
  %2786 = vmatprep.subr.mxu0 0.0
  %2787 = vmatpush1.msra.mxu0 0.0
  %2788 = vmatprep.subr.mxu0 0.0
  %2789 = vmatpush1.msra.mxu0 0.0
  %2790 = vmatprep.subr.mxu0 0.0
  %2791 = vmatpush1.msra.mxu0 0.0
  %2792 = vmatprep.mubr.f32.mxu0 0.0
  %2793 = vmatmul.mubr.f32.gmra.mrb[0].mxu0 %v2726
  %v2794 = vpop.f32.mrb[0].mxu0
  %v2795 = vadd.f32 0.0, %v2794
  %v2796 = vpop.f32.mrb[0].mxu0
  %2797 = vdwg.mxu0
  %v2798 = vadd.f32 %v2724, %v2795
  %v2799 = vmax.f32 %v2798, 0.0
  %v2801 = vsel %vm204, %v2799, 0
  %2803 = vmatprep.subr.mxu0 0.0
  %2804 = vmatpush1.msra.mxu0 %v294
  %2805 = vmatprep.subr.mxu0 0.0
  %2806 = vmatpush1.msra.mxu0 %v296
  %2807 = vmatprep.subr.mxu0 0.0
  %2808 = vmatpush1.msra.mxu0 0.0
  %2809 = vmatprep.subr.mxu0 0.0
  %2810 = vmatpush1.msra.mxu0 0.0
  %2811 = vmatprep.subr.mxu0 0.0
  %2812 = vmatpush1.msra.mxu0 0.0
  %2813 = vmatprep.subr.mxu0 0.0
  %2814 = vmatpush1.msra.mxu0 0.0
  %2815 = vmatprep.subr.mxu0 0.0
  %2816 = vmatpush1.msra.mxu0 0.0
  %2817 = vmatprep.subr.mxu0 0.0
  %2818 = vmatpush1.msra.mxu0 0.0
  %2819 = vmatprep.subr.mxu0 0.0
  %2820 = vmatpush1.msra.mxu0 0.0
  %2821 = vmatprep.subr.mxu0 0.0
  %2822 = vmatpush1.msra.mxu0 0.0
  %2823 = vmatprep.subr.mxu0 0.0
  %2824 = vmatpush1.msra.mxu0 0.0
  %2825 = vmatprep.subr.mxu0 0.0
  %2826 = vmatpush1.msra.mxu0 0.0
  %2827 = vmatprep.subr.mxu0 0.0
  %2828 = vmatpush1.msra.mxu0 0.0
  %2829 = vmatprep.subr.mxu0 0.0
  %2830 = vmatpush1.msra.mxu0 0.0
  %2831 = vmatprep.subr.mxu0 0.0
  %2832 = vmatpush1.msra.mxu0 0.0
  %2833 = vmatprep.subr.mxu0 0.0
  %2834 = vmatpush1.msra.mxu0 0.0
  %2835 = vmatprep.subr.mxu0 0.0
  %2836 = vmatpush1.msra.mxu0 0.0
  %2837 = vmatprep.subr.mxu0 0.0
  %2838 = vmatpush1.msra.mxu0 0.0
  %2839 = vmatprep.subr.mxu0 0.0
  %2840 = vmatpush1.msra.mxu0 0.0
  %2841 = vmatprep.subr.mxu0 0.0
  %2842 = vmatpush1.msra.mxu0 0.0
  %2843 = vmatprep.subr.mxu0 0.0
  %2844 = vmatpush1.msra.mxu0 0.0
  %2845 = vmatprep.subr.mxu0 0.0
  %2846 = vmatpush1.msra.mxu0 0.0
  %2847 = vmatprep.subr.mxu0 0.0
  %2848 = vmatpush1.msra.mxu0 0.0
  %2849 = vmatprep.subr.mxu0 0.0
  %2850 = vmatpush1.msra.mxu0 0.0
  %2851 = vmatprep.subr.mxu0 0.0
  %2852 = vmatpush1.msra.mxu0 0.0
  %2853 = vmatprep.subr.mxu0 0.0
  %2854 = vmatpush1.msra.mxu0 0.0
  %2855 = vmatprep.subr.mxu0 0.0
  %2856 = vmatpush1.msra.mxu0 0.0
  %2857 = vmatprep.subr.mxu0 0.0
  %2858 = vmatpush1.msra.mxu0 0.0
  %2859 = vmatprep.subr.mxu0 0.0
  %2860 = vmatpush1.msra.mxu0 0.0
  %2861 = vmatprep.subr.mxu0 0.0
  %2862 = vmatpush1.msra.mxu0 0.0
  %2863 = vmatprep.subr.mxu0 0.0
  %2864 = vmatpush1.msra.mxu0 0.0
  %2865 = vmatprep.subr.mxu0 0.0
  %2866 = vmatpush1.msra.mxu0 0.0
  %2867 = vmatprep.mubr.f32.mxu0 0.0
  %2868 = vmatmul.mubr.f32.gmra.mrb[0].mxu0 %v2801
  %v2869 = vpop.f32.mrb[0].mxu0
  %v2870 = vadd.f32 %v290, %v2869
  %v2871 = vpop.f32.mrb[0].mxu0
  %2872 = vdwg.mxu0
  %v2873 = vmax.f32 %v2870, 0.0
  %v2874 = vmax.f32 %v2873, 0.0
  %v2875 = vld [vmem:[%s374] sm:$0xff]
  %v2876 = vld [vmem:[#allocation2 + $0x2] sm:$0xff]
  %v2878 = vsel %vm32, %v2875, 0
  %2880 = vmatprep.subr.mxu0 0.0
  %2881 = vmatpush1.msra.mxu0 %v213
  %2882 = vmatprep.subr.mxu0 0.0
  %2883 = vmatpush1.msra.mxu0 0.0
  %2884 = vmatprep.subr.mxu0 0.0
  %2885 = vmatpush1.msra.mxu0 0.0
  %2886 = vmatprep.subr.mxu0 0.0
  %2887 = vmatpush1.msra.mxu0 0.0
  %2888 = vmatprep.subr.mxu0 0.0
  %2889 = vmatpush1.msra.mxu0 0.0
  %2890 = vmatprep.subr.mxu0 0.0
  %2891 = vmatpush1.msra.mxu0 0.0
  %2892 = vmatprep.subr.mxu0 0.0
  %2893 = vmatpush1.msra.mxu0 0.0
  %2894 = vmatprep.subr.mxu0 0.0
  %2895 = vmatpush1.msra.mxu0 0.0
  %2896 = vmatprep.subr.mxu0 0.0
  %2897 = vmatpush1.msra.mxu0 0.0
  %2898 = vmatprep.subr.mxu0 0.0
  %2899 = vmatpush1.msra.mxu0 0.0
  %2900 = vmatprep.subr.mxu0 0.0
  %2901 = vmatpush1.msra.mxu0 0.0
  %2902 = vmatprep.subr.mxu0 0.0
  %2903 = vmatpush1.msra.mxu0 0.0
  %2904 = vmatprep.subr.mxu0 0.0
  %2905 = vmatpush1.msra.mxu0 0.0
  %2906 = vmatprep.subr.mxu0 0.0
  %2907 = vmatpush1.msra.mxu0 0.0
  %2908 = vmatprep.subr.mxu0 0.0
  %2909 = vmatpush1.msra.mxu0 0.0
  %2910 = vmatprep.subr.mxu0 0.0
  %2911 = vmatpush1.msra.mxu0 0.0
  %2912 = vmatprep.subr.mxu0 0.0
  %2913 = vmatpush1.msra.mxu0 0.0
  %2914 = vmatprep.subr.mxu0 0.0
  %2915 = vmatpush1.msra.mxu0 0.0
  %2916 = vmatprep.subr.mxu0 0.0
  %2917 = vmatpush1.msra.mxu0 0.0
  %2918 = vmatprep.subr.mxu0 0.0
  %2919 = vmatpush1.msra.mxu0 0.0
  %2920 = vmatprep.subr.mxu0 0.0
  %2921 = vmatpush1.msra.mxu0 0.0
  %2922 = vmatprep.subr.mxu0 0.0
  %2923 = vmatpush1.msra.mxu0 0.0
  %2924 = vmatprep.subr.mxu0 0.0
  %2925 = vmatpush1.msra.mxu0 0.0
  %2926 = vmatprep.subr.mxu0 0.0
  %2927 = vmatpush1.msra.mxu0 0.0
  %2928 = vmatprep.subr.mxu0 0.0
  %2929 = vmatpush1.msra.mxu0 0.0
  %2930 = vmatprep.subr.mxu0 0.0
  %2931 = vmatpush1.msra.mxu0 0.0
  %2932 = vmatprep.subr.mxu0 0.0
  %2933 = vmatpush1.msra.mxu0 0.0
  %2934 = vmatprep.subr.mxu0 0.0
  %2935 = vmatpush1.msra.mxu0 0.0
  %2936 = vmatprep.subr.mxu0 0.0
  %2937 = vmatpush1.msra.mxu0 0.0
  %2938 = vmatprep.subr.mxu0 0.0
  %2939 = vmatpush1.msra.mxu0 0.0
  %2940 = vmatprep.subr.mxu0 0.0
  %2941 = vmatpush1.msra.mxu0 0.0
  %2942 = vmatprep.subr.mxu0 0.0
  %2943 = vmatpush1.msra.mxu0 0.0
  %2944 = vmatprep.mubr.f32.mxu0 0.0
  %2945 = vmatmul.mubr.f32.gmra.mrb[0].mxu0 %v2878
  %v2946 = vpop.f32.mrb[0].mxu0
  %v2947 = vadd.f32 0.0, %v2946
  %v2948 = vpop.f32.mrb[0].mxu0
  %2949 = vdwg.mxu0
  %v2950 = vadd.f32 %v2876, %v2947
  %v2951 = vmax.f32 %v2950, 0.0
  %v2953 = vsel %vm204, %v2951, 0
  %2955 = vmatprep.subr.mxu0 0.0
  %2956 = vmatpush1.msra.mxu0 %v294
  %2957 = vmatprep.subr.mxu0 0.0
  %2958 = vmatpush1.msra.mxu0 %v296
  %2959 = vmatprep.subr.mxu0 0.0
  %2960 = vmatpush1.msra.mxu0 0.0
  %2961 = vmatprep.subr.mxu0 0.0
  %2962 = vmatpush1.msra.mxu0 0.0
  %2963 = vmatprep.subr.mxu0 0.0
  %2964 = vmatpush1.msra.mxu0 0.0
  %2965 = vmatprep.subr.mxu0 0.0
  %2966 = vmatpush1.msra.mxu0 0.0
  %2967 = vmatprep.subr.mxu0 0.0
  %2968 = vmatpush1.msra.mxu0 0.0
  %2969 = vmatprep.subr.mxu0 0.0
  %2970 = vmatpush1.msra.mxu0 0.0
  %2971 = vmatprep.subr.mxu0 0.0
  %2972 = vmatpush1.msra.mxu0 0.0
  %2973 = vmatprep.subr.mxu0 0.0
  %2974 = vmatpush1.msra.mxu0 0.0
  %2975 = vmatprep.subr.mxu0 0.0
  %2976 = vmatpush1.msra.mxu0 0.0
  %2977 = vmatprep.subr.mxu0 0.0
  %2978 = vmatpush1.msra.mxu0 0.0
  %2979 = vmatprep.subr.mxu0 0.0
  %2980 = vmatpush1.msra.mxu0 0.0
  %2981 = vmatprep.subr.mxu0 0.0
  %2982 = vmatpush1.msra.mxu0 0.0
  %2983 = vmatprep.subr.mxu0 0.0
  %2984 = vmatpush1.msra.mxu0 0.0
  %2985 = vmatprep.subr.mxu0 0.0
  %2986 = vmatpush1.msra.mxu0 0.0
  %2987 = vmatprep.subr.mxu0 0.0
  %2988 = vmatpush1.msra.mxu0 0.0
  %2989 = vmatprep.subr.mxu0 0.0
  %2990 = vmatpush1.msra.mxu0 0.0
  %2991 = vmatprep.subr.mxu0 0.0
  %2992 = vmatpush1.msra.mxu0 0.0
  %2993 = vmatprep.subr.mxu0 0.0
  %2994 = vmatpush1.msra.mxu0 0.0
  %2995 = vmatprep.subr.mxu0 0.0
  %2996 = vmatpush1.msra.mxu0 0.0
  %2997 = vmatprep.subr.mxu0 0.0
  %2998 = vmatpush1.msra.mxu0 0.0
  %2999 = vmatprep.subr.mxu0 0.0
  %3000 = vmatpush1.msra.mxu0 0.0
  %3001 = vmatprep.subr.mxu0 0.0
  %3002 = vmatpush1.msra.mxu0 0.0
  %3003 = vmatprep.subr.mxu0 0.0
  %3004 = vmatpush1.msra.mxu0 0.0
  %3005 = vmatprep.subr.mxu0 0.0
  %3006 = vmatpush1.msra.mxu0 0.0
  %3007 = vmatprep.subr.mxu0 0.0
  %3008 = vmatpush1.msra.mxu0 0.0
  %3009 = vmatprep.subr.mxu0 0.0
  %3010 = vmatpush1.msra.mxu0 0.0
  %3011 = vmatprep.subr.mxu0 0.0
  %3012 = vmatpush1.msra.mxu0 0.0
  %3013 = vmatprep.subr.mxu0 0.0
  %3014 = vmatpush1.msra.mxu0 0.0
  %3015 = vmatprep.subr.mxu0 0.0
  %3016 = vmatpush1.msra.mxu0 0.0
  %3017 = vmatprep.subr.mxu0 0.0
  %3018 = vmatpush1.msra.mxu0 0.0
  %3019 = vmatprep.mubr.f32.mxu0 0.0
  %3020 = vmatmul.mubr.f32.gmra.mrb[0].mxu0 %v2953
  %v3021 = vpop.f32.mrb[0].mxu0
  %v3022 = vadd.f32 %v290, %v3021
  %v3023 = vpop.f32.mrb[0].mxu0
  %3024 = vdwg.mxu0
  %v3025 = vmax.f32 %v3022, 0.0
  %v3026 = vmax.f32 %v2874, %v3025
  %v3027 = vld [vmem:[%s527] sm:$0xff]
  %v3028 = vld [vmem:[#allocation2 + $0x3] sm:$0xff]
  %v3030 = vsel %vm32, %v3027, 0
  %3032 = vmatprep.subr.mxu0 0.0
  %3033 = vmatpush1.msra.mxu0 %v213
  %3034 = vmatprep.subr.mxu0 0.0
  %3035 = vmatpush1.msra.mxu0 0.0
  %3036 = vmatprep.subr.mxu0 0.0
  %3037 = vmatpush1.msra.mxu0 0.0
  %3038 = vmatprep.subr.mxu0 0.0
  %3039 = vmatpush1.msra.mxu0 0.0
  %3040 = vmatprep.subr.mxu0 0.0
  %3041 = vmatpush1.msra.mxu0 0.0
  %3042 = vmatprep.subr.mxu0 0.0
  %3043 = vmatpush1.msra.mxu0 0.0
  %3044 = vmatprep.subr.mxu0 0.0
  %3045 = vmatpush1.msra.mxu0 0.0
  %3046 = vmatprep.subr.mxu0 0.0
  %3047 = vmatpush1.msra.mxu0 0.0
  %3048 = vmatprep.subr.mxu0 0.0
  %3049 = vmatpush1.msra.mxu0 0.0
  %3050 = vmatprep.subr.mxu0 0.0
  %3051 = vmatpush1.msra.mxu0 0.0
  %3052 = vmatprep.subr.mxu0 0.0
  %3053 = vmatpush1.msra.mxu0 0.0
  %3054 = vmatprep.subr.mxu0 0.0
  %3055 = vmatpush1.msra.mxu0 0.0
  %3056 = vmatprep.subr.mxu0 0.0
  %3057 = vmatpush1.msra.mxu0 0.0
  %3058 = vmatprep.subr.mxu0 0.0
  %3059 = vmatpush1.msra.mxu0 0.0
  %3060 = vmatprep.subr.mxu0 0.0
  %3061 = vmatpush1.msra.mxu0 0.0
  %3062 = vmatprep.subr.mxu0 0.0
  %3063 = vmatpush1.msra.mxu0 0.0
  %3064 = vmatprep.subr.mxu0 0.0
  %3065 = vmatpush1.msra.mxu0 0.0
  %3066 = vmatprep.subr.mxu0 0.0
  %3067 = vmatpush1.msra.mxu0 0.0
  %3068 = vmatprep.subr.mxu0 0.0
  %3069 = vmatpush1.msra.mxu0 0.0
  %3070 = vmatprep.subr.mxu0 0.0
  %3071 = vmatpush1.msra.mxu0 0.0
  %3072 = vmatprep.subr.mxu0 0.0
  %3073 = vmatpush1.msra.mxu0 0.0
  %3074 = vmatprep.subr.mxu0 0.0
  %3075 = vmatpush1.msra.mxu0 0.0
  %3076 = vmatprep.subr.mxu0 0.0
  %3077 = vmatpush1.msra.mxu0 0.0
  %3078 = vmatprep.subr.mxu0 0.0
  %3079 = vmatpush1.msra.mxu0 0.0
  %3080 = vmatprep.subr.mxu0 0.0
  %3081 = vmatpush1.msra.mxu0 0.0
  %3082 = vmatprep.subr.mxu0 0.0
  %3083 = vmatpush1.msra.mxu0 0.0
  %3084 = vmatprep.subr.mxu0 0.0
  %3085 = vmatpush1.msra.mxu0 0.0
  %3086 = vmatprep.subr.mxu0 0.0
  %3087 = vmatpush1.msra.mxu0 0.0
  %3088 = vmatprep.subr.mxu0 0.0
  %3089 = vmatpush1.msra.mxu0 0.0
  %3090 = vmatprep.subr.mxu0 0.0
  %3091 = vmatpush1.msra.mxu0 0.0
  %3092 = vmatprep.subr.mxu0 0.0
  %3093 = vmatpush1.msra.mxu0 0.0
  %3094 = vmatprep.subr.mxu0 0.0
  %3095 = vmatpush1.msra.mxu0 0.0
  %3096 = vmatprep.mubr.f32.mxu0 0.0
  %3097 = vmatmul.mubr.f32.gmra.mrb[0].mxu0 %v3030
  %v3098 = vpop.f32.mrb[0].mxu0
  %v3099 = vadd.f32 0.0, %v3098
  %v3100 = vpop.f32.mrb[0].mxu0
  %3101 = vdwg.mxu0
  %v3102 = vadd.f32 %v3028, %v3099
  %v3103 = vmax.f32 %v3102, 0.0
  %v3105 = vsel %vm204, %v3103, 0
  %3107 = vmatprep.subr.mxu0 0.0
  %3108 = vmatpush1.msra.mxu0 %v294
  %3109 = vmatprep.subr.mxu0 0.0
  %3110 = vmatpush1.msra.mxu0 %v296
  %3111 = vmatprep.subr.mxu0 0.0
  %3112 = vmatpush1.msra.mxu0 0.0
  %3113 = vmatprep.subr.mxu0 0.0
  %3114 = vmatpush1.msra.mxu0 0.0
  %3115 = vmatprep.subr.mxu0 0.0
  %3116 = vmatpush1.msra.mxu0 0.0
  %3117 = vmatprep.subr.mxu0 0.0
  %3118 = vmatpush1.msra.mxu0 0.0
  %3119 = vmatprep.subr.mxu0 0.0
  %3120 = vmatpush1.msra.mxu0 0.0
  %3121 = vmatprep.subr.mxu0 0.0
  %3122 = vmatpush1.msra.mxu0 0.0
  %3123 = vmatprep.subr.mxu0 0.0
  %3124 = vmatpush1.msra.mxu0 0.0
  %3125 = vmatprep.subr.mxu0 0.0
  %3126 = vmatpush1.msra.mxu0 0.0
  %3127 = vmatprep.subr.mxu0 0.0
  %3128 = vmatpush1.msra.mxu0 0.0
  %3129 = vmatprep.subr.mxu0 0.0
  %3130 = vmatpush1.msra.mxu0 0.0
  %3131 = vmatprep.subr.mxu0 0.0
  %3132 = vmatpush1.msra.mxu0 0.0
  %3133 = vmatprep.subr.mxu0 0.0
  %3134 = vmatpush1.msra.mxu0 0.0
  %3135 = vmatprep.subr.mxu0 0.0
  %3136 = vmatpush1.msra.mxu0 0.0
  %3137 = vmatprep.subr.mxu0 0.0
  %3138 = vmatpush1.msra.mxu0 0.0
  %3139 = vmatprep.subr.mxu0 0.0
  %3140 = vmatpush1.msra.mxu0 0.0
  %3141 = vmatprep.subr.mxu0 0.0
  %3142 = vmatpush1.msra.mxu0 0.0
  %3143 = vmatprep.subr.mxu0 0.0
  %3144 = vmatpush1.msra.mxu0 0.0
  %3145 = vmatprep.subr.mxu0 0.0
  %3146 = vmatpush1.msra.mxu0 0.0
  %3147 = vmatprep.subr.mxu0 0.0
  %3148 = vmatpush1.msra.mxu0 0.0
  %3149 = vmatprep.subr.mxu0 0.0
  %3150 = vmatpush1.msra.mxu0 0.0
  %3151 = vmatprep.subr.mxu0 0.0
  %3152 = vmatpush1.msra.mxu0 0.0
  %3153 = vmatprep.subr.mxu0 0.0
  %3154 = vmatpush1.msra.mxu0 0.0
  %3155 = vmatprep.subr.mxu0 0.0
  %3156 = vmatpush1.msra.mxu0 0.0
  %3157 = vmatprep.subr.mxu0 0.0
  %3158 = vmatpush1.msra.mxu0 0.0
  %3159 = vmatprep.subr.mxu0 0.0
  %3160 = vmatpush1.msra.mxu0 0.0
  %3161 = vmatprep.subr.mxu0 0.0
  %3162 = vmatpush1.msra.mxu0 0.0
  %3163 = vmatprep.subr.mxu0 0.0
  %3164 = vmatpush1.msra.mxu0 0.0
  %3165 = vmatprep.subr.mxu0 0.0
  %3166 = vmatpush1.msra.mxu0 0.0
  %3167 = vmatprep.subr.mxu0 0.0
  %3168 = vmatpush1.msra.mxu0 0.0
  %3169 = vmatprep.subr.mxu0 0.0
  %3170 = vmatpush1.msra.mxu0 0.0
  %3171 = vmatprep.mubr.f32.mxu0 0.0
  %3172 = vmatmul.mubr.f32.gmra.mrb[0].mxu0 %v3105
  %v3173 = vpop.f32.mrb[0].mxu0
  %v3174 = vadd.f32 %v290, %v3173
  %v3175 = vpop.f32.mrb[0].mxu0
  %3176 = vdwg.mxu0
  %v3177 = vmax.f32 %v3174, 0.0
  %v3178 = vmax.f32 %v3026, %v3177
  %v3179 = vld [vmem:[%s680] sm:$0xff]
  %v3180 = vld [vmem:[#allocation2 + $0x4] sm:$0xff]
  %v3182 = vsel %vm32, %v3179, 0
  %3184 = vmatprep.subr.mxu0 0.0
  %3185 = vmatpush1.msra.mxu0 %v213
  %3186 = vmatprep.subr.mxu0 0.0
  %3187 = vmatpush1.msra.mxu0 0.0
  %3188 = vmatprep.subr.mxu0 0.0
  %3189 = vmatpush1.msra.mxu0 0.0
  %3190 = vmatprep.subr.mxu0 0.0
  %3191 = vmatpush1.msra.mxu0 0.0
  %3192 = vmatprep.subr.mxu0 0.0
  %3193 = vmatpush1.msra.mxu0 0.0
  %3194 = vmatprep.subr.mxu0 0.0
  %3195 = vmatpush1.msra.mxu0 0.0
  %3196 = vmatprep.subr.mxu0 0.0
  %3197 = vmatpush1.msra.mxu0 0.0
  %3198 = vmatprep.subr.mxu0 0.0
  %3199 = vmatpush1.msra.mxu0 0.0
  %3200 = vmatprep.subr.mxu0 0.0
  %3201 = vmatpush1.msra.mxu0 0.0
  %3202 = vmatprep.subr.mxu0 0.0
  %3203 = vmatpush1.msra.mxu0 0.0
  %3204 = vmatprep.subr.mxu0 0.0
  %3205 = vmatpush1.msra.mxu0 0.0
  %3206 = vmatprep.subr.mxu0 0.0
  %3207 = vmatpush1.msra.mxu0 0.0
  %3208 = vmatprep.subr.mxu0 0.0
  %3209 = vmatpush1.msra.mxu0 0.0
  %3210 = vmatprep.subr.mxu0 0.0
  %3211 = vmatpush1.msra.mxu0 0.0
  %3212 = vmatprep.subr.mxu0 0.0
  %3213 = vmatpush1.msra.mxu0 0.0
  %3214 = vmatprep.subr.mxu0 0.0
  %3215 = vmatpush1.msra.mxu0 0.0
  %3216 = vmatprep.subr.mxu0 0.0
  %3217 = vmatpush1.msra.mxu0 0.0
  %3218 = vmatprep.subr.mxu0 0.0
  %3219 = vmatpush1.msra.mxu0 0.0
  %3220 = vmatprep.subr.mxu0 0.0
  %3221 = vmatpush1.msra.mxu0 0.0
  %3222 = vmatprep.subr.mxu0 0.0
  %3223 = vmatpush1.msra.mxu0 0.0
  %3224 = vmatprep.subr.mxu0 0.0
  %3225 = vmatpush1.msra.mxu0 0.0
  %3226 = vmatprep.subr.mxu0 0.0
  %3227 = vmatpush1.msra.mxu0 0.0
  %3228 = vmatprep.subr.mxu0 0.0
  %3229 = vmatpush1.msra.mxu0 0.0
  %3230 = vmatprep.subr.mxu0 0.0
  %3231 = vmatpush1.msra.mxu0 0.0
  %3232 = vmatprep.subr.mxu0 0.0
  %3233 = vmatpush1.msra.mxu0 0.0
  %3234 = vmatprep.subr.mxu0 0.0
  %3235 = vmatpush1.msra.mxu0 0.0
  %3236 = vmatprep.subr.mxu0 0.0
  %3237 = vmatpush1.msra.mxu0 0.0
  %3238 = vmatprep.subr.mxu0 0.0
  %3239 = vmatpush1.msra.mxu0 0.0
  %3240 = vmatprep.subr.mxu0 0.0
  %3241 = vmatpush1.msra.mxu0 0.0
  %3242 = vmatprep.subr.mxu0 0.0
  %3243 = vmatpush1.msra.mxu0 0.0
  %3244 = vmatprep.subr.mxu0 0.0
  %3245 = vmatpush1.msra.mxu0 0.0
  %3246 = vmatprep.subr.mxu0 0.0
  %3247 = vmatpush1.msra.mxu0 0.0
  %3248 = vmatprep.mubr.f32.mxu0 0.0
  %3249 = vmatmul.mubr.f32.gmra.mrb[0].mxu0 %v3182
  %v3250 = vpop.f32.mrb[0].mxu0
  %v3251 = vadd.f32 0.0, %v3250
  %v3252 = vpop.f32.mrb[0].mxu0
  %3253 = vdwg.mxu0
  %v3254 = vadd.f32 %v3180, %v3251
  %v3255 = vmax.f32 %v3254, 0.0
  %v3257 = vsel %vm204, %v3255, 0
  %3259 = vmatprep.subr.mxu0 0.0
  %3260 = vmatpush1.msra.mxu0 %v294
  %3261 = vmatprep.subr.mxu0 0.0
  %3262 = vmatpush1.msra.mxu0 %v296
  %3263 = vmatprep.subr.mxu0 0.0
  %3264 = vmatpush1.msra.mxu0 0.0
  %3265 = vmatprep.subr.mxu0 0.0
  %3266 = vmatpush1.msra.mxu0 0.0
  %3267 = vmatprep.subr.mxu0 0.0
  %3268 = vmatpush1.msra.mxu0 0.0
  %3269 = vmatprep.subr.mxu0 0.0
  %3270 = vmatpush1.msra.mxu0 0.0
  %3271 = vmatprep.subr.mxu0 0.0
  %3272 = vmatpush1.msra.mxu0 0.0
  %3273 = vmatprep.subr.mxu0 0.0
  %3274 = vmatpush1.msra.mxu0 0.0
  %3275 = vmatprep.subr.mxu0 0.0
  %3276 = vmatpush1.msra.mxu0 0.0
  %3277 = vmatprep.subr.mxu0 0.0
  %3278 = vmatpush1.msra.mxu0 0.0
  %3279 = vmatprep.subr.mxu0 0.0
  %3280 = vmatpush1.msra.mxu0 0.0
  %3281 = vmatprep.subr.mxu0 0.0
  %3282 = vmatpush1.msra.mxu0 0.0
  %3283 = vmatprep.subr.mxu0 0.0
  %3284 = vmatpush1.msra.mxu0 0.0
  %3285 = vmatprep.subr.mxu0 0.0
  %3286 = vmatpush1.msra.mxu0 0.0
  %3287 = vmatprep.subr.mxu0 0.0
  %3288 = vmatpush1.msra.mxu0 0.0
  %3289 = vmatprep.subr.mxu0 0.0
  %3290 = vmatpush1.msra.mxu0 0.0
  %3291 = vmatprep.subr.mxu0 0.0
  %3292 = vmatpush1.msra.mxu0 0.0
  %3293 = vmatprep.subr.mxu0 0.0
  %3294 = vmatpush1.msra.mxu0 0.0
  %3295 = vmatprep.subr.mxu0 0.0
  %3296 = vmatpush1.msra.mxu0 0.0
  %3297 = vmatprep.subr.mxu0 0.0
  %3298 = vmatpush1.msra.mxu0 0.0
  %3299 = vmatprep.subr.mxu0 0.0
  %3300 = vmatpush1.msra.mxu0 0.0
  %3301 = vmatprep.subr.mxu0 0.0
  %3302 = vmatpush1.msra.mxu0 0.0
  %3303 = vmatprep.subr.mxu0 0.0
  %3304 = vmatpush1.msra.mxu0 0.0
  %3305 = vmatprep.subr.mxu0 0.0
  %3306 = vmatpush1.msra.mxu0 0.0
  %3307 = vmatprep.subr.mxu0 0.0
  %3308 = vmatpush1.msra.mxu0 0.0
  %3309 = vmatprep.subr.mxu0 0.0
  %3310 = vmatpush1.msra.mxu0 0.0
  %3311 = vmatprep.subr.mxu0 0.0
  %3312 = vmatpush1.msra.mxu0 0.0
  %3313 = vmatprep.subr.mxu0 0.0
  %3314 = vmatpush1.msra.mxu0 0.0
  %3315 = vmatprep.subr.mxu0 0.0
  %3316 = vmatpush1.msra.mxu0 0.0
  %3317 = vmatprep.subr.mxu0 0.0
  %3318 = vmatpush1.msra.mxu0 0.0
  %3319 = vmatprep.subr.mxu0 0.0
  %3320 = vmatpush1.msra.mxu0 0.0
  %3321 = vmatprep.subr.mxu0 0.0
  %3322 = vmatpush1.msra.mxu0 0.0
  %3323 = vmatprep.mubr.f32.mxu0 0.0
  %3324 = vmatmul.mubr.f32.gmra.mrb[0].mxu0 %v3257
  %v3325 = vpop.f32.mrb[0].mxu0
  %v3326 = vadd.f32 %v290, %v3325
  %v3327 = vpop.f32.mrb[0].mxu0
  %3328 = vdwg.mxu0
  %v3329 = vmax.f32 %v3326, 0.0
  %v3330 = vmax.f32 %v3178, %v3329
  %v3331 = vld [vmem:[%s833] sm:$0xff]
  %v3332 = vld [vmem:[#allocation2 + $0x5] sm:$0xff]
  %v3334 = vsel %vm32, %v3331, 0
  %3336 = vmatprep.subr.mxu0 0.0
  %3337 = vmatpush1.msra.mxu0 %v213
  %3338 = vmatprep.subr.mxu0 0.0
  %3339 = vmatpush1.msra.mxu0 0.0
  %3340 = vmatprep.subr.mxu0 0.0
  %3341 = vmatpush1.msra.mxu0 0.0
  %3342 = vmatprep.subr.mxu0 0.0
  %3343 = vmatpush1.msra.mxu0 0.0
  %3344 = vmatprep.subr.mxu0 0.0
  %3345 = vmatpush1.msra.mxu0 0.0
  %3346 = vmatprep.subr.mxu0 0.0
  %3347 = vmatpush1.msra.mxu0 0.0
  %3348 = vmatprep.subr.mxu0 0.0
  %3349 = vmatpush1.msra.mxu0 0.0
  %3350 = vmatprep.subr.mxu0 0.0
  %3351 = vmatpush1.msra.mxu0 0.0
  %3352 = vmatprep.subr.mxu0 0.0
  %3353 = vmatpush1.msra.mxu0 0.0
  %3354 = vmatprep.subr.mxu0 0.0
  %3355 = vmatpush1.msra.mxu0 0.0
  %3356 = vmatprep.subr.mxu0 0.0
  %3357 = vmatpush1.msra.mxu0 0.0
  %3358 = vmatprep.subr.mxu0 0.0
  %3359 = vmatpush1.msra.mxu0 0.0
  %3360 = vmatprep.subr.mxu0 0.0
  %3361 = vmatpush1.msra.mxu0 0.0
  %3362 = vmatprep.subr.mxu0 0.0
  %3363 = vmatpush1.msra.mxu0 0.0
  %3364 = vmatprep.subr.mxu0 0.0
  %3365 = vmatpush1.msra.mxu0 0.0
  %3366 = vmatprep.subr.mxu0 0.0
  %3367 = vmatpush1.msra.mxu0 0.0
  %3368 = vmatprep.subr.mxu0 0.0
  %3369 = vmatpush1.msra.mxu0 0.0
  %3370 = vmatprep.subr.mxu0 0.0
  %3371 = vmatpush1.msra.mxu0 0.0
  %3372 = vmatprep.subr.mxu0 0.0
  %3373 = vmatpush1.msra.mxu0 0.0
  %3374 = vmatprep.subr.mxu0 0.0
  %3375 = vmatpush1.msra.mxu0 0.0
  %3376 = vmatprep.subr.mxu0 0.0
  %3377 = vmatpush1.msra.mxu0 0.0
  %3378 = vmatprep.subr.mxu0 0.0
  %3379 = vmatpush1.msra.mxu0 0.0
  %3380 = vmatprep.subr.mxu0 0.0
  %3381 = vmatpush1.msra.mxu0 0.0
  %3382 = vmatprep.subr.mxu0 0.0
  %3383 = vmatpush1.msra.mxu0 0.0
  %3384 = vmatprep.subr.mxu0 0.0
  %3385 = vmatpush1.msra.mxu0 0.0
  %3386 = vmatprep.subr.mxu0 0.0
  %3387 = vmatpush1.msra.mxu0 0.0
  %3388 = vmatprep.subr.mxu0 0.0
  %3389 = vmatpush1.msra.mxu0 0.0
  %3390 = vmatprep.subr.mxu0 0.0
  %3391 = vmatpush1.msra.mxu0 0.0
  %3392 = vmatprep.subr.mxu0 0.0
  %3393 = vmatpush1.msra.mxu0 0.0
  %3394 = vmatprep.subr.mxu0 0.0
  %3395 = vmatpush1.msra.mxu0 0.0
  %3396 = vmatprep.subr.mxu0 0.0
  %3397 = vmatpush1.msra.mxu0 0.0
  %3398 = vmatprep.subr.mxu0 0.0
  %3399 = vmatpush1.msra.mxu0 0.0
  %3400 = vmatprep.mubr.f32.mxu0 0.0
  %3401 = vmatmul.mubr.f32.gmra.mrb[0].mxu0 %v3334
  %v3402 = vpop.f32.mrb[0].mxu0
  %v3403 = vadd.f32 0.0, %v3402
  %v3404 = vpop.f32.mrb[0].mxu0
  %3405 = vdwg.mxu0
  %v3406 = vadd.f32 %v3332, %v3403
  %v3407 = vmax.f32 %v3406, 0.0
  %v3409 = vsel %vm204, %v3407, 0
  %3411 = vmatprep.subr.mxu0 0.0
  %3412 = vmatpush1.msra.mxu0 %v294
  %3413 = vmatprep.subr.mxu0 0.0
  %3414 = vmatpush1.msra.mxu0 %v296
  %3415 = vmatprep.subr.mxu0 0.0
  %3416 = vmatpush1.msra.mxu0 0.0
  %3417 = vmatprep.subr.mxu0 0.0
  %3418 = vmatpush1.msra.mxu0 0.0
  %3419 = vmatprep.subr.mxu0 0.0
  %3420 = vmatpush1.msra.mxu0 0.0
  %3421 = vmatprep.subr.mxu0 0.0
  %3422 = vmatpush1.msra.mxu0 0.0
  %3423 = vmatprep.subr.mxu0 0.0
  %3424 = vmatpush1.msra.mxu0 0.0
  %3425 = vmatprep.subr.mxu0 0.0
  %3426 = vmatpush1.msra.mxu0 0.0
  %3427 = vmatprep.subr.mxu0 0.0
  %3428 = vmatpush1.msra.mxu0 0.0
  %3429 = vmatprep.subr.mxu0 0.0
  %3430 = vmatpush1.msra.mxu0 0.0
  %3431 = vmatprep.subr.mxu0 0.0
  %3432 = vmatpush1.msra.mxu0 0.0
  %3433 = vmatprep.subr.mxu0 0.0
  %3434 = vmatpush1.msra.mxu0 0.0
  %3435 = vmatprep.subr.mxu0 0.0
  %3436 = vmatpush1.msra.mxu0 0.0
  %3437 = vmatprep.subr.mxu0 0.0
  %3438 = vmatpush1.msra.mxu0 0.0
  %3439 = vmatprep.subr.mxu0 0.0
  %3440 = vmatpush1.msra.mxu0 0.0
  %3441 = vmatprep.subr.mxu0 0.0
  %3442 = vmatpush1.msra.mxu0 0.0
  %3443 = vmatprep.subr.mxu0 0.0
  %3444 = vmatpush1.msra.mxu0 0.0
  %3445 = vmatprep.subr.mxu0 0.0
  %3446 = vmatpush1.msra.mxu0 0.0
  %3447 = vmatprep.subr.mxu0 0.0
  %3448 = vmatpush1.msra.mxu0 0.0
  %3449 = vmatprep.subr.mxu0 0.0
  %3450 = vmatpush1.msra.mxu0 0.0
  %3451 = vmatprep.subr.mxu0 0.0
  %3452 = vmatpush1.msra.mxu0 0.0
  %3453 = vmatprep.subr.mxu0 0.0
  %3454 = vmatpush1.msra.mxu0 0.0
  %3455 = vmatprep.subr.mxu0 0.0
  %3456 = vmatpush1.msra.mxu0 0.0
  %3457 = vmatprep.subr.mxu0 0.0
  %3458 = vmatpush1.msra.mxu0 0.0
  %3459 = vmatprep.subr.mxu0 0.0
  %3460 = vmatpush1.msra.mxu0 0.0
  %3461 = vmatprep.subr.mxu0 0.0
  %3462 = vmatpush1.msra.mxu0 0.0
  %3463 = vmatprep.subr.mxu0 0.0
  %3464 = vmatpush1.msra.mxu0 0.0
  %3465 = vmatprep.subr.mxu0 0.0
  %3466 = vmatpush1.msra.mxu0 0.0
  %3467 = vmatprep.subr.mxu0 0.0
  %3468 = vmatpush1.msra.mxu0 0.0
  %3469 = vmatprep.subr.mxu0 0.0
  %3470 = vmatpush1.msra.mxu0 0.0
  %3471 = vmatprep.subr.mxu0 0.0
  %3472 = vmatpush1.msra.mxu0 0.0
  %3473 = vmatprep.subr.mxu0 0.0
  %3474 = vmatpush1.msra.mxu0 0.0
  %3475 = vmatprep.mubr.f32.mxu0 0.0
  %3476 = vmatmul.mubr.f32.gmra.mrb[0].mxu0 %v3409
  %v3477 = vpop.f32.mrb[0].mxu0
  %v3478 = vadd.f32 %v290, %v3477
  %v3479 = vpop.f32.mrb[0].mxu0
  %3480 = vdwg.mxu0
  %v3481 = vmax.f32 %v3478, 0.0
  %v3482 = vmax.f32 %v3330, %v3481
  %v3483 = vld [vmem:[%s986] sm:$0xff]
  %v3484 = vld [vmem:[#allocation2 + $0x6] sm:$0xff]
  %v3486 = vsel %vm32, %v3483, 0
  %3488 = vmatprep.subr.mxu0 0.0
  %3489 = vmatpush1.msra.mxu0 %v213
  %3490 = vmatprep.subr.mxu0 0.0
  %3491 = vmatpush1.msra.mxu0 0.0
  %3492 = vmatprep.subr.mxu0 0.0
  %3493 = vmatpush1.msra.mxu0 0.0
  %3494 = vmatprep.subr.mxu0 0.0
  %3495 = vmatpush1.msra.mxu0 0.0
  %3496 = vmatprep.subr.mxu0 0.0
  %3497 = vmatpush1.msra.mxu0 0.0
  %3498 = vmatprep.subr.mxu0 0.0
  %3499 = vmatpush1.msra.mxu0 0.0
  %3500 = vmatprep.subr.mxu0 0.0
  %3501 = vmatpush1.msra.mxu0 0.0
  %3502 = vmatprep.subr.mxu0 0.0
  %3503 = vmatpush1.msra.mxu0 0.0
  %3504 = vmatprep.subr.mxu0 0.0
  %3505 = vmatpush1.msra.mxu0 0.0
  %3506 = vmatprep.subr.mxu0 0.0
  %3507 = vmatpush1.msra.mxu0 0.0
  %3508 = vmatprep.subr.mxu0 0.0
  %3509 = vmatpush1.msra.mxu0 0.0
  %3510 = vmatprep.subr.mxu0 0.0
  %3511 = vmatpush1.msra.mxu0 0.0
  %3512 = vmatprep.subr.mxu0 0.0
  %3513 = vmatpush1.msra.mxu0 0.0
  %3514 = vmatprep.subr.mxu0 0.0
  %3515 = vmatpush1.msra.mxu0 0.0
  %3516 = vmatprep.subr.mxu0 0.0
  %3517 = vmatpush1.msra.mxu0 0.0
  %3518 = vmatprep.subr.mxu0 0.0
  %3519 = vmatpush1.msra.mxu0 0.0
  %3520 = vmatprep.subr.mxu0 0.0
  %3521 = vmatpush1.msra.mxu0 0.0
  %3522 = vmatprep.subr.mxu0 0.0
  %3523 = vmatpush1.msra.mxu0 0.0
  %3524 = vmatprep.subr.mxu0 0.0
  %3525 = vmatpush1.msra.mxu0 0.0
  %3526 = vmatprep.subr.mxu0 0.0
  %3527 = vmatpush1.msra.mxu0 0.0
  %3528 = vmatprep.subr.mxu0 0.0
  %3529 = vmatpush1.msra.mxu0 0.0
  %3530 = vmatprep.subr.mxu0 0.0
  %3531 = vmatpush1.msra.mxu0 0.0
  %3532 = vmatprep.subr.mxu0 0.0
  %3533 = vmatpush1.msra.mxu0 0.0
  %3534 = vmatprep.subr.mxu0 0.0
  %3535 = vmatpush1.msra.mxu0 0.0
  %3536 = vmatprep.subr.mxu0 0.0
  %3537 = vmatpush1.msra.mxu0 0.0
  %3538 = vmatprep.subr.mxu0 0.0
  %3539 = vmatpush1.msra.mxu0 0.0
  %3540 = vmatprep.subr.mxu0 0.0
  %3541 = vmatpush1.msra.mxu0 0.0
  %3542 = vmatprep.subr.mxu0 0.0
  %3543 = vmatpush1.msra.mxu0 0.0
  %3544 = vmatprep.subr.mxu0 0.0
  %3545 = vmatpush1.msra.mxu0 0.0
  %3546 = vmatprep.subr.mxu0 0.0
  %3547 = vmatpush1.msra.mxu0 0.0
  %3548 = vmatprep.subr.mxu0 0.0
  %3549 = vmatpush1.msra.mxu0 0.0
  %3550 = vmatprep.subr.mxu0 0.0
  %3551 = vmatpush1.msra.mxu0 0.0
  %3552 = vmatprep.mubr.f32.mxu0 0.0
  %3553 = vmatmul.mubr.f32.gmra.mrb[0].mxu0 %v3486
  %v3554 = vpop.f32.mrb[0].mxu0
  %v3555 = vadd.f32 0.0, %v3554
  %v3556 = vpop.f32.mrb[0].mxu0
  %3557 = vdwg.mxu0
  %v3558 = vadd.f32 %v3484, %v3555
  %v3559 = vmax.f32 %v3558, 0.0
  %v3561 = vsel %vm204, %v3559, 0
  %3563 = vmatprep.subr.mxu0 0.0
  %3564 = vmatpush1.msra.mxu0 %v294
  %3565 = vmatprep.subr.mxu0 0.0
  %3566 = vmatpush1.msra.mxu0 %v296
  %3567 = vmatprep.subr.mxu0 0.0
  %3568 = vmatpush1.msra.mxu0 0.0
  %3569 = vmatprep.subr.mxu0 0.0
  %3570 = vmatpush1.msra.mxu0 0.0
  %3571 = vmatprep.subr.mxu0 0.0
  %3572 = vmatpush1.msra.mxu0 0.0
  %3573 = vmatprep.subr.mxu0 0.0
  %3574 = vmatpush1.msra.mxu0 0.0
  %3575 = vmatprep.subr.mxu0 0.0
  %3576 = vmatpush1.msra.mxu0 0.0
  %3577 = vmatprep.subr.mxu0 0.0
  %3578 = vmatpush1.msra.mxu0 0.0
  %3579 = vmatprep.subr.mxu0 0.0
  %3580 = vmatpush1.msra.mxu0 0.0
  %3581 = vmatprep.subr.mxu0 0.0
  %3582 = vmatpush1.msra.mxu0 0.0
  %3583 = vmatprep.subr.mxu0 0.0
  %3584 = vmatpush1.msra.mxu0 0.0
  %3585 = vmatprep.subr.mxu0 0.0
  %3586 = vmatpush1.msra.mxu0 0.0
  %3587 = vmatprep.subr.mxu0 0.0
  %3588 = vmatpush1.msra.mxu0 0.0
  %3589 = vmatprep.subr.mxu0 0.0
  %3590 = vmatpush1.msra.mxu0 0.0
  %3591 = vmatprep.subr.mxu0 0.0
  %3592 = vmatpush1.msra.mxu0 0.0
  %3593 = vmatprep.subr.mxu0 0.0
  %3594 = vmatpush1.msra.mxu0 0.0
  %3595 = vmatprep.subr.mxu0 0.0
  %3596 = vmatpush1.msra.mxu0 0.0
  %3597 = vmatprep.subr.mxu0 0.0
  %3598 = vmatpush1.msra.mxu0 0.0
  %3599 = vmatprep.subr.mxu0 0.0
  %3600 = vmatpush1.msra.mxu0 0.0
  %3601 = vmatprep.subr.mxu0 0.0
  %3602 = vmatpush1.msra.mxu0 0.0
  %3603 = vmatprep.subr.mxu0 0.0
  %3604 = vmatpush1.msra.mxu0 0.0
  %3605 = vmatprep.subr.mxu0 0.0
  %3606 = vmatpush1.msra.mxu0 0.0
  %3607 = vmatprep.subr.mxu0 0.0
  %3608 = vmatpush1.msra.mxu0 0.0
  %3609 = vmatprep.subr.mxu0 0.0
  %3610 = vmatpush1.msra.mxu0 0.0
  %3611 = vmatprep.subr.mxu0 0.0
  %3612 = vmatpush1.msra.mxu0 0.0
  %3613 = vmatprep.subr.mxu0 0.0
  %3614 = vmatpush1.msra.mxu0 0.0
  %3615 = vmatprep.subr.mxu0 0.0
  %3616 = vmatpush1.msra.mxu0 0.0
  %3617 = vmatprep.subr.mxu0 0.0
  %3618 = vmatpush1.msra.mxu0 0.0
  %3619 = vmatprep.subr.mxu0 0.0
  %3620 = vmatpush1.msra.mxu0 0.0
  %3621 = vmatprep.subr.mxu0 0.0
  %3622 = vmatpush1.msra.mxu0 0.0
  %3623 = vmatprep.subr.mxu0 0.0
  %3624 = vmatpush1.msra.mxu0 0.0
  %3625 = vmatprep.subr.mxu0 0.0
  %3626 = vmatpush1.msra.mxu0 0.0
  %3627 = vmatprep.mubr.f32.mxu0 0.0
  %3628 = vmatmul.mubr.f32.gmra.mrb[0].mxu0 %v3561
  %v3629 = vpop.f32.mrb[0].mxu0
  %v3630 = vadd.f32 %v290, %v3629
  %v3631 = vpop.f32.mrb[0].mxu0
  %3632 = vdwg.mxu0
  %v3633 = vmax.f32 %v3630, 0.0
  %v3634 = vmax.f32 %v3482, %v3633
  %v3635 = vld [vmem:[%s1139] sm:$0xff]
  %v3636 = vld [vmem:[#allocation2 + $0x7] sm:$0xff]
  %v3638 = vsel %vm32, %v3635, 0
  %3640 = vmatprep.subr.mxu0 0.0
  %3641 = vmatpush1.msra.mxu0 %v213
  %3642 = vmatprep.subr.mxu0 0.0
  %3643 = vmatpush1.msra.mxu0 0.0
  %3644 = vmatprep.subr.mxu0 0.0
  %3645 = vmatpush1.msra.mxu0 0.0
  %3646 = vmatprep.subr.mxu0 0.0
  %3647 = vmatpush1.msra.mxu0 0.0
  %3648 = vmatprep.subr.mxu0 0.0
  %3649 = vmatpush1.msra.mxu0 0.0
  %3650 = vmatprep.subr.mxu0 0.0
  %3651 = vmatpush1.msra.mxu0 0.0
  %3652 = vmatprep.subr.mxu0 0.0
  %3653 = vmatpush1.msra.mxu0 0.0
  %3654 = vmatprep.subr.mxu0 0.0
  %3655 = vmatpush1.msra.mxu0 0.0
  %3656 = vmatprep.subr.mxu0 0.0
  %3657 = vmatpush1.msra.mxu0 0.0
  %3658 = vmatprep.subr.mxu0 0.0
  %3659 = vmatpush1.msra.mxu0 0.0
  %3660 = vmatprep.subr.mxu0 0.0
  %3661 = vmatpush1.msra.mxu0 0.0
  %3662 = vmatprep.subr.mxu0 0.0
  %3663 = vmatpush1.msra.mxu0 0.0
  %3664 = vmatprep.subr.mxu0 0.0
  %3665 = vmatpush1.msra.mxu0 0.0
  %3666 = vmatprep.subr.mxu0 0.0
  %3667 = vmatpush1.msra.mxu0 0.0
  %3668 = vmatprep.subr.mxu0 0.0
  %3669 = vmatpush1.msra.mxu0 0.0
  %3670 = vmatprep.subr.mxu0 0.0
  %3671 = vmatpush1.msra.mxu0 0.0
  %3672 = vmatprep.subr.mxu0 0.0
  %3673 = vmatpush1.msra.mxu0 0.0
  %3674 = vmatprep.subr.mxu0 0.0
  %3675 = vmatpush1.msra.mxu0 0.0
  %3676 = vmatprep.subr.mxu0 0.0
  %3677 = vmatpush1.msra.mxu0 0.0
  %3678 = vmatprep.subr.mxu0 0.0
  %3679 = vmatpush1.msra.mxu0 0.0
  %3680 = vmatprep.subr.mxu0 0.0
  %3681 = vmatpush1.msra.mxu0 0.0
  %3682 = vmatprep.subr.mxu0 0.0
  %3683 = vmatpush1.msra.mxu0 0.0
  %3684 = vmatprep.subr.mxu0 0.0
  %3685 = vmatpush1.msra.mxu0 0.0
  %3686 = vmatprep.subr.mxu0 0.0
  %3687 = vmatpush1.msra.mxu0 0.0
  %3688 = vmatprep.subr.mxu0 0.0
  %3689 = vmatpush1.msra.mxu0 0.0
  %3690 = vmatprep.subr.mxu0 0.0
  %3691 = vmatpush1.msra.mxu0 0.0
  %3692 = vmatprep.subr.mxu0 0.0
  %3693 = vmatpush1.msra.mxu0 0.0
  %3694 = vmatprep.subr.mxu0 0.0
  %3695 = vmatpush1.msra.mxu0 0.0
  %3696 = vmatprep.subr.mxu0 0.0
  %3697 = vmatpush1.msra.mxu0 0.0
  %3698 = vmatprep.subr.mxu0 0.0
  %3699 = vmatpush1.msra.mxu0 0.0
  %3700 = vmatprep.subr.mxu0 0.0
  %3701 = vmatpush1.msra.mxu0 0.0
  %3702 = vmatprep.subr.mxu0 0.0
  %3703 = vmatpush1.msra.mxu0 0.0
  %3704 = vmatprep.mubr.f32.mxu0 0.0
  %3705 = vmatmul.mubr.f32.gmra.mrb[0].mxu0 %v3638
  %v3706 = vpop.f32.mrb[0].mxu0
  %v3707 = vadd.f32 0.0, %v3706
  %v3708 = vpop.f32.mrb[0].mxu0
  %3709 = vdwg.mxu0
  %v3710 = vadd.f32 %v3636, %v3707
  %v3711 = vmax.f32 %v3710, 0.0
  %v3713 = vsel %vm204, %v3711, 0
  %3715 = vmatprep.subr.mxu0 0.0
  %3716 = vmatpush1.msra.mxu0 %v294
  %3717 = vmatprep.subr.mxu0 0.0
  %3718 = vmatpush1.msra.mxu0 %v296
  %3719 = vmatprep.subr.mxu0 0.0
  %3720 = vmatpush1.msra.mxu0 0.0
  %3721 = vmatprep.subr.mxu0 0.0
  %3722 = vmatpush1.msra.mxu0 0.0
  %3723 = vmatprep.subr.mxu0 0.0
  %3724 = vmatpush1.msra.mxu0 0.0
  %3725 = vmatprep.subr.mxu0 0.0
  %3726 = vmatpush1.msra.mxu0 0.0
  %3727 = vmatprep.subr.mxu0 0.0
  %3728 = vmatpush1.msra.mxu0 0.0
  %3729 = vmatprep.subr.mxu0 0.0
  %3730 = vmatpush1.msra.mxu0 0.0
  %3731 = vmatprep.subr.mxu0 0.0
  %3732 = vmatpush1.msra.mxu0 0.0
  %3733 = vmatprep.subr.mxu0 0.0
  %3734 = vmatpush1.msra.mxu0 0.0
  %3735 = vmatprep.subr.mxu0 0.0
  %3736 = vmatpush1.msra.mxu0 0.0
  %3737 = vmatprep.subr.mxu0 0.0
  %3738 = vmatpush1.msra.mxu0 0.0
  %3739 = vmatprep.subr.mxu0 0.0
  %3740 = vmatpush1.msra.mxu0 0.0
  %3741 = vmatprep.subr.mxu0 0.0
  %3742 = vmatpush1.msra.mxu0 0.0
  %3743 = vmatprep.subr.mxu0 0.0
  %3744 = vmatpush1.msra.mxu0 0.0
  %3745 = vmatprep.subr.mxu0 0.0
  %3746 = vmatpush1.msra.mxu0 0.0
  %3747 = vmatprep.subr.mxu0 0.0
  %3748 = vmatpush1.msra.mxu0 0.0
  %3749 = vmatprep.subr.mxu0 0.0
  %3750 = vmatpush1.msra.mxu0 0.0
  %3751 = vmatprep.subr.mxu0 0.0
  %3752 = vmatpush1.msra.mxu0 0.0
  %3753 = vmatprep.subr.mxu0 0.0
  %3754 = vmatpush1.msra.mxu0 0.0
  %3755 = vmatprep.subr.mxu0 0.0
  %3756 = vmatpush1.msra.mxu0 0.0
  %3757 = vmatprep.subr.mxu0 0.0
  %3758 = vmatpush1.msra.mxu0 0.0
  %3759 = vmatprep.subr.mxu0 0.0
  %3760 = vmatpush1.msra.mxu0 0.0
  %3761 = vmatprep.subr.mxu0 0.0
  %3762 = vmatpush1.msra.mxu0 0.0
  %3763 = vmatprep.subr.mxu0 0.0
  %3764 = vmatpush1.msra.mxu0 0.0
  %3765 = vmatprep.subr.mxu0 0.0
  %3766 = vmatpush1.msra.mxu0 0.0
  %3767 = vmatprep.subr.mxu0 0.0
  %3768 = vmatpush1.msra.mxu0 0.0
  %3769 = vmatprep.subr.mxu0 0.0
  %3770 = vmatpush1.msra.mxu0 0.0
  %3771 = vmatprep.subr.mxu0 0.0
  %3772 = vmatpush1.msra.mxu0 0.0
  %3773 = vmatprep.subr.mxu0 0.0
  %3774 = vmatpush1.msra.mxu0 0.0
  %3775 = vmatprep.subr.mxu0 0.0
  %3776 = vmatpush1.msra.mxu0 0.0
  %3777 = vmatprep.subr.mxu0 0.0
  %3778 = vmatpush1.msra.mxu0 0.0
  %3779 = vmatprep.mubr.f32.mxu0 0.0
  %3780 = vmatmul.mubr.f32.gmra.mrb[0].mxu0 %v3713
  %v3781 = vpop.f32.mrb[0].mxu0
  %v3782 = vadd.f32 %v290, %v3781
  %v3783 = vpop.f32.mrb[0].mxu0
  %3784 = vdwg.mxu0
  %v3785 = vmax.f32 %v3782, 0.0
  %v3786 = vmax.f32 %v3634, %v3785
  %v3787 = vmul.f32 %v2717, %v1295
  %v3788 = vadd.f32 %v189, %v3787
  %v3790 = vsel %vm1316, %v3786, 0
  %3792 = vmatprep.subr.mxu0 0.0
  %3793 = vmatpush1.msra.mxu0 %v1305
  %3794 = vmatprep.subr.mxu0 0.0
  %3795 = vmatpush1.msra.mxu0 %v1307
  %3796 = vmatprep.subr.mxu0 0.0
  %3797 = vmatpush1.msra.mxu0 %v1309
  %3798 = vmatprep.subr.mxu0 0.0
  %3799 = vmatpush1.msra.mxu0 %v1311
  %3800 = vmatprep.subr.mxu0 0.0
  %3801 = vmatpush1.msra.mxu0 0.0
  %3802 = vmatprep.subr.mxu0 0.0
  %3803 = vmatpush1.msra.mxu0 0.0
  %3804 = vmatprep.subr.mxu0 0.0
  %3805 = vmatpush1.msra.mxu0 0.0
  %3806 = vmatprep.subr.mxu0 0.0
  %3807 = vmatpush1.msra.mxu0 0.0
  %3808 = vmatprep.subr.mxu0 0.0
  %3809 = vmatpush1.msra.mxu0 0.0
  %3810 = vmatprep.subr.mxu0 0.0
  %3811 = vmatpush1.msra.mxu0 0.0
  %3812 = vmatprep.subr.mxu0 0.0
  %3813 = vmatpush1.msra.mxu0 0.0
  %3814 = vmatprep.subr.mxu0 0.0
  %3815 = vmatpush1.msra.mxu0 0.0
  %3816 = vmatprep.subr.mxu0 0.0
  %3817 = vmatpush1.msra.mxu0 0.0
  %3818 = vmatprep.subr.mxu0 0.0
  %3819 = vmatpush1.msra.mxu0 0.0
  %3820 = vmatprep.subr.mxu0 0.0
  %3821 = vmatpush1.msra.mxu0 0.0
  %3822 = vmatprep.subr.mxu0 0.0
  %3823 = vmatpush1.msra.mxu0 0.0
  %3824 = vmatprep.subr.mxu0 0.0
  %3825 = vmatpush1.msra.mxu0 0.0
  %3826 = vmatprep.subr.mxu0 0.0
  %3827 = vmatpush1.msra.mxu0 0.0
  %3828 = vmatprep.subr.mxu0 0.0
  %3829 = vmatpush1.msra.mxu0 0.0
  %3830 = vmatprep.subr.mxu0 0.0
  %3831 = vmatpush1.msra.mxu0 0.0
  %3832 = vmatprep.subr.mxu0 0.0
  %3833 = vmatpush1.msra.mxu0 0.0
  %3834 = vmatprep.subr.mxu0 0.0
  %3835 = vmatpush1.msra.mxu0 0.0
  %3836 = vmatprep.subr.mxu0 0.0
  %3837 = vmatpush1.msra.mxu0 0.0
  %3838 = vmatprep.subr.mxu0 0.0
  %3839 = vmatpush1.msra.mxu0 0.0
  %3840 = vmatprep.subr.mxu0 0.0
  %3841 = vmatpush1.msra.mxu0 0.0
  %3842 = vmatprep.subr.mxu0 0.0
  %3843 = vmatpush1.msra.mxu0 0.0
  %3844 = vmatprep.subr.mxu0 0.0
  %3845 = vmatpush1.msra.mxu0 0.0
  %3846 = vmatprep.subr.mxu0 0.0
  %3847 = vmatpush1.msra.mxu0 0.0
  %3848 = vmatprep.subr.mxu0 0.0
  %3849 = vmatpush1.msra.mxu0 0.0
  %3850 = vmatprep.subr.mxu0 0.0
  %3851 = vmatpush1.msra.mxu0 0.0
  %3852 = vmatprep.subr.mxu0 0.0
  %3853 = vmatpush1.msra.mxu0 0.0
  %3854 = vmatprep.subr.mxu0 0.0
  %3855 = vmatpush1.msra.mxu0 0.0
  %3856 = vmatprep.mubr.f32.mxu0 0.0
  %3857 = vmatmul.mubr.f32.gmra.mrb[0].mxu0 %v3790
  %v3858 = vpop.f32.mrb[0].mxu0
  %v3859 = vadd.f32 0.0, %v3858
  %v3860 = vpop.f32.mrb[0].mxu0
  %3861 = vdwg.mxu0
  %v3862 = vadd.f32 %v3788, %v3859
  %v3863 = vmax.f32 %v3862, 0.0
  %v3865 = vsel %vm204, %v3863, 0
  %3867 = vmatprep.subr.mxu0 0.0
  %3868 = vmatpush1.msra.mxu0 %v1401
  %3869 = vmatprep.subr.mxu0 0.0
  %3870 = vmatpush1.msra.mxu0 %v1403
  %3871 = vmatprep.subr.mxu0 0.0
  %3872 = vmatpush1.msra.mxu0 0.0
  %3873 = vmatprep.subr.mxu0 0.0
  %3874 = vmatpush1.msra.mxu0 0.0
  %3875 = vmatprep.subr.mxu0 0.0
  %3876 = vmatpush1.msra.mxu0 0.0
  %3877 = vmatprep.subr.mxu0 0.0
  %3878 = vmatpush1.msra.mxu0 0.0
  %3879 = vmatprep.subr.mxu0 0.0
  %3880 = vmatpush1.msra.mxu0 0.0
  %3881 = vmatprep.subr.mxu0 0.0
  %3882 = vmatpush1.msra.mxu0 0.0
  %3883 = vmatprep.subr.mxu0 0.0
  %3884 = vmatpush1.msra.mxu0 0.0
  %3885 = vmatprep.subr.mxu0 0.0
  %3886 = vmatpush1.msra.mxu0 0.0
  %3887 = vmatprep.subr.mxu0 0.0
  %3888 = vmatpush1.msra.mxu0 0.0
  %3889 = vmatprep.subr.mxu0 0.0
  %3890 = vmatpush1.msra.mxu0 0.0
  %3891 = vmatprep.subr.mxu0 0.0
  %3892 = vmatpush1.msra.mxu0 0.0
  %3893 = vmatprep.subr.mxu0 0.0
  %3894 = vmatpush1.msra.mxu0 0.0
  %3895 = vmatprep.subr.mxu0 0.0
  %3896 = vmatpush1.msra.mxu0 0.0
  %3897 = vmatprep.subr.mxu0 0.0
  %3898 = vmatpush1.msra.mxu0 0.0
  %3899 = vmatprep.subr.mxu0 0.0
  %3900 = vmatpush1.msra.mxu0 0.0
  %3901 = vmatprep.subr.mxu0 0.0
  %3902 = vmatpush1.msra.mxu0 0.0
  %3903 = vmatprep.subr.mxu0 0.0
  %3904 = vmatpush1.msra.mxu0 0.0
  %3905 = vmatprep.subr.mxu0 0.0
  %3906 = vmatpush1.msra.mxu0 0.0
  %3907 = vmatprep.subr.mxu0 0.0
  %3908 = vmatpush1.msra.mxu0 0.0
  %3909 = vmatprep.subr.mxu0 0.0
  %3910 = vmatpush1.msra.mxu0 0.0
  %3911 = vmatprep.subr.mxu0 0.0
  %3912 = vmatpush1.msra.mxu0 0.0
  %3913 = vmatprep.subr.mxu0 0.0
  %3914 = vmatpush1.msra.mxu0 0.0
  %3915 = vmatprep.subr.mxu0 0.0
  %3916 = vmatpush1.msra.mxu0 0.0
  %3917 = vmatprep.subr.mxu0 0.0
  %3918 = vmatpush1.msra.mxu0 0.0
  %3919 = vmatprep.subr.mxu0 0.0
  %3920 = vmatpush1.msra.mxu0 0.0
  %3921 = vmatprep.subr.mxu0 0.0
  %3922 = vmatpush1.msra.mxu0 0.0
  %3923 = vmatprep.subr.mxu0 0.0
  %3924 = vmatpush1.msra.mxu0 0.0
  %3925 = vmatprep.subr.mxu0 0.0
  %3926 = vmatpush1.msra.mxu0 0.0
  %3927 = vmatprep.subr.mxu0 0.0
  %3928 = vmatpush1.msra.mxu0 0.0
  %3929 = vmatprep.subr.mxu0 0.0
  %3930 = vmatpush1.msra.mxu0 0.0
  %3931 = vmatprep.mubr.f32.mxu0 0.0
  %3932 = vmatmul.mubr.f32.gmra.mrb[0].mxu0 %v3865
  %v3933 = vpop.f32.mrb[0].mxu0
  %v3934 = vadd.f32 %v1395, %v3933
  %v3935 = vpop.f32.mrb[0].mxu0
  %3936 = vdwg.mxu0
  %v3937 = vxor.u32 %v3934, 2147483648
  %v3938 = vmul.f32 %v3937, 1.442695
  %v3939 = vpow.pop %v3938
  %v3940 = vadd.f32 %v3939, 1.0
  %v3941 = vrcp.pop %v3940
  %v3942 = vmul.f32 1.0, %v3941
  %vm3943 = vcmask 7168
  %3944 = vst.msk [vmem:[%s4] sm:$0xff] %vm3943, %v3942
  // Predicated region
  $region18: #{igcnet_forward.1} parent=0 // pred_check
    _
  $region19: #{igcnet_forward.1} parent=0 // pred_check_branch
    %3946 = sbr.rel (0) target = $region21
  $region20: #{igcnet_forward.1} parent=0 // pred_region
    _
  $region21: #{igcnet_forward.1} parent=0 // pred_fallthru
    _
  // Predicated region
  $region22: #{igcnet_forward.1} parent=0 // pred_check
    _
  $region23: #{igcnet_forward.1} parent=0 // pred_check_branch
    %3948 = sbr.rel (0) target = $region25
  $region24: #{igcnet_forward.1} parent=0 // pred_region
    _
  $region25: #{igcnet_forward.1} parent=0 // pred_fallthru
    _

</llo_original>
